<compile_context>
chip_gen: v7x
topology: tpu7x:2x2x1
jax: 0.10.0
libtpu: 0.0.40
codegen_flags: <defaults>
</compile_context>

<pallas_src>
import jax
import jax.numpy as jnp
from jax.experimental import pallas as pl
from jax.experimental.pallas import tpu as pltpu

# ---------------- configuration (small synthetic ViT) ----------------
B = 2                          # batch
C = 3                          # image channels
IMG = 16                       # image size
PATCH = 4                      # patch size
P = (IMG // PATCH) ** 2        # 16 patches
S = P + 1                      # 17 tokens (cls + patches)
S_PAD = ((S + 7) // 8) * 8     # 24: per-image token-slab rows (sublane aligned)
D = 32                         # embed_dim
NHEADS = 4
HD = D // NHEADS               # 8
DEPTH = 2
MLP = 4 * D                    # 128
CPP = C * PATCH * PATCH        # 48
HEAD1 = 512                    # classifier head hidden dims (fixed by module)
HEAD2 = 256
NUM_CLASSES = 15
EPS_BACKBONE = 1e-6            # timm ViT LayerNorm eps
EPS_HEAD = 1e-5                # torch.nn.LayerNorm default eps


# ---------------- in-kernel helpers ----------------
def _gelu(x):
    # TODO(synk): PyTorch nn.GELU default is the exact erf form; using the tanh
    # approximation for robust Mosaic lowering (max abs deviation ~1e-3).
    c = jnp.sqrt(2.0 / jnp.pi).astype(x.dtype)
    return 0.5 * x * (1.0 + jnp.tanh(c * (x + 0.044715 * (x * x * x))))


def _layernorm(x, g, b, eps):
    mu = jnp.mean(x, axis=-1, keepdims=True)
    xc = x - mu
    var = jnp.mean(xc * xc, axis=-1, keepdims=True)
    return xc * jax.lax.rsqrt(var + eps) * g + b


# ---------------- single fused Pallas kernel ----------------
def fused_vit_kernel(
    xp_ref, patch_w_ref, tok_add_ref, attn_bias_ref,
    wqkv_ref, bqkv_ref, wo_ref, vec_ref, w1_ref, b1_ref, w2_ref,
    hvd_ref, h_w1_ref, hv1_ref, h_w2_ref, hv2_ref, h_w3_ref, h_b3_ref,
    o_ref,
):
    f32 = jnp.float32
    bf16 = jnp.bfloat16
    bsz = xp_ref.shape[0] // S_PAD
    BS = bsz * S_PAD

    # Lane masks selecting each head's feature columns (block-diagonal trick).
    lane = jax.lax.broadcasted_iota(jnp.int32, (1, D), 1)
    head_masks = [(lane >= h * HD) & (lane < (h + 1) * HD) for h in range(NHEADS)]

    # Precomputed additive mask: -1e30 on cross-image blocks and on pad-key
    # columns; 0 elsewhere.  Loaded once, reused by every block/head.
    attn_bias = attn_bias_ref[...]                          # (BS, BS) f32

    # ---- patch embed + cls token + positional embedding (single matmul) ----
    # xp has per-image 24-row slabs: row 0 zero (cls slot), rows 1..16 patch
    # pixels, rows 17..23 zero pad.  tok_add_ref carries cls+pos / patch_b+pos.
    tok_add = jnp.concatenate([tok_add_ref[...]] * bsz, axis=0)   # (BS, D) f32
    tokens = (
        jnp.dot(xp_ref[...], patch_w_ref[...], preferred_element_type=f32)
        + tok_add
    )                                                       # (BS, D) f32

    # ---- transformer blocks (unrolled, weights resident in VMEM) ----
    for l in range(DEPTH):
        vec = vec_ref[l]                                    # (6, D) f32
        ln1_g, ln1_b = vec[0:1], vec[1:2]
        b_o, ln2_g, ln2_b, b_2 = vec[2:3], vec[3:4], vec[4:5], vec[5:6]

        x = tokens
        xn = _layernorm(x, ln1_g, ln1_b, EPS_BACKBONE)
        # fused QKV; 1/sqrt(HD) attention scale pre-folded into Q weights/bias.
        qkv = (
            jnp.dot(xn.astype(bf16), wqkv_ref[l], preferred_element_type=f32)
            + bqkv_ref[l]
        )                                                   # (BS, 3D) f32
        q = qkv[:, 0:D].astype(bf16)
        k = qkv[:, D:2 * D].astype(bf16)
        v = qkv[:, 2 * D:3 * D].astype(bf16)

        # --- multi-head self-attention, merged over the whole batch:
        #     one (BS,BS) score matmul + softmax + context matmul per head.
        ctx = jnp.zeros((BS, D), f32)
        for hm in head_masks:
            qh = jnp.where(hm, q, jnp.zeros_like(q))
            s = jax.lax.dot_general(
                qh, k, (((1,), (1,)), ((), ())),
                preferred_element_type=f32,
            )                                               # (BS, BS) f32
            s = s + attn_bias                               # mask pad / x-image
            s = s - jnp.max(s, axis=-1, keepdims=True)
            p = jnp.exp(s)
            p = p * pl.reciprocal(
                jnp.sum(p, axis=-1, keepdims=True), approx=True)
            vh = jnp.where(hm, v, jnp.zeros_like(v))
            ctx = ctx + jnp.dot(p.astype(bf16), vh,
                                preferred_element_type=f32)

        x = x + jnp.dot(ctx.astype(bf16), wo_ref[l],
                        preferred_element_type=f32) + b_o

        # --- MLP (pre-LN) ---
        xn2 = _layernorm(x, ln2_g, ln2_b, EPS_BACKBONE)
        h1 = _gelu(
            jnp.dot(xn2.astype(bf16), w1_ref[l], preferred_element_type=f32)
            + b1_ref[l])
        tokens = x + jnp.dot(h1.astype(bf16), w2_ref[l],
                             preferred_element_type=f32) + b_2

    # ---- final norm + crop-disease classifier head on CLS features ----
    # CLS rows sit at 8-aligned sublane offsets (0, 24, ...).
    cls = jnp.concatenate(
        [tokens[b * S_PAD:b * S_PAD + 1] for b in range(bsz)], axis=0)  # (B, D)
    hvd = hvd_ref[...]                                       # (4, D)
    z = _layernorm(cls, hvd[0:1], hvd[1:2], EPS_BACKBONE)    # backbone final norm
    z = _layernorm(z, hvd[2:3], hvd[3:4], EPS_HEAD)          # head LayerNorm(D)
    # Dropout layers are identity at inference.
    hv1 = hv1_ref[...]                                       # (3, 512)
    z = _gelu(jnp.dot(z.astype(bf16), h_w1_ref[...],
                      preferred_element_type=f32) + hv1[0:1])
    z = _layernorm(z, hv1[1:2], hv1[2:3], EPS_HEAD)
    hv2 = hv2_ref[...]                                       # (3, 256)
    z = _gelu(jnp.dot(z.astype(bf16), h_w2_ref[...],
                      preferred_element_type=f32) + hv2[0:1])
    z = _layernorm(z, hv2[1:2], hv2[2:3], EPS_HEAD)
    o_ref[...] = (
        jnp.dot(z.astype(bf16), h_w3_ref[...], preferred_element_type=f32)
        + h_b3_ref[...]
    )


# ---------------- parameter packing + wrapper ----------------
def _pack_params(params):
    bf16 = jnp.bfloat16
    scale = 1.0 / (HD ** 0.5)
    blocks = params["blocks"]
    # 1/sqrt(head_dim) folded into the Q columns (weights AND bias).
    wqkv = jnp.stack([
        jnp.concatenate([blk["wq"] * scale, blk["wk"], blk["wv"]], axis=1)
        for blk in blocks]).astype(bf16)                     # (DEPTH, D, 3D)
    bqkv = jnp.stack([
        jnp.concatenate([blk["bq"] * scale, blk["bk"], blk["bv"]], axis=1)
        for blk in blocks])                                  # (DEPTH, 1, 3D) f32
    wo = jnp.stack([blk["wo"] for blk in blocks]).astype(bf16)   # (DEPTH, D, D)
    vec = jnp.stack([jnp.concatenate(
        [blk["ln1_g"], blk["ln1_b"], blk["bo"],
         blk["ln2_g"], blk["ln2_b"], blk["b2"]], axis=0)
        for blk in blocks])                                  # (DEPTH, 6, D) f32
    w1 = jnp.stack([blk["w1"] for blk in blocks]).astype(bf16)   # (DEPTH, D, MLP)
    b1 = jnp.stack([blk["b1"] for blk in blocks])            # (DEPTH, 1, MLP) f32
    w2 = jnp.stack([blk["w2"] for blk in blocks]).astype(bf16)   # (DEPTH, MLP, D)
    hvd = jnp.concatenate([params["bn_g"], params["bn_b"],
                           params["h_ln0_g"], params["h_ln0_b"]], axis=0)  # (4, D)
    hv1 = jnp.concatenate([params["h_b1"], params["h_ln1_g"],
                           params["h_ln1_b"]], axis=0)       # (3, 512)
    hv2 = jnp.concatenate([params["h_b2"], params["h_ln2_g"],
                           params["h_ln2_b"]], axis=0)       # (3, 256)
    return (wqkv, bqkv, wo, vec, w1, b1, w2,
            hvd, params["h_w1"].astype(bf16), hv1,
            params["h_w2"].astype(bf16), hv2,
            params["h_w3"].astype(bf16), params["h_b3"])


def crop_disease_vit_forward(x_nchw, params):
    bsz = x_nchw.shape[0]
    p = PATCH
    f32 = jnp.float32
    bf16 = jnp.bfloat16

    # patchify (layout-only glue): NCHW -> (B, P, C*p*p), flattening order
    # (C, ph, pw) matching PyTorch Conv2d weight flattening.  A single pad
    # inserts the cls slot (row 0) and the sublane pad rows (17..23).
    xb = x_nchw.reshape(bsz, C, IMG // p, p, IMG // p, p)
    xb = xb.transpose(0, 2, 4, 1, 3, 5).reshape(bsz, P, CPP)
    xp = jnp.pad(xb, ((0, 0), (1, S_PAD - S), (0, 0)))
    xp = xp.reshape(bsz * S_PAD, CPP).astype(bf16)           # (B*S_PAD, CPP)

    # Per-image additive token-init slab (passed ONCE, replicated in kernel):
    # row 0 = cls_token+pos[0], rows 1..16 = patch_b+pos[1:S], pads zero.
    slab = jnp.concatenate([
        params["cls_token"].reshape(1, D) + params["pos_embed"][0, 0:1],
        params["patch_b"] + params["pos_embed"][0, 1:S],
        jnp.zeros((S_PAD - S, D), f32),
    ], axis=0)                                               # (S_PAD, D)

    # Additive attention bias for the batch-merged attention: -1e30 where the
    # key column is in a different image OR is a pad row; 0 elsewhere.
    tok_idx = jnp.arange(bsz * S_PAD)
    img_id = tok_idx // S_PAD
    in_tok = tok_idx % S_PAD
    valid = (img_id[:, None] == img_id[None, :]) & (in_tok[None, :] < S)
    attn_bias = jnp.where(valid, 0.0, -1e30).astype(f32)     # (B*S_PAD, B*S_PAD)

    args = (xp, params["patch_w"].astype(bf16), slab, attn_bias) \
        + _pack_params(params)

    # No grid: single kernel invocation, everything resident in VMEM
    # (no double-buffering prologue).  Total footprint << VMEM on all of
    # v5e / v6e / v7x, so no vmem_limit override is needed.
    in_specs = [pl.BlockSpec(memory_space=pltpu.MemorySpace.VMEM)
                for _ in args]
    return pl.pallas_call(
        fused_vit_kernel,
        out_shape=jax.ShapeDtypeStruct((bsz, NUM_CLASSES), jnp.float32),
        in_specs=in_specs,
        out_specs=pl.BlockSpec(memory_space=pltpu.MemorySpace.VMEM),
    )(*args)


# ---------------- parameter init (deterministic, synthetic) ----------------
def init_params(key):
    def nrm(k, shape, std=0.02):
        return std * jax.random.normal(k, shape, dtype=jnp.float32)

    keys = iter(jax.random.split(key, 64))
    params = {
        "patch_w": nrm(next(keys), (CPP, D)),
        "patch_b": jnp.zeros((1, D), jnp.float32),
        "cls_token": nrm(next(keys), (1, 1, D)),
        "pos_embed": nrm(next(keys), (1, S, D)),
        "bn_g": jnp.ones((1, D), jnp.float32),
        "bn_b": jnp.zeros((1, D), jnp.float32),
        # classifier head
        "h_ln0_g": jnp.ones((1, D), jnp.float32),
        "h_ln0_b": jnp.zeros((1, D), jnp.float32),
        "h_w1": nrm(next(keys), (D, HEAD1)),
        "h_b1": jnp.zeros((1, HEAD1), jnp.float32),
        "h_ln1_g": jnp.ones((1, HEAD1), jnp.float32),
        "h_ln1_b": jnp.zeros((1, HEAD1), jnp.float32),
        "h_w2": nrm(next(keys), (HEAD1, HEAD2)),
        "h_b2": jnp.zeros((1, HEAD2), jnp.float32),
        "h_ln2_g": jnp.ones((1, HEAD2), jnp.float32),
        "h_ln2_b": jnp.zeros((1, HEAD2), jnp.float32),
        "h_w3": nrm(next(keys), (HEAD2, NUM_CLASSES)),
        "h_b3": jnp.zeros((1, NUM_CLASSES), jnp.float32),
        "blocks": [],
    }
    for _ in range(DEPTH):
        blk = {
            "ln1_g": jnp.ones((1, D), jnp.float32),
            "ln1_b": jnp.zeros((1, D), jnp.float32),
            "wq": nrm(next(keys), (D, D)),
            "bq": jnp.zeros((1, D), jnp.float32),
            "wk": nrm(next(keys), (D, D)),
            "bk": jnp.zeros((1, D), jnp.float32),
            "wv": nrm(next(keys), (D, D)),
            "bv": jnp.zeros((1, D), jnp.float32),
            "wo": nrm(next(keys), (D, D)),
            "bo": jnp.zeros((1, D), jnp.float32),
            "ln2_g": jnp.ones((1, D), jnp.float32),
            "ln2_b": jnp.zeros((1, D), jnp.float32),
            "w1": nrm(next(keys), (D, MLP)),
            "b1": jnp.zeros((1, MLP), jnp.float32),
            "w2": nrm(next(keys), (MLP, D)),
            "b2": jnp.zeros((1, D), jnp.float32),
        }
        params["blocks"].append(blk)
    return params


if __name__ == "__main__":
    key = jax.random.PRNGKey(0)
    k_param, k_x = jax.random.split(key)
    params = init_params(k_param)
    x = jax.random.normal(k_x, (B, C, IMG, IMG), dtype=jnp.float32)  # NCHW

    fwd = jax.jit(crop_disease_vit_forward)
    logits = jax.block_until_ready(fwd(x, params))
    assert logits.shape == (B, NUM_CLASSES)
    assert bool(jnp.all(jnp.isfinite(logits)))
    print("KERNEL_OK")
</pallas_src>

<mosaic_0001>
module attributes {stable_mosaic.version = 11 : i64} {
  func.func @fused_vit_kernel(%arg0: memref<48x48xbf16, #tpu.memory_space<vmem>>, %arg1: memref<48x32xbf16, #tpu.memory_space<vmem>>, %arg2: memref<24x32xf32, #tpu.memory_space<vmem>>, %arg3: memref<48x48xf32, #tpu.memory_space<vmem>>, %arg4: memref<2x32x96xbf16, #tpu.memory_space<vmem>>, %arg5: memref<2x1x96xf32, #tpu.memory_space<vmem>>, %arg6: memref<2x32x32xbf16, #tpu.memory_space<vmem>>, %arg7: memref<2x6x32xf32, #tpu.memory_space<vmem>>, %arg8: memref<2x32x128xbf16, #tpu.memory_space<vmem>>, %arg9: memref<2x1x128xf32, #tpu.memory_space<vmem>>, %arg10: memref<2x128x32xbf16, #tpu.memory_space<vmem>>, %arg11: memref<4x32xf32, #tpu.memory_space<vmem>>, %arg12: memref<32x512xbf16, #tpu.memory_space<vmem>>, %arg13: memref<3x512xf32, #tpu.memory_space<vmem>>, %arg14: memref<512x256xbf16, #tpu.memory_space<vmem>>, %arg15: memref<3x256xf32, #tpu.memory_space<vmem>>, %arg16: memref<256x15xbf16, #tpu.memory_space<vmem>>, %arg17: memref<1x15xf32, #tpu.memory_space<vmem>>, %arg18: memref<2x15xf32, #tpu.memory_space<vmem>>) attributes {dimension_semantics = [], scalar_prefetch = 0 : i64, scratch_operands = 0 : i64, tpu.core_type = #tpu.core_type<tc>} {
    %0 = tpu.iota {dimensions = array<i32: 1>} : vector<1x32xi32>
    %c0_i32 = arith.constant 0 : i32
    %1 = vector.broadcast %c0_i32 : i32 to vector<1x32xi32>
    %2 = arith.cmpi sge, %0, %1 : vector<1x32xi32>
    %c8_i32 = arith.constant 8 : i32
    %3 = vector.broadcast %c8_i32 : i32 to vector<1x32xi32>
    %4 = arith.cmpi slt, %0, %3 : vector<1x32xi32>
    %5 = arith.andi %2, %4 : vector<1x32xi1>
    %c8_i32_0 = arith.constant 8 : i32
    %6 = vector.broadcast %c8_i32_0 : i32 to vector<1x32xi32>
    %7 = arith.cmpi sge, %0, %6 : vector<1x32xi32>
    %c16_i32 = arith.constant 16 : i32
    %8 = vector.broadcast %c16_i32 : i32 to vector<1x32xi32>
    %9 = arith.cmpi slt, %0, %8 : vector<1x32xi32>
    %10 = arith.andi %7, %9 : vector<1x32xi1>
    %c16_i32_1 = arith.constant 16 : i32
    %11 = vector.broadcast %c16_i32_1 : i32 to vector<1x32xi32>
    %12 = arith.cmpi sge, %0, %11 : vector<1x32xi32>
    %c24_i32 = arith.constant 24 : i32
    %13 = vector.broadcast %c24_i32 : i32 to vector<1x32xi32>
    %14 = arith.cmpi slt, %0, %13 : vector<1x32xi32>
    %15 = arith.andi %12, %14 : vector<1x32xi1>
    %c24_i32_2 = arith.constant 24 : i32
    %16 = vector.broadcast %c24_i32_2 : i32 to vector<1x32xi32>
    %17 = arith.cmpi sge, %0, %16 : vector<1x32xi32>
    %c32_i32 = arith.constant 32 : i32
    %18 = vector.broadcast %c32_i32 : i32 to vector<1x32xi32>
    %19 = arith.cmpi slt, %0, %18 : vector<1x32xi32>
    %20 = arith.andi %17, %19 : vector<1x32xi1>
    %c0 = arith.constant 0 : index
    %c0_3 = arith.constant 0 : index
    %21 = vector.load %arg3[%c0, %c0_3] : memref<48x48xf32, #tpu.memory_space<vmem>>, vector<48x48xf32>
    %c0_4 = arith.constant 0 : index
    %c0_5 = arith.constant 0 : index
    %22 = vector.load %arg2[%c0_4, %c0_5] : memref<24x32xf32, #tpu.memory_space<vmem>>, vector<24x32xf32>
    %23 = tpu.concatenate %22, %22 in 0 : vector<24x32xf32>, vector<24x32xf32> -> vector<48x32xf32>
    %c0_6 = arith.constant 0 : index
    %c0_7 = arith.constant 0 : index
    %24 = vector.load %arg0[%c0_6, %c0_7] : memref<48x48xbf16, #tpu.memory_space<vmem>>, vector<48x48xbf16>
    %c0_8 = arith.constant 0 : index
    %c0_9 = arith.constant 0 : index
    %25 = vector.load %arg1[%c0_8, %c0_9] : memref<48x32xbf16, #tpu.memory_space<vmem>>, vector<48x32xbf16>
    %cst = arith.constant dense<0.000000e+00> : vector<48x32xf32>
    %26 = tpu.matmul %24, %25, %cst {dimension_numbers = #tpu.dot_dimension_numbers<[1], [0], [0], [1], [0, 0, 1, 1], [], []>} : vector<48x48xbf16>, vector<48x32xbf16>, vector<48x32xf32> -> vector<48x32xf32>
    %27 = arith.addf %26, %23 : vector<48x32xf32>
    %c0_10 = arith.constant 0 : index
    %c0_11 = arith.constant 0 : index
    %c0_12 = arith.constant 0 : index
    %28 = vector.load %arg7[%c0_10, %c0_11, %c0_12] : memref<2x6x32xf32, #tpu.memory_space<vmem>>, vector<1x6x32xf32>
    %29 = vector.shape_cast %28 : vector<1x6x32xf32> to vector<6x32xf32>
    %30 = vector.extract_strided_slice %29 {offsets = [0, 0], sizes = [1, 32], strides = [1, 1]} : vector<6x32xf32> to vector<1x32xf32>
    %31 = vector.extract_strided_slice %29 {offsets = [1, 0], sizes = [1, 32], strides = [1, 1]} : vector<6x32xf32> to vector<1x32xf32>
    %32 = vector.extract_strided_slice %29 {offsets = [2, 0], sizes = [1, 32], strides = [1, 1]} : vector<6x32xf32> to vector<1x32xf32>
    %33 = vector.extract_strided_slice %29 {offsets = [3, 0], sizes = [1, 32], strides = [1, 1]} : vector<6x32xf32> to vector<1x32xf32>
    %34 = vector.extract_strided_slice %29 {offsets = [4, 0], sizes = [1, 32], strides = [1, 1]} : vector<6x32xf32> to vector<1x32xf32>
    %35 = vector.extract_strided_slice %29 {offsets = [5, 0], sizes = [1, 32], strides = [1, 1]} : vector<6x32xf32> to vector<1x32xf32>
    %cst_13 = arith.constant dense<0.000000e+00> : vector<48xf32>
    %36 = vector.multi_reduction <add>, %27, %cst_13 [1] : vector<48x32xf32> to vector<48xf32>
    %37 = vector.shape_cast %36 : vector<48xf32> to vector<48x1xf32>
    %cst_14 = arith.constant 3.200000e+01 : f32
    %38 = vector.broadcast %cst_14 : f32 to vector<48x1xf32>
    %39 = arith.divf %37, %38 : vector<48x1xf32>
    %40 = vector.broadcast %39 : vector<48x1xf32> to vector<48x32xf32>
    %41 = arith.subf %27, %40 : vector<48x32xf32>
    %42 = arith.mulf %41, %41 : vector<48x32xf32>
    %cst_15 = arith.constant dense<0.000000e+00> : vector<48xf32>
    %43 = vector.multi_reduction <add>, %42, %cst_15 [1] : vector<48x32xf32> to vector<48xf32>
    %44 = vector.shape_cast %43 : vector<48xf32> to vector<48x1xf32>
    %cst_16 = arith.constant 3.200000e+01 : f32
    %45 = vector.broadcast %cst_16 : f32 to vector<48x1xf32>
    %46 = arith.divf %44, %45 : vector<48x1xf32>
    %cst_17 = arith.constant 9.99999997E-7 : f32
    %47 = vector.broadcast %cst_17 : f32 to vector<48x1xf32>
    %48 = arith.addf %46, %47 : vector<48x1xf32>
    %49 = math.rsqrt %48 : vector<48x1xf32>
    %50 = vector.broadcast %49 : vector<48x1xf32> to vector<48x32xf32>
    %51 = arith.mulf %41, %50 : vector<48x32xf32>
    %52 = vector.broadcast %30 : vector<1x32xf32> to vector<48x32xf32>
    %53 = arith.mulf %51, %52 : vector<48x32xf32>
    %54 = vector.broadcast %31 : vector<1x32xf32> to vector<48x32xf32>
    %55 = arith.addf %53, %54 : vector<48x32xf32>
    %56 = arith.truncf %55 : vector<48x32xf32> to vector<48x32xbf16>
    %c0_18 = arith.constant 0 : index
    %c0_19 = arith.constant 0 : index
    %c0_20 = arith.constant 0 : index
    %57 = vector.load %arg4[%c0_18, %c0_19, %c0_20] : memref<2x32x96xbf16, #tpu.memory_space<vmem>>, vector<1x32x96xbf16>
    %58 = vector.shape_cast %57 : vector<1x32x96xbf16> to vector<32x96xbf16>
    %cst_21 = arith.constant dense<0.000000e+00> : vector<48x96xf32>
    %59 = tpu.matmul %56, %58, %cst_21 {dimension_numbers = #tpu.dot_dimension_numbers<[1], [0], [0], [1], [0, 0, 1, 1], [], []>} : vector<48x32xbf16>, vector<32x96xbf16>, vector<48x96xf32> -> vector<48x96xf32>
    %c0_22 = arith.constant 0 : index
    %c0_23 = arith.constant 0 : index
    %c0_24 = arith.constant 0 : index
    %60 = vector.load %arg5[%c0_22, %c0_23, %c0_24] : memref<2x1x96xf32, #tpu.memory_space<vmem>>, vector<1x1x96xf32>
    %61 = vector.shape_cast %60 : vector<1x1x96xf32> to vector<1x96xf32>
    %62 = vector.broadcast %61 : vector<1x96xf32> to vector<48x96xf32>
    %63 = arith.addf %59, %62 : vector<48x96xf32>
    %64 = vector.extract_strided_slice %63 {offsets = [0, 0], sizes = [48, 32], strides = [1, 1]} : vector<48x96xf32> to vector<48x32xf32>
    %65 = arith.truncf %64 : vector<48x32xf32> to vector<48x32xbf16>
    %66 = vector.extract_strided_slice %63 {offsets = [0, 32], sizes = [48, 32], strides = [1, 1]} : vector<48x96xf32> to vector<48x32xf32>
    %67 = arith.truncf %66 : vector<48x32xf32> to vector<48x32xbf16>
    %68 = vector.extract_strided_slice %63 {offsets = [0, 64], sizes = [48, 32], strides = [1, 1]} : vector<48x96xf32> to vector<48x32xf32>
    %69 = arith.truncf %68 : vector<48x32xf32> to vector<48x32xbf16>
    %cst_25 = arith.constant 0.000000e+00 : f32
    %70 = vector.broadcast %cst_25 : f32 to vector<48x32xf32>
    %cst_26 = arith.constant 0.000000e+00 : bf16
    %71 = vector.broadcast %cst_26 : bf16 to vector<48x32xbf16>
    %72 = vector.shape_cast %5 : vector<1x32xi1> to vector<1x32xi1>
    %73 = vector.broadcast %72 : vector<1x32xi1> to vector<48x32xi1>
    %74 = arith.select %73, %65, %71 : vector<48x32xi1>, vector<48x32xbf16>
    %cst_27 = arith.constant dense<0.000000e+00> : vector<48x48xf32>
    %75 = tpu.matmul %74, %67, %cst_27 {dimension_numbers = #tpu.dot_dimension_numbers<[1], [1], [0], [0], [0, 0, 1, 0], [], []>} : vector<48x32xbf16>, vector<48x32xbf16>, vector<48x48xf32> -> vector<48x48xf32>
    %76 = arith.addf %75, %21 : vector<48x48xf32>
    %cst_28 = arith.constant dense<0xFF800000> : vector<48xf32>
    %77 = vector.multi_reduction <maximumf>, %76, %cst_28 [1] : vector<48x48xf32> to vector<48xf32>
    %78 = vector.shape_cast %77 : vector<48xf32> to vector<48x1xf32>
    %79 = vector.broadcast %78 : vector<48x1xf32> to vector<48x48xf32>
    %80 = arith.subf %76, %79 : vector<48x48xf32>
    %81 = math.exp %80 : vector<48x48xf32>
    %cst_29 = arith.constant dense<0.000000e+00> : vector<48xf32>
    %82 = vector.multi_reduction <add>, %81, %cst_29 [1] : vector<48x48xf32> to vector<48xf32>
    %83 = vector.shape_cast %82 : vector<48xf32> to vector<48x1xf32>
    %84 = tpu.reciprocal %83 {approx = true} : vector<48x1xf32> -> vector<48x1xf32>
    %85 = vector.broadcast %84 : vector<48x1xf32> to vector<48x48xf32>
    %86 = arith.mulf %81, %85 : vector<48x48xf32>
    %cst_30 = arith.constant 0.000000e+00 : bf16
    %87 = vector.broadcast %cst_30 : bf16 to vector<48x32xbf16>
    %88 = vector.shape_cast %5 : vector<1x32xi1> to vector<1x32xi1>
    %89 = vector.broadcast %88 : vector<1x32xi1> to vector<48x32xi1>
    %90 = arith.select %89, %69, %87 : vector<48x32xi1>, vector<48x32xbf16>
    %91 = arith.truncf %86 : vector<48x48xf32> to vector<48x48xbf16>
    %cst_31 = arith.constant dense<0.000000e+00> : vector<48x32xf32>
    %92 = tpu.matmul %91, %90, %cst_31 {dimension_numbers = #tpu.dot_dimension_numbers<[1], [0], [0], [1], [0, 0, 1, 1], [], []>} : vector<48x48xbf16>, vector<48x32xbf16>, vector<48x32xf32> -> vector<48x32xf32>
    %93 = arith.addf %70, %92 : vector<48x32xf32>
    %cst_32 = arith.constant 0.000000e+00 : bf16
    %94 = vector.broadcast %cst_32 : bf16 to vector<48x32xbf16>
    %95 = vector.shape_cast %10 : vector<1x32xi1> to vector<1x32xi1>
    %96 = vector.broadcast %95 : vector<1x32xi1> to vector<48x32xi1>
    %97 = arith.select %96, %65, %94 : vector<48x32xi1>, vector<48x32xbf16>
    %cst_33 = arith.constant dense<0.000000e+00> : vector<48x48xf32>
    %98 = tpu.matmul %97, %67, %cst_33 {dimension_numbers = #tpu.dot_dimension_numbers<[1], [1], [0], [0], [0, 0, 1, 0], [], []>} : vector<48x32xbf16>, vector<48x32xbf16>, vector<48x48xf32> -> vector<48x48xf32>
    %99 = arith.addf %98, %21 : vector<48x48xf32>
    %cst_34 = arith.constant dense<0xFF800000> : vector<48xf32>
    %100 = vector.multi_reduction <maximumf>, %99, %cst_34 [1] : vector<48x48xf32> to vector<48xf32>
    %101 = vector.shape_cast %100 : vector<48xf32> to vector<48x1xf32>
    %102 = vector.broadcast %101 : vector<48x1xf32> to vector<48x48xf32>
    %103 = arith.subf %99, %102 : vector<48x48xf32>
    %104 = math.exp %103 : vector<48x48xf32>
    %cst_35 = arith.constant dense<0.000000e+00> : vector<48xf32>
    %105 = vector.multi_reduction <add>, %104, %cst_35 [1] : vector<48x48xf32> to vector<48xf32>
    %106 = vector.shape_cast %105 : vector<48xf32> to vector<48x1xf32>
    %107 = tpu.reciprocal %106 {approx = true} : vector<48x1xf32> -> vector<48x1xf32>
    %108 = vector.broadcast %107 : vector<48x1xf32> to vector<48x48xf32>
    %109 = arith.mulf %104, %108 : vector<48x48xf32>
    %cst_36 = arith.constant 0.000000e+00 : bf16
    %110 = vector.broadcast %cst_36 : bf16 to vector<48x32xbf16>
    %111 = vector.shape_cast %10 : vector<1x32xi1> to vector<1x32xi1>
    %112 = vector.broadcast %111 : vector<1x32xi1> to vector<48x32xi1>
    %113 = arith.select %112, %69, %110 : vector<48x32xi1>, vector<48x32xbf16>
    %114 = arith.truncf %109 : vector<48x48xf32> to vector<48x48xbf16>
    %cst_37 = arith.constant dense<0.000000e+00> : vector<48x32xf32>
    %115 = tpu.matmul %114, %113, %cst_37 {dimension_numbers = #tpu.dot_dimension_numbers<[1], [0], [0], [1], [0, 0, 1, 1], [], []>} : vector<48x48xbf16>, vector<48x32xbf16>, vector<48x32xf32> -> vector<48x32xf32>
    %116 = arith.addf %93, %115 : vector<48x32xf32>
    %cst_38 = arith.constant 0.000000e+00 : bf16
    %117 = vector.broadcast %cst_38 : bf16 to vector<48x32xbf16>
    %118 = vector.shape_cast %15 : vector<1x32xi1> to vector<1x32xi1>
    %119 = vector.broadcast %118 : vector<1x32xi1> to vector<48x32xi1>
    %120 = arith.select %119, %65, %117 : vector<48x32xi1>, vector<48x32xbf16>
    %cst_39 = arith.constant dense<0.000000e+00> : vector<48x48xf32>
    %121 = tpu.matmul %120, %67, %cst_39 {dimension_numbers = #tpu.dot_dimension_numbers<[1], [1], [0], [0], [0, 0, 1, 0], [], []>} : vector<48x32xbf16>, vector<48x32xbf16>, vector<48x48xf32> -> vector<48x48xf32>
    %122 = arith.addf %121, %21 : vector<48x48xf32>
    %cst_40 = arith.constant dense<0xFF800000> : vector<48xf32>
    %123 = vector.multi_reduction <maximumf>, %122, %cst_40 [1] : vector<48x48xf32> to vector<48xf32>
    %124 = vector.shape_cast %123 : vector<48xf32> to vector<48x1xf32>
    %125 = vector.broadcast %124 : vector<48x1xf32> to vector<48x48xf32>
    %126 = arith.subf %122, %125 : vector<48x48xf32>
    %127 = math.exp %126 : vector<48x48xf32>
    %cst_41 = arith.constant dense<0.000000e+00> : vector<48xf32>
    %128 = vector.multi_reduction <add>, %127, %cst_41 [1] : vector<48x48xf32> to vector<48xf32>
    %129 = vector.shape_cast %128 : vector<48xf32> to vector<48x1xf32>
    %130 = tpu.reciprocal %129 {approx = true} : vector<48x1xf32> -> vector<48x1xf32>
    %131 = vector.broadcast %130 : vector<48x1xf32> to vector<48x48xf32>
    %132 = arith.mulf %127, %131 : vector<48x48xf32>
    %cst_42 = arith.constant 0.000000e+00 : bf16
    %133 = vector.broadcast %cst_42 : bf16 to vector<48x32xbf16>
    %134 = vector.shape_cast %15 : vector<1x32xi1> to vector<1x32xi1>
    %135 = vector.broadcast %134 : vector<1x32xi1> to vector<48x32xi1>
    %136 = arith.select %135, %69, %133 : vector<48x32xi1>, vector<48x32xbf16>
    %137 = arith.truncf %132 : vector<48x48xf32> to vector<48x48xbf16>
    %cst_43 = arith.constant dense<0.000000e+00> : vector<48x32xf32>
    %138 = tpu.matmul %137, %136, %cst_43 {dimension_numbers = #tpu.dot_dimension_numbers<[1], [0], [0], [1], [0, 0, 1, 1], [], []>} : vector<48x48xbf16>, vector<48x32xbf16>, vector<48x32xf32> -> vector<48x32xf32>
    %139 = arith.addf %116, %138 : vector<48x32xf32>
    %cst_44 = arith.constant 0.000000e+00 : bf16
    %140 = vector.broadcast %cst_44 : bf16 to vector<48x32xbf16>
    %141 = vector.shape_cast %20 : vector<1x32xi1> to vector<1x32xi1>
    %142 = vector.broadcast %141 : vector<1x32xi1> to vector<48x32xi1>
    %143 = arith.select %142, %65, %140 : vector<48x32xi1>, vector<48x32xbf16>
    %cst_45 = arith.constant dense<0.000000e+00> : vector<48x48xf32>
    %144 = tpu.matmul %143, %67, %cst_45 {dimension_numbers = #tpu.dot_dimension_numbers<[1], [1], [0], [0], [0, 0, 1, 0], [], []>} : vector<48x32xbf16>, vector<48x32xbf16>, vector<48x48xf32> -> vector<48x48xf32>
    %145 = arith.addf %144, %21 : vector<48x48xf32>
    %cst_46 = arith.constant dense<0xFF800000> : vector<48xf32>
    %146 = vector.multi_reduction <maximumf>, %145, %cst_46 [1] : vector<48x48xf32> to vector<48xf32>
    %147 = vector.shape_cast %146 : vector<48xf32> to vector<48x1xf32>
    %148 = vector.broadcast %147 : vector<48x1xf32> to vector<48x48xf32>
    %149 = arith.subf %145, %148 : vector<48x48xf32>
    %150 = math.exp %149 : vector<48x48xf32>
    %cst_47 = arith.constant dense<0.000000e+00> : vector<48xf32>
    %151 = vector.multi_reduction <add>, %150, %cst_47 [1] : vector<48x48xf32> to vector<48xf32>
    %152 = vector.shape_cast %151 : vector<48xf32> to vector<48x1xf32>
    %153 = tpu.reciprocal %152 {approx = true} : vector<48x1xf32> -> vector<48x1xf32>
    %154 = vector.broadcast %153 : vector<48x1xf32> to vector<48x48xf32>
    %155 = arith.mulf %150, %154 : vector<48x48xf32>
    %cst_48 = arith.constant 0.000000e+00 : bf16
    %156 = vector.broadcast %cst_48 : bf16 to vector<48x32xbf16>
    %157 = vector.shape_cast %20 : vector<1x32xi1> to vector<1x32xi1>
    %158 = vector.broadcast %157 : vector<1x32xi1> to vector<48x32xi1>
    %159 = arith.select %158, %69, %156 : vector<48x32xi1>, vector<48x32xbf16>
    %160 = arith.truncf %155 : vector<48x48xf32> to vector<48x48xbf16>
    %cst_49 = arith.constant dense<0.000000e+00> : vector<48x32xf32>
    %161 = tpu.matmul %160, %159, %cst_49 {dimension_numbers = #tpu.dot_dimension_numbers<[1], [0], [0], [1], [0, 0, 1, 1], [], []>} : vector<48x48xbf16>, vector<48x32xbf16>, vector<48x32xf32> -> vector<48x32xf32>
    %162 = arith.addf %139, %161 : vector<48x32xf32>
    %163 = arith.truncf %162 : vector<48x32xf32> to vector<48x32xbf16>
    %c0_50 = arith.constant 0 : index
    %c0_51 = arith.constant 0 : index
    %c0_52 = arith.constant 0 : index
    %164 = vector.load %arg6[%c0_50, %c0_51, %c0_52] : memref<2x32x32xbf16, #tpu.memory_space<vmem>>, vector<1x32x32xbf16>
    %165 = vector.shape_cast %164 : vector<1x32x32xbf16> to vector<32x32xbf16>
    %cst_53 = arith.constant dense<0.000000e+00> : vector<48x32xf32>
    %166 = tpu.matmul %163, %165, %cst_53 {dimension_numbers = #tpu.dot_dimension_numbers<[1], [0], [0], [1], [0, 0, 1, 1], [], []>} : vector<48x32xbf16>, vector<32x32xbf16>, vector<48x32xf32> -> vector<48x32xf32>
    %167 = arith.addf %27, %166 : vector<48x32xf32>
    %168 = vector.broadcast %32 : vector<1x32xf32> to vector<48x32xf32>
    %169 = arith.addf %167, %168 : vector<48x32xf32>
    %cst_54 = arith.constant dense<0.000000e+00> : vector<48xf32>
    %170 = vector.multi_reduction <add>, %169, %cst_54 [1] : vector<48x32xf32> to vector<48xf32>
    %171 = vector.shape_cast %170 : vector<48xf32> to vector<48x1xf32>
    %cst_55 = arith.constant 3.200000e+01 : f32
    %172 = vector.broadcast %cst_55 : f32 to vector<48x1xf32>
    %173 = arith.divf %171, %172 : vector<48x1xf32>
    %174 = vector.broadcast %173 : vector<48x1xf32> to vector<48x32xf32>
    %175 = arith.subf %169, %174 : vector<48x32xf32>
    %176 = arith.mulf %175, %175 : vector<48x32xf32>
    %cst_56 = arith.constant dense<0.000000e+00> : vector<48xf32>
    %177 = vector.multi_reduction <add>, %176, %cst_56 [1] : vector<48x32xf32> to vector<48xf32>
    %178 = vector.shape_cast %177 : vector<48xf32> to vector<48x1xf32>
    %cst_57 = arith.constant 3.200000e+01 : f32
    %179 = vector.broadcast %cst_57 : f32 to vector<48x1xf32>
    %180 = arith.divf %178, %179 : vector<48x1xf32>
    %cst_58 = arith.constant 9.99999997E-7 : f32
    %181 = vector.broadcast %cst_58 : f32 to vector<48x1xf32>
    %182 = arith.addf %180, %181 : vector<48x1xf32>
    %183 = math.rsqrt %182 : vector<48x1xf32>
    %184 = vector.broadcast %183 : vector<48x1xf32> to vector<48x32xf32>
    %185 = arith.mulf %175, %184 : vector<48x32xf32>
    %186 = vector.broadcast %33 : vector<1x32xf32> to vector<48x32xf32>
    %187 = arith.mulf %185, %186 : vector<48x32xf32>
    %188 = vector.broadcast %34 : vector<1x32xf32> to vector<48x32xf32>
    %189 = arith.addf %187, %188 : vector<48x32xf32>
    %190 = arith.truncf %189 : vector<48x32xf32> to vector<48x32xbf16>
    %c0_59 = arith.constant 0 : index
    %c0_60 = arith.constant 0 : index
    %c0_61 = arith.constant 0 : index
    %191 = vector.load %arg8[%c0_59, %c0_60, %c0_61] : memref<2x32x128xbf16, #tpu.memory_space<vmem>>, vector<1x32x128xbf16>
    %192 = vector.shape_cast %191 : vector<1x32x128xbf16> to vector<32x128xbf16>
    %cst_62 = arith.constant dense<0.000000e+00> : vector<48x128xf32>
    %193 = tpu.matmul %190, %192, %cst_62 {dimension_numbers = #tpu.dot_dimension_numbers<[1], [0], [0], [1], [0, 0, 1, 1], [], []>} : vector<48x32xbf16>, vector<32x128xbf16>, vector<48x128xf32> -> vector<48x128xf32>
    %c0_63 = arith.constant 0 : index
    %c0_64 = arith.constant 0 : index
    %c0_65 = arith.constant 0 : index
    %194 = vector.load %arg9[%c0_63, %c0_64, %c0_65] : memref<2x1x128xf32, #tpu.memory_space<vmem>>, vector<1x1x128xf32>
    %195 = vector.shape_cast %194 : vector<1x1x128xf32> to vector<1x128xf32>
    %196 = vector.broadcast %195 : vector<1x128xf32> to vector<48x128xf32>
    %197 = arith.addf %193, %196 : vector<48x128xf32>
    %cst_66 = arith.constant 0.636619746 : f32
    %198 = math.sqrt %cst_66 : f32
    %cst_67 = arith.constant 5.000000e-01 : f32
    %199 = vector.broadcast %cst_67 : f32 to vector<48x128xf32>
    %200 = arith.mulf %199, %197 : vector<48x128xf32>
    %201 = arith.mulf %197, %197 : vector<48x128xf32>
    %202 = arith.mulf %201, %197 : vector<48x128xf32>
    %cst_68 = arith.constant 4.471500e-02 : f32
    %203 = vector.broadcast %cst_68 : f32 to vector<48x128xf32>
    %204 = arith.mulf %203, %202 : vector<48x128xf32>
    %205 = arith.addf %197, %204 : vector<48x128xf32>
    %206 = vector.broadcast %198 : f32 to vector<48x128xf32>
    %207 = arith.mulf %206, %205 : vector<48x128xf32>
    %208 = math.tanh %207 : vector<48x128xf32>
    %cst_69 = arith.constant 1.000000e+00 : f32
    %209 = vector.broadcast %cst_69 : f32 to vector<48x128xf32>
    %210 = arith.addf %209, %208 : vector<48x128xf32>
    %211 = arith.mulf %200, %210 : vector<48x128xf32>
    %212 = arith.truncf %211 : vector<48x128xf32> to vector<48x128xbf16>
    %c0_70 = arith.constant 0 : index
    %c0_71 = arith.constant 0 : index
    %c0_72 = arith.constant 0 : index
    %213 = vector.load %arg10[%c0_70, %c0_71, %c0_72] : memref<2x128x32xbf16, #tpu.memory_space<vmem>>, vector<1x128x32xbf16>
    %214 = vector.shape_cast %213 : vector<1x128x32xbf16> to vector<128x32xbf16>
    %cst_73 = arith.constant dense<0.000000e+00> : vector<48x32xf32>
    %215 = tpu.matmul %212, %214, %cst_73 {dimension_numbers = #tpu.dot_dimension_numbers<[1], [0], [0], [1], [0, 0, 1, 1], [], []>} : vector<48x128xbf16>, vector<128x32xbf16>, vector<48x32xf32> -> vector<48x32xf32>
    %216 = arith.addf %169, %215 : vector<48x32xf32>
    %217 = vector.broadcast %35 : vector<1x32xf32> to vector<48x32xf32>
    %218 = arith.addf %216, %217 : vector<48x32xf32>
    %c1 = arith.constant 1 : index
    %c0_74 = arith.constant 0 : index
    %c0_75 = arith.constant 0 : index
    %219 = vector.load %arg7[%c1, %c0_74, %c0_75] : memref<2x6x32xf32, #tpu.memory_space<vmem>>, vector<1x6x32xf32>
    %220 = vector.shape_cast %219 : vector<1x6x32xf32> to vector<6x32xf32>
    %221 = vector.extract_strided_slice %220 {offsets = [0, 0], sizes = [1, 32], strides = [1, 1]} : vector<6x32xf32> to vector<1x32xf32>
    %222 = vector.extract_strided_slice %220 {offsets = [1, 0], sizes = [1, 32], strides = [1, 1]} : vector<6x32xf32> to vector<1x32xf32>
    %223 = vector.extract_strided_slice %220 {offsets = [2, 0], sizes = [1, 32], strides = [1, 1]} : vector<6x32xf32> to vector<1x32xf32>
    %224 = vector.extract_strided_slice %220 {offsets = [3, 0], sizes = [1, 32], strides = [1, 1]} : vector<6x32xf32> to vector<1x32xf32>
    %225 = vector.extract_strided_slice %220 {offsets = [4, 0], sizes = [1, 32], strides = [1, 1]} : vector<6x32xf32> to vector<1x32xf32>
    %226 = vector.extract_strided_slice %220 {offsets = [5, 0], sizes = [1, 32], strides = [1, 1]} : vector<6x32xf32> to vector<1x32xf32>
    %cst_76 = arith.constant dense<0.000000e+00> : vector<48xf32>
    %227 = vector.multi_reduction <add>, %218, %cst_76 [1] : vector<48x32xf32> to vector<48xf32>
    %228 = vector.shape_cast %227 : vector<48xf32> to vector<48x1xf32>
    %cst_77 = arith.constant 3.200000e+01 : f32
    %229 = vector.broadcast %cst_77 : f32 to vector<48x1xf32>
    %230 = arith.divf %228, %229 : vector<48x1xf32>
    %231 = vector.broadcast %230 : vector<48x1xf32> to vector<48x32xf32>
    %232 = arith.subf %218, %231 : vector<48x32xf32>
    %233 = arith.mulf %232, %232 : vector<48x32xf32>
    %cst_78 = arith.constant dense<0.000000e+00> : vector<48xf32>
    %234 = vector.multi_reduction <add>, %233, %cst_78 [1] : vector<48x32xf32> to vector<48xf32>
    %235 = vector.shape_cast %234 : vector<48xf32> to vector<48x1xf32>
    %cst_79 = arith.constant 3.200000e+01 : f32
    %236 = vector.broadcast %cst_79 : f32 to vector<48x1xf32>
    %237 = arith.divf %235, %236 : vector<48x1xf32>
    %cst_80 = arith.constant 9.99999997E-7 : f32
    %238 = vector.broadcast %cst_80 : f32 to vector<48x1xf32>
    %239 = arith.addf %237, %238 : vector<48x1xf32>
    %240 = math.rsqrt %239 : vector<48x1xf32>
    %241 = vector.broadcast %240 : vector<48x1xf32> to vector<48x32xf32>
    %242 = arith.mulf %232, %241 : vector<48x32xf32>
    %243 = vector.broadcast %221 : vector<1x32xf32> to vector<48x32xf32>
    %244 = arith.mulf %242, %243 : vector<48x32xf32>
    %245 = vector.broadcast %222 : vector<1x32xf32> to vector<48x32xf32>
    %246 = arith.addf %244, %245 : vector<48x32xf32>
    %247 = arith.truncf %246 : vector<48x32xf32> to vector<48x32xbf16>
    %c1_81 = arith.constant 1 : index
    %c0_82 = arith.constant 0 : index
    %c0_83 = arith.constant 0 : index
    %248 = vector.load %arg4[%c1_81, %c0_82, %c0_83] : memref<2x32x96xbf16, #tpu.memory_space<vmem>>, vector<1x32x96xbf16>
    %249 = vector.shape_cast %248 : vector<1x32x96xbf16> to vector<32x96xbf16>
    %cst_84 = arith.constant dense<0.000000e+00> : vector<48x96xf32>
    %250 = tpu.matmul %247, %249, %cst_84 {dimension_numbers = #tpu.dot_dimension_numbers<[1], [0], [0], [1], [0, 0, 1, 1], [], []>} : vector<48x32xbf16>, vector<32x96xbf16>, vector<48x96xf32> -> vector<48x96xf32>
    %c1_85 = arith.constant 1 : index
    %c0_86 = arith.constant 0 : index
    %c0_87 = arith.constant 0 : index
    %251 = vector.load %arg5[%c1_85, %c0_86, %c0_87] : memref<2x1x96xf32, #tpu.memory_space<vmem>>, vector<1x1x96xf32>
    %252 = vector.shape_cast %251 : vector<1x1x96xf32> to vector<1x96xf32>
    %253 = vector.broadcast %252 : vector<1x96xf32> to vector<48x96xf32>
    %254 = arith.addf %250, %253 : vector<48x96xf32>
    %255 = vector.extract_strided_slice %254 {offsets = [0, 0], sizes = [48, 32], strides = [1, 1]} : vector<48x96xf32> to vector<48x32xf32>
    %256 = arith.truncf %255 : vector<48x32xf32> to vector<48x32xbf16>
    %257 = vector.extract_strided_slice %254 {offsets = [0, 32], sizes = [48, 32], strides = [1, 1]} : vector<48x96xf32> to vector<48x32xf32>
    %258 = arith.truncf %257 : vector<48x32xf32> to vector<48x32xbf16>
    %259 = vector.extract_strided_slice %254 {offsets = [0, 64], sizes = [48, 32], strides = [1, 1]} : vector<48x96xf32> to vector<48x32xf32>
    %260 = arith.truncf %259 : vector<48x32xf32> to vector<48x32xbf16>
    %cst_88 = arith.constant 0.000000e+00 : f32
    %261 = vector.broadcast %cst_88 : f32 to vector<48x32xf32>
    %cst_89 = arith.constant 0.000000e+00 : bf16
    %262 = vector.broadcast %cst_89 : bf16 to vector<48x32xbf16>
    %263 = vector.shape_cast %5 : vector<1x32xi1> to vector<1x32xi1>
    %264 = vector.broadcast %263 : vector<1x32xi1> to vector<48x32xi1>
    %265 = arith.select %264, %256, %262 : vector<48x32xi1>, vector<48x32xbf16>
    %cst_90 = arith.constant dense<0.000000e+00> : vector<48x48xf32>
    %266 = tpu.matmul %265, %258, %cst_90 {dimension_numbers = #tpu.dot_dimension_numbers<[1], [1], [0], [0], [0, 0, 1, 0], [], []>} : vector<48x32xbf16>, vector<48x32xbf16>, vector<48x48xf32> -> vector<48x48xf32>
    %267 = arith.addf %266, %21 : vector<48x48xf32>
    %cst_91 = arith.constant dense<0xFF800000> : vector<48xf32>
    %268 = vector.multi_reduction <maximumf>, %267, %cst_91 [1] : vector<48x48xf32> to vector<48xf32>
    %269 = vector.shape_cast %268 : vector<48xf32> to vector<48x1xf32>
    %270 = vector.broadcast %269 : vector<48x1xf32> to vector<48x48xf32>
    %271 = arith.subf %267, %270 : vector<48x48xf32>
    %272 = math.exp %271 : vector<48x48xf32>
    %cst_92 = arith.constant dense<0.000000e+00> : vector<48xf32>
    %273 = vector.multi_reduction <add>, %272, %cst_92 [1] : vector<48x48xf32> to vector<48xf32>
    %274 = vector.shape_cast %273 : vector<48xf32> to vector<48x1xf32>
    %275 = tpu.reciprocal %274 {approx = true} : vector<48x1xf32> -> vector<48x1xf32>
    %276 = vector.broadcast %275 : vector<48x1xf32> to vector<48x48xf32>
    %277 = arith.mulf %272, %276 : vector<48x48xf32>
    %cst_93 = arith.constant 0.000000e+00 : bf16
    %278 = vector.broadcast %cst_93 : bf16 to vector<48x32xbf16>
    %279 = vector.shape_cast %5 : vector<1x32xi1> to vector<1x32xi1>
    %280 = vector.broadcast %279 : vector<1x32xi1> to vector<48x32xi1>
    %281 = arith.select %280, %260, %278 : vector<48x32xi1>, vector<48x32xbf16>
    %282 = arith.truncf %277 : vector<48x48xf32> to vector<48x48xbf16>
    %cst_94 = arith.constant dense<0.000000e+00> : vector<48x32xf32>
    %283 = tpu.matmul %282, %281, %cst_94 {dimension_numbers = #tpu.dot_dimension_numbers<[1], [0], [0], [1], [0, 0, 1, 1], [], []>} : vector<48x48xbf16>, vector<48x32xbf16>, vector<48x32xf32> -> vector<48x32xf32>
    %284 = arith.addf %261, %283 : vector<48x32xf32>
    %cst_95 = arith.constant 0.000000e+00 : bf16
    %285 = vector.broadcast %cst_95 : bf16 to vector<48x32xbf16>
    %286 = vector.shape_cast %10 : vector<1x32xi1> to vector<1x32xi1>
    %287 = vector.broadcast %286 : vector<1x32xi1> to vector<48x32xi1>
    %288 = arith.select %287, %256, %285 : vector<48x32xi1>, vector<48x32xbf16>
    %cst_96 = arith.constant dense<0.000000e+00> : vector<48x48xf32>
    %289 = tpu.matmul %288, %258, %cst_96 {dimension_numbers = #tpu.dot_dimension_numbers<[1], [1], [0], [0], [0, 0, 1, 0], [], []>} : vector<48x32xbf16>, vector<48x32xbf16>, vector<48x48xf32> -> vector<48x48xf32>
    %290 = arith.addf %289, %21 : vector<48x48xf32>
    %cst_97 = arith.constant dense<0xFF800000> : vector<48xf32>
    %291 = vector.multi_reduction <maximumf>, %290, %cst_97 [1] : vector<48x48xf32> to vector<48xf32>
    %292 = vector.shape_cast %291 : vector<48xf32> to vector<48x1xf32>
    %293 = vector.broadcast %292 : vector<48x1xf32> to vector<48x48xf32>
    %294 = arith.subf %290, %293 : vector<48x48xf32>
    %295 = math.exp %294 : vector<48x48xf32>
    %cst_98 = arith.constant dense<0.000000e+00> : vector<48xf32>
    %296 = vector.multi_reduction <add>, %295, %cst_98 [1] : vector<48x48xf32> to vector<48xf32>
    %297 = vector.shape_cast %296 : vector<48xf32> to vector<48x1xf32>
    %298 = tpu.reciprocal %297 {approx = true} : vector<48x1xf32> -> vector<48x1xf32>
    %299 = vector.broadcast %298 : vector<48x1xf32> to vector<48x48xf32>
    %300 = arith.mulf %295, %299 : vector<48x48xf32>
    %cst_99 = arith.constant 0.000000e+00 : bf16
    %301 = vector.broadcast %cst_99 : bf16 to vector<48x32xbf16>
    %302 = vector.shape_cast %10 : vector<1x32xi1> to vector<1x32xi1>
    %303 = vector.broadcast %302 : vector<1x32xi1> to vector<48x32xi1>
    %304 = arith.select %303, %260, %301 : vector<48x32xi1>, vector<48x32xbf16>
    %305 = arith.truncf %300 : vector<48x48xf32> to vector<48x48xbf16>
    %cst_100 = arith.constant dense<0.000000e+00> : vector<48x32xf32>
    %306 = tpu.matmul %305, %304, %cst_100 {dimension_numbers = #tpu.dot_dimension_numbers<[1], [0], [0], [1], [0, 0, 1, 1], [], []>} : vector<48x48xbf16>, vector<48x32xbf16>, vector<48x32xf32> -> vector<48x32xf32>
    %307 = arith.addf %284, %306 : vector<48x32xf32>
    %cst_101 = arith.constant 0.000000e+00 : bf16
    %308 = vector.broadcast %cst_101 : bf16 to vector<48x32xbf16>
    %309 = vector.shape_cast %15 : vector<1x32xi1> to vector<1x32xi1>
    %310 = vector.broadcast %309 : vector<1x32xi1> to vector<48x32xi1>
    %311 = arith.select %310, %256, %308 : vector<48x32xi1>, vector<48x32xbf16>
    %cst_102 = arith.constant dense<0.000000e+00> : vector<48x48xf32>
    %312 = tpu.matmul %311, %258, %cst_102 {dimension_numbers = #tpu.dot_dimension_numbers<[1], [1], [0], [0], [0, 0, 1, 0], [], []>} : vector<48x32xbf16>, vector<48x32xbf16>, vector<48x48xf32> -> vector<48x48xf32>
    %313 = arith.addf %312, %21 : vector<48x48xf32>
    %cst_103 = arith.constant dense<0xFF800000> : vector<48xf32>
    %314 = vector.multi_reduction <maximumf>, %313, %cst_103 [1] : vector<48x48xf32> to vector<48xf32>
    %315 = vector.shape_cast %314 : vector<48xf32> to vector<48x1xf32>
    %316 = vector.broadcast %315 : vector<48x1xf32> to vector<48x48xf32>
    %317 = arith.subf %313, %316 : vector<48x48xf32>
    %318 = math.exp %317 : vector<48x48xf32>
    %cst_104 = arith.constant dense<0.000000e+00> : vector<48xf32>
    %319 = vector.multi_reduction <add>, %318, %cst_104 [1] : vector<48x48xf32> to vector<48xf32>
    %320 = vector.shape_cast %319 : vector<48xf32> to vector<48x1xf32>
    %321 = tpu.reciprocal %320 {approx = true} : vector<48x1xf32> -> vector<48x1xf32>
    %322 = vector.broadcast %321 : vector<48x1xf32> to vector<48x48xf32>
    %323 = arith.mulf %318, %322 : vector<48x48xf32>
    %cst_105 = arith.constant 0.000000e+00 : bf16
    %324 = vector.broadcast %cst_105 : bf16 to vector<48x32xbf16>
    %325 = vector.shape_cast %15 : vector<1x32xi1> to vector<1x32xi1>
    %326 = vector.broadcast %325 : vector<1x32xi1> to vector<48x32xi1>
    %327 = arith.select %326, %260, %324 : vector<48x32xi1>, vector<48x32xbf16>
    %328 = arith.truncf %323 : vector<48x48xf32> to vector<48x48xbf16>
    %cst_106 = arith.constant dense<0.000000e+00> : vector<48x32xf32>
    %329 = tpu.matmul %328, %327, %cst_106 {dimension_numbers = #tpu.dot_dimension_numbers<[1], [0], [0], [1], [0, 0, 1, 1], [], []>} : vector<48x48xbf16>, vector<48x32xbf16>, vector<48x32xf32> -> vector<48x32xf32>
    %330 = arith.addf %307, %329 : vector<48x32xf32>
    %cst_107 = arith.constant 0.000000e+00 : bf16
    %331 = vector.broadcast %cst_107 : bf16 to vector<48x32xbf16>
    %332 = vector.shape_cast %20 : vector<1x32xi1> to vector<1x32xi1>
    %333 = vector.broadcast %332 : vector<1x32xi1> to vector<48x32xi1>
    %334 = arith.select %333, %256, %331 : vector<48x32xi1>, vector<48x32xbf16>
    %cst_108 = arith.constant dense<0.000000e+00> : vector<48x48xf32>
    %335 = tpu.matmul %334, %258, %cst_108 {dimension_numbers = #tpu.dot_dimension_numbers<[1], [1], [0], [0], [0, 0, 1, 0], [], []>} : vector<48x32xbf16>, vector<48x32xbf16>, vector<48x48xf32> -> vector<48x48xf32>
    %336 = arith.addf %335, %21 : vector<48x48xf32>
    %cst_109 = arith.constant dense<0xFF800000> : vector<48xf32>
    %337 = vector.multi_reduction <maximumf>, %336, %cst_109 [1] : vector<48x48xf32> to vector<48xf32>
    %338 = vector.shape_cast %337 : vector<48xf32> to vector<48x1xf32>
    %339 = vector.broadcast %338 : vector<48x1xf32> to vector<48x48xf32>
    %340 = arith.subf %336, %339 : vector<48x48xf32>
    %341 = math.exp %340 : vector<48x48xf32>
    %cst_110 = arith.constant dense<0.000000e+00> : vector<48xf32>
    %342 = vector.multi_reduction <add>, %341, %cst_110 [1] : vector<48x48xf32> to vector<48xf32>
    %343 = vector.shape_cast %342 : vector<48xf32> to vector<48x1xf32>
    %344 = tpu.reciprocal %343 {approx = true} : vector<48x1xf32> -> vector<48x1xf32>
    %345 = vector.broadcast %344 : vector<48x1xf32> to vector<48x48xf32>
    %346 = arith.mulf %341, %345 : vector<48x48xf32>
    %cst_111 = arith.constant 0.000000e+00 : bf16
    %347 = vector.broadcast %cst_111 : bf16 to vector<48x32xbf16>
    %348 = vector.shape_cast %20 : vector<1x32xi1> to vector<1x32xi1>
    %349 = vector.broadcast %348 : vector<1x32xi1> to vector<48x32xi1>
    %350 = arith.select %349, %260, %347 : vector<48x32xi1>, vector<48x32xbf16>
    %351 = arith.truncf %346 : vector<48x48xf32> to vector<48x48xbf16>
    %cst_112 = arith.constant dense<0.000000e+00> : vector<48x32xf32>
    %352 = tpu.matmul %351, %350, %cst_112 {dimension_numbers = #tpu.dot_dimension_numbers<[1], [0], [0], [1], [0, 0, 1, 1], [], []>} : vector<48x48xbf16>, vector<48x32xbf16>, vector<48x32xf32> -> vector<48x32xf32>
    %353 = arith.addf %330, %352 : vector<48x32xf32>
    %354 = arith.truncf %353 : vector<48x32xf32> to vector<48x32xbf16>
    %c1_113 = arith.constant 1 : index
    %c0_114 = arith.constant 0 : index
    %c0_115 = arith.constant 0 : index
    %355 = vector.load %arg6[%c1_113, %c0_114, %c0_115] : memref<2x32x32xbf16, #tpu.memory_space<vmem>>, vector<1x32x32xbf16>
    %356 = vector.shape_cast %355 : vector<1x32x32xbf16> to vector<32x32xbf16>
    %cst_116 = arith.constant dense<0.000000e+00> : vector<48x32xf32>
    %357 = tpu.matmul %354, %356, %cst_116 {dimension_numbers = #tpu.dot_dimension_numbers<[1], [0], [0], [1], [0, 0, 1, 1], [], []>} : vector<48x32xbf16>, vector<32x32xbf16>, vector<48x32xf32> -> vector<48x32xf32>
    %358 = arith.addf %218, %357 : vector<48x32xf32>
    %359 = vector.broadcast %223 : vector<1x32xf32> to vector<48x32xf32>
    %360 = arith.addf %358, %359 : vector<48x32xf32>
    %cst_117 = arith.constant dense<0.000000e+00> : vector<48xf32>
    %361 = vector.multi_reduction <add>, %360, %cst_117 [1] : vector<48x32xf32> to vector<48xf32>
    %362 = vector.shape_cast %361 : vector<48xf32> to vector<48x1xf32>
    %cst_118 = arith.constant 3.200000e+01 : f32
    %363 = vector.broadcast %cst_118 : f32 to vector<48x1xf32>
    %364 = arith.divf %362, %363 : vector<48x1xf32>
    %365 = vector.broadcast %364 : vector<48x1xf32> to vector<48x32xf32>
    %366 = arith.subf %360, %365 : vector<48x32xf32>
    %367 = arith.mulf %366, %366 : vector<48x32xf32>
    %cst_119 = arith.constant dense<0.000000e+00> : vector<48xf32>
    %368 = vector.multi_reduction <add>, %367, %cst_119 [1] : vector<48x32xf32> to vector<48xf32>
    %369 = vector.shape_cast %368 : vector<48xf32> to vector<48x1xf32>
    %cst_120 = arith.constant 3.200000e+01 : f32
    %370 = vector.broadcast %cst_120 : f32 to vector<48x1xf32>
    %371 = arith.divf %369, %370 : vector<48x1xf32>
    %cst_121 = arith.constant 9.99999997E-7 : f32
    %372 = vector.broadcast %cst_121 : f32 to vector<48x1xf32>
    %373 = arith.addf %371, %372 : vector<48x1xf32>
    %374 = math.rsqrt %373 : vector<48x1xf32>
    %375 = vector.broadcast %374 : vector<48x1xf32> to vector<48x32xf32>
    %376 = arith.mulf %366, %375 : vector<48x32xf32>
    %377 = vector.broadcast %224 : vector<1x32xf32> to vector<48x32xf32>
    %378 = arith.mulf %376, %377 : vector<48x32xf32>
    %379 = vector.broadcast %225 : vector<1x32xf32> to vector<48x32xf32>
    %380 = arith.addf %378, %379 : vector<48x32xf32>
    %381 = arith.truncf %380 : vector<48x32xf32> to vector<48x32xbf16>
    %c1_122 = arith.constant 1 : index
    %c0_123 = arith.constant 0 : index
    %c0_124 = arith.constant 0 : index
    %382 = vector.load %arg8[%c1_122, %c0_123, %c0_124] : memref<2x32x128xbf16, #tpu.memory_space<vmem>>, vector<1x32x128xbf16>
    %383 = vector.shape_cast %382 : vector<1x32x128xbf16> to vector<32x128xbf16>
    %cst_125 = arith.constant dense<0.000000e+00> : vector<48x128xf32>
    %384 = tpu.matmul %381, %383, %cst_125 {dimension_numbers = #tpu.dot_dimension_numbers<[1], [0], [0], [1], [0, 0, 1, 1], [], []>} : vector<48x32xbf16>, vector<32x128xbf16>, vector<48x128xf32> -> vector<48x128xf32>
    %c1_126 = arith.constant 1 : index
    %c0_127 = arith.constant 0 : index
    %c0_128 = arith.constant 0 : index
    %385 = vector.load %arg9[%c1_126, %c0_127, %c0_128] : memref<2x1x128xf32, #tpu.memory_space<vmem>>, vector<1x1x128xf32>
    %386 = vector.shape_cast %385 : vector<1x1x128xf32> to vector<1x128xf32>
    %387 = vector.broadcast %386 : vector<1x128xf32> to vector<48x128xf32>
    %388 = arith.addf %384, %387 : vector<48x128xf32>
    %cst_129 = arith.constant 0.636619746 : f32
    %389 = math.sqrt %cst_129 : f32
    %cst_130 = arith.constant 5.000000e-01 : f32
    %390 = vector.broadcast %cst_130 : f32 to vector<48x128xf32>
    %391 = arith.mulf %390, %388 : vector<48x128xf32>
    %392 = arith.mulf %388, %388 : vector<48x128xf32>
    %393 = arith.mulf %392, %388 : vector<48x128xf32>
    %cst_131 = arith.constant 4.471500e-02 : f32
    %394 = vector.broadcast %cst_131 : f32 to vector<48x128xf32>
    %395 = arith.mulf %394, %393 : vector<48x128xf32>
    %396 = arith.addf %388, %395 : vector<48x128xf32>
    %397 = vector.broadcast %389 : f32 to vector<48x128xf32>
    %398 = arith.mulf %397, %396 : vector<48x128xf32>
    %399 = math.tanh %398 : vector<48x128xf32>
    %cst_132 = arith.constant 1.000000e+00 : f32
    %400 = vector.broadcast %cst_132 : f32 to vector<48x128xf32>
    %401 = arith.addf %400, %399 : vector<48x128xf32>
    %402 = arith.mulf %391, %401 : vector<48x128xf32>
    %403 = arith.truncf %402 : vector<48x128xf32> to vector<48x128xbf16>
    %c1_133 = arith.constant 1 : index
    %c0_134 = arith.constant 0 : index
    %c0_135 = arith.constant 0 : index
    %404 = vector.load %arg10[%c1_133, %c0_134, %c0_135] : memref<2x128x32xbf16, #tpu.memory_space<vmem>>, vector<1x128x32xbf16>
    %405 = vector.shape_cast %404 : vector<1x128x32xbf16> to vector<128x32xbf16>
    %cst_136 = arith.constant dense<0.000000e+00> : vector<48x32xf32>
    %406 = tpu.matmul %403, %405, %cst_136 {dimension_numbers = #tpu.dot_dimension_numbers<[1], [0], [0], [1], [0, 0, 1, 1], [], []>} : vector<48x128xbf16>, vector<128x32xbf16>, vector<48x32xf32> -> vector<48x32xf32>
    %407 = arith.addf %360, %406 : vector<48x32xf32>
    %408 = vector.broadcast %226 : vector<1x32xf32> to vector<48x32xf32>
    %409 = arith.addf %407, %408 : vector<48x32xf32>
    %410 = vector.extract_strided_slice %409 {offsets = [0, 0], sizes = [1, 32], strides = [1, 1]} : vector<48x32xf32> to vector<1x32xf32>
    %411 = vector.extract_strided_slice %409 {offsets = [24, 0], sizes = [1, 32], strides = [1, 1]} : vector<48x32xf32> to vector<1x32xf32>
    %412 = tpu.concatenate %410, %411 in 0 : vector<1x32xf32>, vector<1x32xf32> -> vector<2x32xf32>
    %c0_137 = arith.constant 0 : index
    %c0_138 = arith.constant 0 : index
    %413 = vector.load %arg11[%c0_137, %c0_138] : memref<4x32xf32, #tpu.memory_space<vmem>>, vector<4x32xf32>
    %414 = vector.extract_strided_slice %413 {offsets = [0, 0], sizes = [1, 32], strides = [1, 1]} : vector<4x32xf32> to vector<1x32xf32>
    %415 = vector.extract_strided_slice %413 {offsets = [1, 0], sizes = [1, 32], strides = [1, 1]} : vector<4x32xf32> to vector<1x32xf32>
    %cst_139 = arith.constant dense<0.000000e+00> : vector<2xf32>
    %416 = vector.multi_reduction <add>, %412, %cst_139 [1] : vector<2x32xf32> to vector<2xf32>
    %417 = vector.shape_cast %416 : vector<2xf32> to vector<2x1xf32>
    %cst_140 = arith.constant 3.200000e+01 : f32
    %418 = vector.broadcast %cst_140 : f32 to vector<2x1xf32>
    %419 = arith.divf %417, %418 : vector<2x1xf32>
    %420 = vector.broadcast %419 : vector<2x1xf32> to vector<2x32xf32>
    %421 = arith.subf %412, %420 : vector<2x32xf32>
    %422 = arith.mulf %421, %421 : vector<2x32xf32>
    %cst_141 = arith.constant dense<0.000000e+00> : vector<2xf32>
    %423 = vector.multi_reduction <add>, %422, %cst_141 [1] : vector<2x32xf32> to vector<2xf32>
    %424 = vector.shape_cast %423 : vector<2xf32> to vector<2x1xf32>
    %cst_142 = arith.constant 3.200000e+01 : f32
    %425 = vector.broadcast %cst_142 : f32 to vector<2x1xf32>
    %426 = arith.divf %424, %425 : vector<2x1xf32>
    %cst_143 = arith.constant 9.99999997E-7 : f32
    %427 = vector.broadcast %cst_143 : f32 to vector<2x1xf32>
    %428 = arith.addf %426, %427 : vector<2x1xf32>
    %429 = math.rsqrt %428 : vector<2x1xf32>
    %430 = vector.broadcast %429 : vector<2x1xf32> to vector<2x32xf32>
    %431 = arith.mulf %421, %430 : vector<2x32xf32>
    %432 = vector.broadcast %414 : vector<1x32xf32> to vector<2x32xf32>
    %433 = arith.mulf %431, %432 : vector<2x32xf32>
    %434 = vector.broadcast %415 : vector<1x32xf32> to vector<2x32xf32>
    %435 = arith.addf %433, %434 : vector<2x32xf32>
    %436 = vector.extract_strided_slice %413 {offsets = [2, 0], sizes = [1, 32], strides = [1, 1]} : vector<4x32xf32> to vector<1x32xf32>
    %437 = vector.extract_strided_slice %413 {offsets = [3, 0], sizes = [1, 32], strides = [1, 1]} : vector<4x32xf32> to vector<1x32xf32>
    %cst_144 = arith.constant dense<0.000000e+00> : vector<2xf32>
    %438 = vector.multi_reduction <add>, %435, %cst_144 [1] : vector<2x32xf32> to vector<2xf32>
    %439 = vector.shape_cast %438 : vector<2xf32> to vector<2x1xf32>
    %cst_145 = arith.constant 3.200000e+01 : f32
    %440 = vector.broadcast %cst_145 : f32 to vector<2x1xf32>
    %441 = arith.divf %439, %440 : vector<2x1xf32>
    %442 = vector.broadcast %441 : vector<2x1xf32> to vector<2x32xf32>
    %443 = arith.subf %435, %442 : vector<2x32xf32>
    %444 = arith.mulf %443, %443 : vector<2x32xf32>
    %cst_146 = arith.constant dense<0.000000e+00> : vector<2xf32>
    %445 = vector.multi_reduction <add>, %444, %cst_146 [1] : vector<2x32xf32> to vector<2xf32>
    %446 = vector.shape_cast %445 : vector<2xf32> to vector<2x1xf32>
    %cst_147 = arith.constant 3.200000e+01 : f32
    %447 = vector.broadcast %cst_147 : f32 to vector<2x1xf32>
    %448 = arith.divf %446, %447 : vector<2x1xf32>
    %cst_148 = arith.constant 9.99999974E-6 : f32
    %449 = vector.broadcast %cst_148 : f32 to vector<2x1xf32>
    %450 = arith.addf %448, %449 : vector<2x1xf32>
    %451 = math.rsqrt %450 : vector<2x1xf32>
    %452 = vector.broadcast %451 : vector<2x1xf32> to vector<2x32xf32>
    %453 = arith.mulf %443, %452 : vector<2x32xf32>
    %454 = vector.broadcast %436 : vector<1x32xf32> to vector<2x32xf32>
    %455 = arith.mulf %453, %454 : vector<2x32xf32>
    %456 = vector.broadcast %437 : vector<1x32xf32> to vector<2x32xf32>
    %457 = arith.addf %455, %456 : vector<2x32xf32>
    %c0_149 = arith.constant 0 : index
    %c0_150 = arith.constant 0 : index
    %458 = vector.load %arg13[%c0_149, %c0_150] : memref<3x512xf32, #tpu.memory_space<vmem>>, vector<3x512xf32>
    %459 = arith.truncf %457 : vector<2x32xf32> to vector<2x32xbf16>
    %c0_151 = arith.constant 0 : index
    %c0_152 = arith.constant 0 : index
    %460 = vector.load %arg12[%c0_151, %c0_152] : memref<32x512xbf16, #tpu.memory_space<vmem>>, vector<32x512xbf16>
    %cst_153 = arith.constant dense<0.000000e+00> : vector<2x512xf32>
    %461 = tpu.matmul %459, %460, %cst_153 {dimension_numbers = #tpu.dot_dimension_numbers<[1], [0], [0], [1], [0, 0, 1, 1], [], []>} : vector<2x32xbf16>, vector<32x512xbf16>, vector<2x512xf32> -> vector<2x512xf32>
    %462 = vector.extract_strided_slice %458 {offsets = [0, 0], sizes = [1, 512], strides = [1, 1]} : vector<3x512xf32> to vector<1x512xf32>
    %463 = vector.broadcast %462 : vector<1x512xf32> to vector<2x512xf32>
    %464 = arith.addf %461, %463 : vector<2x512xf32>
    %cst_154 = arith.constant 0.636619746 : f32
    %465 = math.sqrt %cst_154 : f32
    %cst_155 = arith.constant 5.000000e-01 : f32
    %466 = vector.broadcast %cst_155 : f32 to vector<2x512xf32>
    %467 = arith.mulf %466, %464 : vector<2x512xf32>
    %468 = arith.mulf %464, %464 : vector<2x512xf32>
    %469 = arith.mulf %468, %464 : vector<2x512xf32>
    %cst_156 = arith.constant 4.471500e-02 : f32
    %470 = vector.broadcast %cst_156 : f32 to vector<2x512xf32>
    %471 = arith.mulf %470, %469 : vector<2x512xf32>
    %472 = arith.addf %464, %471 : vector<2x512xf32>
    %473 = vector.broadcast %465 : f32 to vector<2x512xf32>
    %474 = arith.mulf %473, %472 : vector<2x512xf32>
    %475 = math.tanh %474 : vector<2x512xf32>
    %cst_157 = arith.constant 1.000000e+00 : f32
    %476 = vector.broadcast %cst_157 : f32 to vector<2x512xf32>
    %477 = arith.addf %476, %475 : vector<2x512xf32>
    %478 = arith.mulf %467, %477 : vector<2x512xf32>
    %479 = vector.extract_strided_slice %458 {offsets = [1, 0], sizes = [1, 512], strides = [1, 1]} : vector<3x512xf32> to vector<1x512xf32>
    %480 = vector.extract_strided_slice %458 {offsets = [2, 0], sizes = [1, 512], strides = [1, 1]} : vector<3x512xf32> to vector<1x512xf32>
    %cst_158 = arith.constant dense<0.000000e+00> : vector<2xf32>
    %481 = vector.multi_reduction <add>, %478, %cst_158 [1] : vector<2x512xf32> to vector<2xf32>
    %482 = vector.shape_cast %481 : vector<2xf32> to vector<2x1xf32>
    %cst_159 = arith.constant 5.120000e+02 : f32
    %483 = vector.broadcast %cst_159 : f32 to vector<2x1xf32>
    %484 = arith.divf %482, %483 : vector<2x1xf32>
    %485 = vector.broadcast %484 : vector<2x1xf32> to vector<2x512xf32>
    %486 = arith.subf %478, %485 : vector<2x512xf32>
    %487 = arith.mulf %486, %486 : vector<2x512xf32>
    %cst_160 = arith.constant dense<0.000000e+00> : vector<2xf32>
    %488 = vector.multi_reduction <add>, %487, %cst_160 [1] : vector<2x512xf32> to vector<2xf32>
    %489 = vector.shape_cast %488 : vector<2xf32> to vector<2x1xf32>
    %cst_161 = arith.constant 5.120000e+02 : f32
    %490 = vector.broadcast %cst_161 : f32 to vector<2x1xf32>
    %491 = arith.divf %489, %490 : vector<2x1xf32>
    %cst_162 = arith.constant 9.99999974E-6 : f32
    %492 = vector.broadcast %cst_162 : f32 to vector<2x1xf32>
    %493 = arith.addf %491, %492 : vector<2x1xf32>
    %494 = math.rsqrt %493 : vector<2x1xf32>
    %495 = vector.broadcast %494 : vector<2x1xf32> to vector<2x512xf32>
    %496 = arith.mulf %486, %495 : vector<2x512xf32>
    %497 = vector.broadcast %479 : vector<1x512xf32> to vector<2x512xf32>
    %498 = arith.mulf %496, %497 : vector<2x512xf32>
    %499 = vector.broadcast %480 : vector<1x512xf32> to vector<2x512xf32>
    %500 = arith.addf %498, %499 : vector<2x512xf32>
    %c0_163 = arith.constant 0 : index
    %c0_164 = arith.constant 0 : index
    %501 = vector.load %arg15[%c0_163, %c0_164] : memref<3x256xf32, #tpu.memory_space<vmem>>, vector<3x256xf32>
    %502 = arith.truncf %500 : vector<2x512xf32> to vector<2x512xbf16>
    %c0_165 = arith.constant 0 : index
    %c0_166 = arith.constant 0 : index
    %503 = vector.load %arg14[%c0_165, %c0_166] : memref<512x256xbf16, #tpu.memory_space<vmem>>, vector<512x256xbf16>
    %cst_167 = arith.constant dense<0.000000e+00> : vector<2x256xf32>
    %504 = tpu.matmul %502, %503, %cst_167 {dimension_numbers = #tpu.dot_dimension_numbers<[1], [0], [0], [1], [0, 0, 1, 1], [], []>} : vector<2x512xbf16>, vector<512x256xbf16>, vector<2x256xf32> -> vector<2x256xf32>
    %505 = vector.extract_strided_slice %501 {offsets = [0, 0], sizes = [1, 256], strides = [1, 1]} : vector<3x256xf32> to vector<1x256xf32>
    %506 = vector.broadcast %505 : vector<1x256xf32> to vector<2x256xf32>
    %507 = arith.addf %504, %506 : vector<2x256xf32>
    %cst_168 = arith.constant 0.636619746 : f32
    %508 = math.sqrt %cst_168 : f32
    %cst_169 = arith.constant 5.000000e-01 : f32
    %509 = vector.broadcast %cst_169 : f32 to vector<2x256xf32>
    %510 = arith.mulf %509, %507 : vector<2x256xf32>
    %511 = arith.mulf %507, %507 : vector<2x256xf32>
    %512 = arith.mulf %511, %507 : vector<2x256xf32>
    %cst_170 = arith.constant 4.471500e-02 : f32
    %513 = vector.broadcast %cst_170 : f32 to vector<2x256xf32>
    %514 = arith.mulf %513, %512 : vector<2x256xf32>
    %515 = arith.addf %507, %514 : vector<2x256xf32>
    %516 = vector.broadcast %508 : f32 to vector<2x256xf32>
    %517 = arith.mulf %516, %515 : vector<2x256xf32>
    %518 = math.tanh %517 : vector<2x256xf32>
    %cst_171 = arith.constant 1.000000e+00 : f32
    %519 = vector.broadcast %cst_171 : f32 to vector<2x256xf32>
    %520 = arith.addf %519, %518 : vector<2x256xf32>
    %521 = arith.mulf %510, %520 : vector<2x256xf32>
    %522 = vector.extract_strided_slice %501 {offsets = [1, 0], sizes = [1, 256], strides = [1, 1]} : vector<3x256xf32> to vector<1x256xf32>
    %523 = vector.extract_strided_slice %501 {offsets = [2, 0], sizes = [1, 256], strides = [1, 1]} : vector<3x256xf32> to vector<1x256xf32>
    %cst_172 = arith.constant dense<0.000000e+00> : vector<2xf32>
    %524 = vector.multi_reduction <add>, %521, %cst_172 [1] : vector<2x256xf32> to vector<2xf32>
    %525 = vector.shape_cast %524 : vector<2xf32> to vector<2x1xf32>
    %cst_173 = arith.constant 2.560000e+02 : f32
    %526 = vector.broadcast %cst_173 : f32 to vector<2x1xf32>
    %527 = arith.divf %525, %526 : vector<2x1xf32>
    %528 = vector.broadcast %527 : vector<2x1xf32> to vector<2x256xf32>
    %529 = arith.subf %521, %528 : vector<2x256xf32>
    %530 = arith.mulf %529, %529 : vector<2x256xf32>
    %cst_174 = arith.constant dense<0.000000e+00> : vector<2xf32>
    %531 = vector.multi_reduction <add>, %530, %cst_174 [1] : vector<2x256xf32> to vector<2xf32>
    %532 = vector.shape_cast %531 : vector<2xf32> to vector<2x1xf32>
    %cst_175 = arith.constant 2.560000e+02 : f32
    %533 = vector.broadcast %cst_175 : f32 to vector<2x1xf32>
    %534 = arith.divf %532, %533 : vector<2x1xf32>
    %cst_176 = arith.constant 9.99999974E-6 : f32
    %535 = vector.broadcast %cst_176 : f32 to vector<2x1xf32>
    %536 = arith.addf %534, %535 : vector<2x1xf32>
    %537 = math.rsqrt %536 : vector<2x1xf32>
    %538 = vector.broadcast %537 : vector<2x1xf32> to vector<2x256xf32>
    %539 = arith.mulf %529, %538 : vector<2x256xf32>
    %540 = vector.broadcast %522 : vector<1x256xf32> to vector<2x256xf32>
    %541 = arith.mulf %539, %540 : vector<2x256xf32>
    %542 = vector.broadcast %523 : vector<1x256xf32> to vector<2x256xf32>
    %543 = arith.addf %541, %542 : vector<2x256xf32>
    %544 = arith.truncf %543 : vector<2x256xf32> to vector<2x256xbf16>
    %c0_177 = arith.constant 0 : index
    %c0_178 = arith.constant 0 : index
    %545 = vector.load %arg16[%c0_177, %c0_178] : memref<256x15xbf16, #tpu.memory_space<vmem>>, vector<256x15xbf16>
    %cst_179 = arith.constant dense<0.000000e+00> : vector<2x15xf32>
    %546 = tpu.matmul %544, %545, %cst_179 {dimension_numbers = #tpu.dot_dimension_numbers<[1], [0], [0], [1], [0, 0, 1, 1], [], []>} : vector<2x256xbf16>, vector<256x15xbf16>, vector<2x15xf32> -> vector<2x15xf32>
    %c0_180 = arith.constant 0 : index
    %c0_181 = arith.constant 0 : index
    %547 = vector.load %arg17[%c0_180, %c0_181] : memref<1x15xf32, #tpu.memory_space<vmem>>, vector<1x15xf32>
    %548 = vector.broadcast %547 : vector<1x15xf32> to vector<2x15xf32>
    %549 = arith.addf %546, %548 : vector<2x15xf32>
    %c0_182 = arith.constant 0 : index
    %c0_183 = arith.constant 0 : index
    %550 = vector.load %arg18[%c0_182, %c0_183] : memref<2x15xf32, #tpu.memory_space<vmem>>, vector<2x15xf32>
    tpu.vector_store %arg18[%c0_182, %c0_183], %549 {strides = array<i32>} : memref<2x15xf32, #tpu.memory_space<vmem>>, vector<2x15xf32>,
    return
  }
}

</mosaic_0001>

<llo_original>
// kernel: crop_disease_vit_forward.1
$region0: #{crop_disease_vit_forward.1}
  #allocation0 [shape = 'u32[]', space=smem, size = 0x4, offset = 0x4, fixed_abs, tag = 'smem constant byte address 0x4 - core index']
  #allocation1 [shape = 'u32[144,128]{1,0:T(1,128)}', space=vmem, size = 0x12000, scoped, tag = 'internal scratch']
  %s0 = inlined_call_operand.vmem [shape: bf16[48,48], index: 0, kind: input, shape index: {}]
  %s1 = inlined_call_operand.vmem [shape: bf16[48,32], index: 1, kind: input, shape index: {}]
  %s2 = inlined_call_operand.vmem [shape: f32[24,32], index: 2, kind: input, shape index: {}]
  %s3 = inlined_call_operand.vmem [shape: f32[48,48], index: 3, kind: input, shape index: {}]
  %s4 = inlined_call_operand.vmem [shape: bf16[2,32,96], index: 4, kind: input, shape index: {}]
  %s5 = inlined_call_operand.vmem [shape: f32[2,1,96], index: 5, kind: input, shape index: {}]
  %s6 = inlined_call_operand.vmem [shape: bf16[2,32,32], index: 6, kind: input, shape index: {}]
  %s7 = inlined_call_operand.vmem [shape: f32[2,6,32], index: 7, kind: input, shape index: {}]
  %s8 = inlined_call_operand.vmem [shape: bf16[2,32,128], index: 8, kind: input, shape index: {}]
  %s9 = inlined_call_operand.vmem [shape: f32[2,1,128], index: 9, kind: input, shape index: {}]
  %s10 = inlined_call_operand.vmem [shape: bf16[2,128,32], index: 10, kind: input, shape index: {}]
  %s11 = inlined_call_operand.vmem [shape: f32[4,32], index: 11, kind: input, shape index: {}]
  %s12 = inlined_call_operand.vmem [shape: bf16[32,512], index: 12, kind: input, shape index: {}]
  %s13 = inlined_call_operand.vmem [shape: f32[3,512], index: 13, kind: input, shape index: {}]
  %s14 = inlined_call_operand.vmem [shape: bf16[512,256], index: 14, kind: input, shape index: {}]
  %s15 = inlined_call_operand.vmem [shape: f32[3,256], index: 15, kind: input, shape index: {}]
  %s16 = inlined_call_operand.vmem [shape: bf16[256,15], index: 16, kind: input, shape index: {}]
  %s17 = inlined_call_operand.vmem [shape: f32[1,15], index: 17, kind: input, shape index: {}]
  %s18 = inlined_call_operand.hbm [shape: f32[2,15], index: 18, kind: output, shape index: {}]
  %s19 = sld [smem:[#allocation0]]
  $region82: #{crop_disease_vit_forward.1} parent=0
    _
  %s21 = ssub.s32 1, %s19
  %s22 = scalar_select 0, %s21, %s19
  $region1: #{crop_disease_vit_forward.1} parent=0
    #allocation2 [shape = 'u8[1024]{0}', space=vmem, size = 0x400, scoped, tag = 'output window, operand 0, single buffered']
    #allocation3 [shape = 's32[1]{0}', space=sflag, size = 0x4, scoped, tag = 'scoped memory for crop_disease_vit_forward.1']
    %23 = vsyncpa [#allocation3], 0
    // Predicated region
    $region2: #{crop_disease_vit_forward.1} parent=1 // pred_check
      _
    $region3: #{crop_disease_vit_forward.1} parent=1 // pred_check_branch
      %25 = sbr.rel (0) target = $region5
    $region4: #{crop_disease_vit_forward.1} parent=1 // pred_region
      _
    $region5: #{crop_disease_vit_forward.1} parent=1 // pred_fallthru
      _
    // Predicated region
    $region6: #{crop_disease_vit_forward.1} parent=1 // pred_check
      _
    $region7: #{crop_disease_vit_forward.1} parent=1 // pred_check_branch
      %27 = sbr.rel (0) target = $region9
    $region8: #{crop_disease_vit_forward.1} parent=1 // pred_region
      _
    $region9: #{crop_disease_vit_forward.1} parent=1 // pred_fallthru
      _
    // Predicated region
    $region10: #{crop_disease_vit_forward.1} parent=1 // pred_check
      _
    $region11: #{crop_disease_vit_forward.1} parent=1 // pred_check_branch
      %29 = sbr.rel (0) target = $region13
    $region12: #{crop_disease_vit_forward.1} parent=1 // pred_region
      _
    $region13: #{crop_disease_vit_forward.1} parent=1 // pred_fallthru
      _
    // Predicated region
    $region14: #{crop_disease_vit_forward.1} parent=1 // pred_check
      _
    $region15: #{crop_disease_vit_forward.1} parent=1 // pred_check_branch
      %31 = sbr.rel (0) target = $region17
    $region16: #{crop_disease_vit_forward.1} parent=1 // pred_region
      _
    $region17: #{crop_disease_vit_forward.1} parent=1 // pred_fallthru
      _
    // Predicated region
    $region18: #{crop_disease_vit_forward.1} parent=1 // pred_check
      _
    $region19: #{crop_disease_vit_forward.1} parent=1 // pred_check_branch
      %33 = sbr.rel (0) target = $region21
    $region20: #{crop_disease_vit_forward.1} parent=1 // pred_region
      _
    $region21: #{crop_disease_vit_forward.1} parent=1 // pred_fallthru
      _
    // Predicated region
    $region22: #{crop_disease_vit_forward.1} parent=1 // pred_check
      _
    $region23: #{crop_disease_vit_forward.1} parent=1 // pred_check_branch
      %35 = sbr.rel (0) target = $region25
    $region24: #{crop_disease_vit_forward.1} parent=1 // pred_region
      _
    $region25: #{crop_disease_vit_forward.1} parent=1 // pred_fallthru
      _
    // Predicated region
    $region26: #{crop_disease_vit_forward.1} parent=1 // pred_check
      _
    $region27: #{crop_disease_vit_forward.1} parent=1 // pred_check_branch
      %37 = sbr.rel (0) target = $region29
    $region28: #{crop_disease_vit_forward.1} parent=1 // pred_region
      _
    $region29: #{crop_disease_vit_forward.1} parent=1 // pred_fallthru
      _
    // Predicated region
    $region30: #{crop_disease_vit_forward.1} parent=1 // pred_check
      _
    $region31: #{crop_disease_vit_forward.1} parent=1 // pred_check_branch
      %39 = sbr.rel (0) target = $region33
    $region32: #{crop_disease_vit_forward.1} parent=1 // pred_region
      _
    $region33: #{crop_disease_vit_forward.1} parent=1 // pred_fallthru
      _
    // Predicated region
    $region34: #{crop_disease_vit_forward.1} parent=1 // pred_check
      _
    $region35: #{crop_disease_vit_forward.1} parent=1 // pred_check_branch
      %41 = sbr.rel (0) target = $region37
    $region36: #{crop_disease_vit_forward.1} parent=1 // pred_region
      _
    $region37: #{crop_disease_vit_forward.1} parent=1 // pred_fallthru
      _
    // Predicated region
    $region38: #{crop_disease_vit_forward.1} parent=1 // pred_check
      _
    $region39: #{crop_disease_vit_forward.1} parent=1 // pred_check_branch
      %43 = sbr.rel (0) target = $region41
    $region40: #{crop_disease_vit_forward.1} parent=1 // pred_region
      _
    $region41: #{crop_disease_vit_forward.1} parent=1 // pred_fallthru
      _
    // Predicated region
    $region42: #{crop_disease_vit_forward.1} parent=1 // pred_check
      _
    $region43: #{crop_disease_vit_forward.1} parent=1 // pred_check_branch
      %45 = sbr.rel (0) target = $region45
    $region44: #{crop_disease_vit_forward.1} parent=1 // pred_region
      _
    $region45: #{crop_disease_vit_forward.1} parent=1 // pred_fallthru
      _
    // Predicated region
    $region46: #{crop_disease_vit_forward.1} parent=1 // pred_check
      _
    $region47: #{crop_disease_vit_forward.1} parent=1 // pred_check_branch
      %47 = sbr.rel (0) target = $region49
    $region48: #{crop_disease_vit_forward.1} parent=1 // pred_region
      _
    $region49: #{crop_disease_vit_forward.1} parent=1 // pred_fallthru
      _
    // Predicated region
    $region50: #{crop_disease_vit_forward.1} parent=1 // pred_check
      _
    $region51: #{crop_disease_vit_forward.1} parent=1 // pred_check_branch
      %49 = sbr.rel (0) target = $region53
    $region52: #{crop_disease_vit_forward.1} parent=1 // pred_region
      _
    $region53: #{crop_disease_vit_forward.1} parent=1 // pred_fallthru
      _
    // Predicated region
    $region54: #{crop_disease_vit_forward.1} parent=1 // pred_check
      _
    $region55: #{crop_disease_vit_forward.1} parent=1 // pred_check_branch
      %51 = sbr.rel (0) target = $region57
    $region56: #{crop_disease_vit_forward.1} parent=1 // pred_region
      _
    $region57: #{crop_disease_vit_forward.1} parent=1 // pred_fallthru
      _
    // Predicated region
    $region58: #{crop_disease_vit_forward.1} parent=1 // pred_check
      _
    $region59: #{crop_disease_vit_forward.1} parent=1 // pred_check_branch
      %53 = sbr.rel (0) target = $region61
    $region60: #{crop_disease_vit_forward.1} parent=1 // pred_region
      _
    $region61: #{crop_disease_vit_forward.1} parent=1 // pred_fallthru
      _
    // Predicated region
    $region62: #{crop_disease_vit_forward.1} parent=1 // pred_check
      _
    $region63: #{crop_disease_vit_forward.1} parent=1 // pred_check_branch
      %55 = sbr.rel (0) target = $region65
    $region64: #{crop_disease_vit_forward.1} parent=1 // pred_region
      _
    $region65: #{crop_disease_vit_forward.1} parent=1 // pred_fallthru
      _
    // Predicated region
    $region66: #{crop_disease_vit_forward.1} parent=1 // pred_check
      _
    $region67: #{crop_disease_vit_forward.1} parent=1 // pred_check_branch
      %57 = sbr.rel (0) target = $region69
    $region68: #{crop_disease_vit_forward.1} parent=1 // pred_region
      _
    $region69: #{crop_disease_vit_forward.1} parent=1 // pred_fallthru
      _
    // Predicated region
    $region70: #{crop_disease_vit_forward.1} parent=1 // pred_check
      _
    $region71: #{crop_disease_vit_forward.1} parent=1 // pred_check_branch
      %59 = sbr.rel (0) target = $region73
    $region72: #{crop_disease_vit_forward.1} parent=1 // pred_region
      _
    $region73: #{crop_disease_vit_forward.1} parent=1 // pred_fallthru
      _
    %v63 = vlaneseq
    %v64 = vand.u32 %v63, 127
    %vm65 = vcmp.ge.s32.totalorder %v64, 0
    %vm66 = vcmp.lt.s32.totalorder %v64, 8
    %vm67 = vmand %vm65, %vm66
    %vm68 = vcmp.ge.s32.totalorder %v64, 8
    %vm69 = vcmp.lt.s32.totalorder %v64, 16
    %vm70 = vmand %vm68, %vm69
    %vm71 = vcmp.ge.s32.totalorder %v64, 16
    %vm72 = vcmp.lt.s32.totalorder %v64, 24
    %vm73 = vmand %vm71, %vm72
    %vm74 = vcmp.ge.s32.totalorder %v64, 24
    %vm75 = vcmp.lt.s32.totalorder %v64, 32
    %vm76 = vmand %vm74, %vm75
    %v77 = vld [vmem:[%s3] sm:$0xff]
    %v78 = vld [vmem:[%s3 + $0x8] sm:$0xff]
    %v79 = vld [vmem:[%s3 + $0x10] sm:$0xff]
    %v80 = vld [vmem:[%s3 + $0x18] sm:$0xff]
    %v81 = vld [vmem:[%s3 + $0x20] sm:$0xff]
    %v82 = vld [vmem:[%s3 + $0x28] sm:$0xff]
    %v83 = vld [vmem:[%s2] sm:$0xff]
    %v84 = vld [vmem:[%s2 + $0x8] sm:$0xff]
    %v85 = vld [vmem:[%s2 + $0x10] sm:$0xff]
    %v86 = vld [vmem:[%s0] sm:$0xf]
    %v87 = vld [vmem:[%s0 + $0x4] sm:$0xf]
    %v88 = vld [vmem:[%s0 + $0x8] sm:$0xf]
    %v89 = vld [vmem:[%s0 + $0xc] sm:$0xf]
    %v90 = vld [vmem:[%s0 + $0x10] sm:$0xf]
    %v91 = vld [vmem:[%s0 + $0x14] sm:$0xf]
    %v92 = vld [vmem:[%s1] sm:$0xf]
    %v93 = vld [vmem:[%s1 + $0x4] sm:$0xf]
    %v94 = vld [vmem:[%s1 + $0x8] sm:$0xf]
    %v95 = vld [vmem:[%s1 + $0xc] sm:$0xf]
    %v96 = vld [vmem:[%s1 + $0x10] sm:$0xf]
    %v97 = vld [vmem:[%s1 + $0x14] sm:$0xf]
    %v104 = vunpack.c.l.b16 %v86
    %v105 = vunpack.c.l.b16 %v87
    %v106 = vunpack.c.l.b16 %v88
    %v107 = vunpack.c.l.b16 %v89
    %v108 = vunpack.c.l.b16 %v90
    %v109 = vunpack.c.l.b16 %v91
    %v110 = vpack.c.b16 %v105, %v104
    %v111 = vpack.c.b16 %v107, %v106
    %v112 = vpack.c.b16 %v109, %v108
    %v119 = vunpack.c.l.b16 %v92
    %v120 = vunpack.c.l.b16 %v93
    %v121 = vunpack.c.l.b16 %v94
    %v122 = vunpack.c.l.b16 %v95
    %v123 = vunpack.c.l.b16 %v96
    %v124 = vunpack.c.l.b16 %v97
    %v125 = vpack.c.b16 %v120, %v119
    %v126 = vpack.c.b16 %v122, %v121
    %v127 = vpack.c.b16 %v124, %v123
    %vm131 = vcmask 392192
    %v133 = vsel %vm131, %v110, 0
    %v136 = vsel %vm131, %v111, 0
    %v139 = vsel %vm131, %v112, 0
    %141 = vmatprep.subr.bf16.mxu0 0
    %142 = vmatpush1.bf16.msra.mxu0 %v125
    %143 = vmatprep.subr.bf16.mxu0 0
    %144 = vmatpush1.bf16.msra.mxu0 %v126
    %145 = vmatprep.subr.bf16.mxu0 0
    %146 = vmatpush1.bf16.msra.mxu0 %v127
    %147 = vmatprep.subr.bf16.mxu0 0
    %148 = vmatpush1.bf16.msra.mxu0 0
    %149 = vmatprep.subr.bf16.mxu0 0
    %150 = vmatpush1.bf16.msra.mxu0 0
    %151 = vmatprep.subr.bf16.mxu0 0
    %152 = vmatpush1.bf16.msra.mxu0 0
    %153 = vmatprep.subr.bf16.mxu0 0
    %154 = vmatpush1.bf16.msra.mxu0 0
    %155 = vmatprep.subr.bf16.mxu0 0
    %156 = vmatpush1.bf16.msra.mxu0 0
    %157 = vmatprep.subr.bf16.mxu0 0
    %158 = vmatpush1.bf16.msra.mxu0 0
    %159 = vmatprep.subr.bf16.mxu0 0
    %160 = vmatpush1.bf16.msra.mxu0 0
    %161 = vmatprep.subr.bf16.mxu0 0
    %162 = vmatpush1.bf16.msra.mxu0 0
    %163 = vmatprep.subr.bf16.mxu0 0
    %164 = vmatpush1.bf16.msra.mxu0 0
    %165 = vmatprep.subr.bf16.mxu0 0
    %166 = vmatpush1.bf16.msra.mxu0 0
    %167 = vmatprep.subr.bf16.mxu0 0
    %168 = vmatpush1.bf16.msra.mxu0 0
    %169 = vmatprep.subr.bf16.mxu0 0
    %170 = vmatpush1.bf16.msra.mxu0 0
    %171 = vmatprep.subr.bf16.mxu0 0
    %172 = vmatpush1.bf16.msra.mxu0 0
    %173 = vmatprep.mubr.bf16.mxu0 0
    %174 = vmatmul.mubr.bf16.gmra.mrb[0].mxu0 %v133
    %v175 = vpop.f32.mrb[0].mxu0
    %v176 = vadd.f32 %v83, %v175
    %v177 = vpop.f32.mrb[0].mxu0
    %v178 = vpop.f32.mrb[0].mxu0
    %v179 = vadd.f32 %v84, %v178
    %v180 = vpop.f32.mrb[0].mxu0
    %181 = vmatprep.mubr.bf16.mxu0 0
    %182 = vmatmul.mubr.bf16.gmra.mrb[0].mxu0 %v136
    %v183 = vpop.f32.mrb[0].mxu0
    %v184 = vadd.f32 %v85, %v183
    %v185 = vpop.f32.mrb[0].mxu0
    %v186 = vpop.f32.mrb[0].mxu0
    %v187 = vadd.f32 %v83, %v186
    %v188 = vpop.f32.mrb[0].mxu0
    %189 = vmatprep.mubr.bf16.mxu0 0
    %190 = vmatmul.mubr.bf16.gmra.mrb[0].mxu0 %v139
    %v191 = vpop.f32.mrb[0].mxu0
    %v192 = vadd.f32 %v84, %v191
    %v193 = vpop.f32.mrb[0].mxu0
    %v194 = vpop.f32.mrb[0].mxu0
    %v195 = vadd.f32 %v85, %v194
    %v196 = vpop.f32.mrb[0].mxu0
    %197 = vdwg.mxu0
    %v198 = vld [vmem:[%s7] sm:$0x3f]
    %vm199 = vcmask 261120
    %v200 = vsel %vm199, %v176, 0.0
    %201 = vadd.xlane.f32.xlu0 %v200
    %v202 = vpop.xlane.xlu0 %201
    %v203 = vsel %vm199, %v179, 0.0
    %204 = vadd.xlane.f32.xlu0 %v203
    %v205 = vpop.xlane.xlu0 %204
    %v206 = vsel %vm199, %v184, 0.0
    %207 = vadd.xlane.f32.xlu0 %v206
    %v208 = vpop.xlane.xlu0 %207
    %v209 = vsel %vm199, %v187, 0.0
    %210 = vadd.xlane.f32.xlu0 %v209
    %v211 = vpop.xlane.xlu0 %210
    %v212 = vsel %vm199, %v192, 0.0
    %213 = vadd.xlane.f32.xlu0 %v212
    %v214 = vpop.xlane.xlu0 %213
    %v215 = vsel %vm199, %v195, 0.0
    %216 = vadd.xlane.f32.xlu0 %v215
    %v217 = vpop.xlane.xlu0 %216
    %v218 = vrcp.pop 32.0
    %v219 = vmul.f32 %v202, %v218
    %v220 = vmul.f32 %v205, %v218
    %v221 = vmul.f32 %v208, %v218
    %v222 = vmul.f32 %v211, %v218
    %v223 = vmul.f32 %v214, %v218
    %v224 = vmul.f32 %v217, %v218
    %v225 = vsub.f32 %v176, %v219
    %v226 = vsub.f32 %v179, %v220
    %v227 = vsub.f32 %v184, %v221
    %v228 = vsub.f32 %v187, %v222
    %v229 = vsub.f32 %v192, %v223
    %v230 = vsub.f32 %v195, %v224
    %v231 = vmul.f32 %v225, %v225
    %v232 = vmul.f32 %v226, %v226
    %v233 = vmul.f32 %v227, %v227
    %v234 = vmul.f32 %v228, %v228
    %v235 = vmul.f32 %v229, %v229
    %v236 = vmul.f32 %v230, %v230
    %v237 = vsel %vm199, %v231, 0.0
    %238 = vadd.xlane.f32.xlu0 %v237
    %v239 = vpop.xlane.xlu0 %238
    %v240 = vsel %vm199, %v232, 0.0
    %241 = vadd.xlane.f32.xlu0 %v240
    %v242 = vpop.xlane.xlu0 %241
    %v243 = vsel %vm199, %v233, 0.0
    %244 = vadd.xlane.f32.xlu0 %v243
    %v245 = vpop.xlane.xlu0 %244
    %v246 = vsel %vm199, %v234, 0.0
    %247 = vadd.xlane.f32.xlu0 %v246
    %v248 = vpop.xlane.xlu0 %247
    %v249 = vsel %vm199, %v235, 0.0
    %250 = vadd.xlane.f32.xlu0 %v249
    %v251 = vpop.xlane.xlu0 %250
    %v252 = vsel %vm199, %v236, 0.0
    %253 = vadd.xlane.f32.xlu0 %v252
    %v254 = vpop.xlane.xlu0 %253
    %v255 = vmul.f32 %v239, %v218
    %v256 = vmul.f32 %v242, %v218
    %v257 = vmul.f32 %v245, %v218
    %v258 = vmul.f32 %v248, %v218
    %v259 = vmul.f32 %v251, %v218
    %v260 = vmul.f32 %v254, %v218
    %v261 = vadd.f32 %v255, 1e-06
    %v262 = vadd.f32 %v256, 1e-06
    %v263 = vadd.f32 %v257, 1e-06
    %v264 = vadd.f32 %v258, 1e-06
    %v265 = vadd.f32 %v259, 1e-06
    %v266 = vadd.f32 %v260, 1e-06
    %v267 = vrsqrt.pop %v261
    %v268 = vrsqrt.pop %v262
    %v269 = vrsqrt.pop %v263
    %v270 = vrsqrt.pop %v264
    %v271 = vrsqrt.pop %v265
    %v272 = vrsqrt.pop %v266
    %v273 = vmul.f32 %v225, %v267
    %v274 = vmul.f32 %v226, %v268
    %v275 = vmul.f32 %v227, %v269
    %v276 = vmul.f32 %v228, %v270
    %v277 = vmul.f32 %v229, %v271
    %v278 = vmul.f32 %v230, %v272
    %v279 = vlaneseq
    %v280 = vshrl.u32 %v279, 7
    %v281 = vsub.s32 0, %v280
    %v282 = vrot.slane %v198, %v281
    %v283 = vmul.f32 %v273, %v282
    %v284 = vmul.f32 %v274, %v282
    %v285 = vmul.f32 %v275, %v282
    %v286 = vmul.f32 %v276, %v282
    %v287 = vmul.f32 %v277, %v282
    %v288 = vmul.f32 %v278, %v282
    %v289 = vlaneseq
    %v290 = vshrl.u32 %v289, 7
    %v291 = vsub.s32 1, %v290
    %v292 = vrot.slane %v198, %v291
    %v293 = vadd.f32 %v283, %v292
    %v294 = vadd.f32 %v284, %v292
    %v295 = vadd.f32 %v285, %v292
    %v296 = vadd.f32 %v286, %v292
    %v297 = vadd.f32 %v287, %v292
    %v298 = vadd.f32 %v288, %v292
    %v299 = vpack.c.bf16 %v294, %v293
    %v300 = vpack.c.bf16 %v296, %v295
    %v301 = vpack.c.bf16 %v298, %v297
    %v302 = vld [vmem:[%s4] sm:$0xf]
    %v303 = vld [vmem:[%s4 + $0x4] sm:$0xf]
    %v304 = vld [vmem:[%s4 + $0x8] sm:$0xf]
    %v305 = vld [vmem:[%s4 + $0xc] sm:$0xf]
    %v306 = vld [vmem:[%s5] sm:$0x1]
    %v308 = vlaneseq
    %v309 = vshrl.u32 %v308, 7
    %v310 = vsub.s32 0, %v309
    %v311 = vrot.slane %v306, %v310
    %v317 = vunpack.c.l.b16 %v302
    %v318 = vunpack.c.l.b16 %v303
    %v319 = vunpack.c.l.b16 %v304
    %v320 = vunpack.c.l.b16 %v305
    %v321 = vpack.c.b16 %v318, %v317
    %v322 = vpack.c.b16 %v320, %v319
    %v326 = vsel %vm199, %v299, 0
    %v329 = vsel %vm199, %v300, 0
    %v332 = vsel %vm199, %v301, 0
    %334 = vmatprep.subr.bf16.mxu0 0
    %335 = vmatpush1.bf16.msra.mxu0 %v321
    %336 = vmatprep.subr.bf16.mxu0 0
    %337 = vmatpush1.bf16.msra.mxu0 %v322
    %338 = vmatprep.subr.bf16.mxu0 0
    %339 = vmatpush1.bf16.msra.mxu0 0
    %340 = vmatprep.subr.bf16.mxu0 0
    %341 = vmatpush1.bf16.msra.mxu0 0
    %342 = vmatprep.subr.bf16.mxu0 0
    %343 = vmatpush1.bf16.msra.mxu0 0
    %344 = vmatprep.subr.bf16.mxu0 0
    %345 = vmatpush1.bf16.msra.mxu0 0
    %346 = vmatprep.subr.bf16.mxu0 0
    %347 = vmatpush1.bf16.msra.mxu0 0
    %348 = vmatprep.subr.bf16.mxu0 0
    %349 = vmatpush1.bf16.msra.mxu0 0
    %350 = vmatprep.subr.bf16.mxu0 0
    %351 = vmatpush1.bf16.msra.mxu0 0
    %352 = vmatprep.subr.bf16.mxu0 0
    %353 = vmatpush1.bf16.msra.mxu0 0
    %354 = vmatprep.subr.bf16.mxu0 0
    %355 = vmatpush1.bf16.msra.mxu0 0
    %356 = vmatprep.subr.bf16.mxu0 0
    %357 = vmatpush1.bf16.msra.mxu0 0
    %358 = vmatprep.subr.bf16.mxu0 0
    %359 = vmatpush1.bf16.msra.mxu0 0
    %360 = vmatprep.subr.bf16.mxu0 0
    %361 = vmatpush1.bf16.msra.mxu0 0
    %362 = vmatprep.subr.bf16.mxu0 0
    %363 = vmatpush1.bf16.msra.mxu0 0
    %364 = vmatprep.subr.bf16.mxu0 0
    %365 = vmatpush1.bf16.msra.mxu0 0
    %366 = vmatprep.mubr.bf16.mxu0 0
    %367 = vmatmul.mubr.bf16.gmra.mrb[0].mxu0 %v326
    %v368 = vpop.f32.mrb[0].mxu0
    %v369 = vadd.f32 %v311, %v368
    %v370 = vpop.f32.mrb[0].mxu0
    %v371 = vpop.f32.mrb[0].mxu0
    %v372 = vadd.f32 %v311, %v371
    %v373 = vpop.f32.mrb[0].mxu0
    %374 = vmatprep.mubr.bf16.mxu0 0
    %375 = vmatmul.mubr.bf16.gmra.mrb[0].mxu0 %v329
    %v376 = vpop.f32.mrb[0].mxu0
    %v377 = vadd.f32 %v311, %v376
    %v378 = vpop.f32.mrb[0].mxu0
    %v379 = vpop.f32.mrb[0].mxu0
    %v380 = vadd.f32 %v311, %v379
    %v381 = vpop.f32.mrb[0].mxu0
    %382 = vmatprep.mubr.bf16.mxu0 0
    %383 = vmatmul.mubr.bf16.gmra.mrb[0].mxu0 %v332
    %v384 = vpop.f32.mrb[0].mxu0
    %v385 = vadd.f32 %v311, %v384
    %v386 = vpop.f32.mrb[0].mxu0
    %v387 = vpop.f32.mrb[0].mxu0
    %v388 = vadd.f32 %v311, %v387
    %v389 = vpop.f32.mrb[0].mxu0
    %390 = vdwg.mxu0
    %v391 = vpack.c.bf16 %v372, %v369
    %v392 = vpack.c.bf16 %v380, %v377
    %v393 = vpack.c.bf16 %v388, %v385
    %v394 = vsel %vm67, 1, 0
    %vm395 = vcmp.eq.s32.totalorder %v394, 1
    %vm396 = vmpackc.low %vm395, %vm395
    %v397 = vsel %vm396, 65537, 0
    %v398 = vlaneseq
    %v399 = vshrl.u32 %v398, 7
    %v400 = vsub.s32 0, %v399
    %v401 = vrot.slane %v397, %v400
    %vm402 = vcmp.ne.s16.totalorder %v401, 0
    %v403 = vsel %vm402, %v391, 0
    %v404 = vsel %vm402, %v392, 0
    %v405 = vsel %vm402, %v393, 0
    %409 = vrot.lane.b32.xlu0 %v391, 96
    %v410 = vpop.permute.xlu0 %409
    %411 = vrot.lane.b32.xlu0 %v392, 96
    %v412 = vpop.permute.xlu0 %411
    %413 = vrot.lane.b32.xlu0 %v393, 96
    %v414 = vpop.permute.xlu0 %413
    %v416 = vsel %vm199, %v403, 0
    %v419 = vsel %vm199, %v404, 0
    %v422 = vsel %vm199, %v405, 0
    %v425 = vsel %vm199, %v410, 0
    %v428 = vsel %vm199, %v412, 0
    %v431 = vsel %vm199, %v414, 0
    %433 = vmatprep.subr.bf16.mxu0 0
    %434 = vmatpush1.bf16.xpose.msra.mxu0 %v425
    %435 = vmatprep.subr.bf16.mxu0 0
    %436 = vmatpush1.bf16.xpose.msra.mxu0 %v428
    %437 = vmatprep.subr.bf16.mxu0 0
    %438 = vmatpush1.bf16.xpose.msra.mxu0 %v431
    %439 = vmatprep.subr.bf16.mxu0 0
    %440 = vmatpush1.bf16.xpose.msra.mxu0 0
    %441 = vmatprep.subr.bf16.mxu0 0
    %442 = vmatpush1.bf16.xpose.msra.mxu0 0
    %443 = vmatprep.subr.bf16.mxu0 0
    %444 = vmatpush1.bf16.xpose.msra.mxu0 0
    %445 = vmatprep.subr.bf16.mxu0 0
    %446 = vmatpush1.bf16.xpose.msra.mxu0 0
    %447 = vmatprep.subr.bf16.mxu0 0
    %448 = vmatpush1.bf16.xpose.msra.mxu0 0
    %449 = vmatprep.subr.bf16.mxu0 0
    %450 = vmatpush1.bf16.xpose.msra.mxu0 0
    %451 = vmatprep.subr.bf16.mxu0 0
    %452 = vmatpush1.bf16.xpose.msra.mxu0 0
    %453 = vmatprep.subr.bf16.mxu0 0
    %454 = vmatpush1.bf16.xpose.msra.mxu0 0
    %455 = vmatprep.subr.bf16.mxu0 0
    %456 = vmatpush1.bf16.xpose.msra.mxu0 0
    %457 = vmatprep.subr.bf16.mxu0 0
    %458 = vmatpush1.bf16.xpose.msra.mxu0 0
    %459 = vmatprep.subr.bf16.mxu0 0
    %460 = vmatpush1.bf16.xpose.msra.mxu0 0
    %461 = vmatprep.subr.bf16.mxu0 0
    %462 = vmatpush1.bf16.xpose.msra.mxu0 0
    %463 = vmatprep.subr.bf16.mxu0 0
    %464 = vmatpush1.bf16.xpose.msra.mxu0 0
    %465 = vmatprep.mubr.bf16.mxu0 0
    %466 = vmatmul.mubr.bf16.gmra.mrb[0].mxu0 %v416
    %v467 = vpop.f32.mrb[0].mxu0
    %v468 = vadd.f32 %v77, %v467
    %v469 = vpop.f32.mrb[0].mxu0
    %v470 = vpop.f32.mrb[0].mxu0
    %v471 = vadd.f32 %v78, %v470
    %v472 = vpop.f32.mrb[0].mxu0
    %473 = vmatprep.mubr.bf16.mxu0 0
    %474 = vmatmul.mubr.bf16.gmra.mrb[0].mxu0 %v419
    %v475 = vpop.f32.mrb[0].mxu0
    %v476 = vadd.f32 %v79, %v475
    %v477 = vpop.f32.mrb[0].mxu0
    %v478 = vpop.f32.mrb[0].mxu0
    %v479 = vadd.f32 %v80, %v478
    %v480 = vpop.f32.mrb[0].mxu0
    %481 = vmatprep.mubr.bf16.mxu0 0
    %482 = vmatmul.mubr.bf16.gmra.mrb[0].mxu0 %v422
    %v483 = vpop.f32.mrb[0].mxu0
    %v484 = vadd.f32 %v81, %v483
    %v485 = vpop.f32.mrb[0].mxu0
    %v486 = vpop.f32.mrb[0].mxu0
    %v487 = vadd.f32 %v82, %v486
    %v488 = vpop.f32.mrb[0].mxu0
    %489 = vdwg.mxu0
    %v490 = vsel %vm131, %v468, -inf
    %491 = vmax.xlane.f32.xlu0 %v490
    %v492 = vpop.xlane.xlu0 %491
    %v493 = vsel %vm131, %v471, -inf
    %494 = vmax.xlane.f32.xlu0 %v493
    %v495 = vpop.xlane.xlu0 %494
    %v496 = vsel %vm131, %v476, -inf
    %497 = vmax.xlane.f32.xlu0 %v496
    %v498 = vpop.xlane.xlu0 %497
    %v499 = vsel %vm131, %v479, -inf
    %500 = vmax.xlane.f32.xlu0 %v499
    %v501 = vpop.xlane.xlu0 %500
    %v502 = vsel %vm131, %v484, -inf
    %503 = vmax.xlane.f32.xlu0 %v502
    %v504 = vpop.xlane.xlu0 %503
    %v505 = vsel %vm131, %v487, -inf
    %506 = vmax.xlane.f32.xlu0 %v505
    %v507 = vpop.xlane.xlu0 %506
    %v508 = vsub.f32 %v468, %v492
    %v509 = vsub.f32 %v471, %v495
    %v510 = vsub.f32 %v476, %v498
    %v511 = vsub.f32 %v479, %v501
    %v512 = vsub.f32 %v484, %v504
    %v513 = vsub.f32 %v487, %v507
    %v514 = vmul.f32 %v508, 1.442695
    %v515 = vpow.pop %v514
    %v516 = vmul.f32 %v509, 1.442695
    %v517 = vpow.pop %v516
    %v518 = vmul.f32 %v510, 1.442695
    %v519 = vpow.pop %v518
    %v520 = vmul.f32 %v511, 1.442695
    %v521 = vpow.pop %v520
    %v522 = vmul.f32 %v512, 1.442695
    %v523 = vpow.pop %v522
    %v524 = vmul.f32 %v513, 1.442695
    %v525 = vpow.pop %v524
    %v526 = vsel %vm131, %v515, 0.0
    %527 = vadd.xlane.f32.xlu0 %v526
    %v528 = vpop.xlane.xlu0 %527
    %v529 = vsel %vm131, %v517, 0.0
    %530 = vadd.xlane.f32.xlu0 %v529
    %v531 = vpop.xlane.xlu0 %530
    %v532 = vsel %vm131, %v519, 0.0
    %533 = vadd.xlane.f32.xlu0 %v532
    %v534 = vpop.xlane.xlu0 %533
    %v535 = vsel %vm131, %v521, 0.0
    %536 = vadd.xlane.f32.xlu0 %v535
    %v537 = vpop.xlane.xlu0 %536
    %v538 = vsel %vm131, %v523, 0.0
    %539 = vadd.xlane.f32.xlu0 %v538
    %v540 = vpop.xlane.xlu0 %539
    %v541 = vsel %vm131, %v525, 0.0
    %542 = vadd.xlane.f32.xlu0 %v541
    %v543 = vpop.xlane.xlu0 %542
    %v544 = vrcp.pop %v528
    %v545 = vrcp.pop %v531
    %v546 = vrcp.pop %v534
    %v547 = vrcp.pop %v537
    %v548 = vrcp.pop %v540
    %v549 = vrcp.pop %v543
    %v550 = vmul.f32 %v515, %v544
    %v551 = vmul.f32 %v517, %v545
    %v552 = vmul.f32 %v519, %v546
    %v553 = vmul.f32 %v521, %v547
    %v554 = vmul.f32 %v523, %v548
    %v555 = vmul.f32 %v525, %v549
    %556 = vrot.lane.b32.xlu0 %v401, 64
    %v557 = vpop.permute.xlu0 %556
    %vm558 = vcmp.ne.s16.totalorder %v557, 0
    %v559 = vsel %vm558, %v391, 0
    %v560 = vsel %vm558, %v392, 0
    %v561 = vsel %vm558, %v393, 0
    %v562 = vpack.c.bf16 %v551, %v550
    %v563 = vpack.c.bf16 %v553, %v552
    %v564 = vpack.c.bf16 %v555, %v554
    %v565 = vsel %vm70, 1, 0
    %vm566 = vcmp.eq.s32.totalorder %v565, 1
    %vm567 = vmpackc.low %vm566, %vm566
    %v568 = vsel %vm567, 65537, 0
    %v569 = vlaneseq
    %v570 = vshrl.u32 %v569, 7
    %v571 = vsub.s32 0, %v570
    %v572 = vrot.slane %v568, %v571
    %vm573 = vcmp.ne.s16.totalorder %v572, 0
    %v574 = vsel %vm573, %v391, 0
    %v575 = vsel %vm573, %v392, 0
    %v576 = vsel %vm573, %v393, 0
    %v578 = vsel %vm199, %v574, 0
    %v581 = vsel %vm199, %v575, 0
    %v584 = vsel %vm199, %v576, 0
    %586 = vmatprep.subr.bf16.mxu0 0
    %587 = vmatpush1.bf16.xpose.msra.mxu0 %v425
    %588 = vmatprep.subr.bf16.mxu0 0
    %589 = vmatpush1.bf16.xpose.msra.mxu0 %v428
    %590 = vmatprep.subr.bf16.mxu0 0
    %591 = vmatpush1.bf16.xpose.msra.mxu0 %v431
    %592 = vmatprep.subr.bf16.mxu0 0
    %593 = vmatpush1.bf16.xpose.msra.mxu0 0
    %594 = vmatprep.subr.bf16.mxu0 0
    %595 = vmatpush1.bf16.xpose.msra.mxu0 0
    %596 = vmatprep.subr.bf16.mxu0 0
    %597 = vmatpush1.bf16.xpose.msra.mxu0 0
    %598 = vmatprep.subr.bf16.mxu0 0
    %599 = vmatpush1.bf16.xpose.msra.mxu0 0
    %600 = vmatprep.subr.bf16.mxu0 0
    %601 = vmatpush1.bf16.xpose.msra.mxu0 0
    %602 = vmatprep.subr.bf16.mxu0 0
    %603 = vmatpush1.bf16.xpose.msra.mxu0 0
    %604 = vmatprep.subr.bf16.mxu0 0
    %605 = vmatpush1.bf16.xpose.msra.mxu0 0
    %606 = vmatprep.subr.bf16.mxu0 0
    %607 = vmatpush1.bf16.xpose.msra.mxu0 0
    %608 = vmatprep.subr.bf16.mxu0 0
    %609 = vmatpush1.bf16.xpose.msra.mxu0 0
    %610 = vmatprep.subr.bf16.mxu0 0
    %611 = vmatpush1.bf16.xpose.msra.mxu0 0
    %612 = vmatprep.subr.bf16.mxu0 0
    %613 = vmatpush1.bf16.xpose.msra.mxu0 0
    %614 = vmatprep.subr.bf16.mxu0 0
    %615 = vmatpush1.bf16.xpose.msra.mxu0 0
    %616 = vmatprep.subr.bf16.mxu0 0
    %617 = vmatpush1.bf16.xpose.msra.mxu0 0
    %618 = vmatprep.mubr.bf16.mxu0 0
    %619 = vmatmul.mubr.bf16.gmra.mrb[0].mxu0 %v578
    %v620 = vpop.f32.mrb[0].mxu0
    %v621 = vadd.f32 %v77, %v620
    %v622 = vpop.f32.mrb[0].mxu0
    %v623 = vpop.f32.mrb[0].mxu0
    %v624 = vadd.f32 %v78, %v623
    %v625 = vpop.f32.mrb[0].mxu0
    %626 = vmatprep.mubr.bf16.mxu0 0
    %627 = vmatmul.mubr.bf16.gmra.mrb[0].mxu0 %v581
    %v628 = vpop.f32.mrb[0].mxu0
    %v629 = vadd.f32 %v79, %v628
    %v630 = vpop.f32.mrb[0].mxu0
    %v631 = vpop.f32.mrb[0].mxu0
    %v632 = vadd.f32 %v80, %v631
    %v633 = vpop.f32.mrb[0].mxu0
    %634 = vmatprep.mubr.bf16.mxu0 0
    %635 = vmatmul.mubr.bf16.gmra.mrb[0].mxu0 %v584
    %v636 = vpop.f32.mrb[0].mxu0
    %v637 = vadd.f32 %v81, %v636
    %v638 = vpop.f32.mrb[0].mxu0
    %v639 = vpop.f32.mrb[0].mxu0
    %v640 = vadd.f32 %v82, %v639
    %v641 = vpop.f32.mrb[0].mxu0
    %642 = vdwg.mxu0
    %v643 = vsel %vm131, %v621, -inf
    %644 = vmax.xlane.f32.xlu0 %v643
    %v645 = vpop.xlane.xlu0 %644
    %v646 = vsel %vm131, %v624, -inf
    %647 = vmax.xlane.f32.xlu0 %v646
    %v648 = vpop.xlane.xlu0 %647
    %v649 = vsel %vm131, %v629, -inf
    %650 = vmax.xlane.f32.xlu0 %v649
    %v651 = vpop.xlane.xlu0 %650
    %v652 = vsel %vm131, %v632, -inf
    %653 = vmax.xlane.f32.xlu0 %v652
    %v654 = vpop.xlane.xlu0 %653
    %v655 = vsel %vm131, %v637, -inf
    %656 = vmax.xlane.f32.xlu0 %v655
    %v657 = vpop.xlane.xlu0 %656
    %v658 = vsel %vm131, %v640, -inf
    %659 = vmax.xlane.f32.xlu0 %v658
    %v660 = vpop.xlane.xlu0 %659
    %v661 = vsub.f32 %v621, %v645
    %v662 = vsub.f32 %v624, %v648
    %v663 = vsub.f32 %v629, %v651
    %v664 = vsub.f32 %v632, %v654
    %v665 = vsub.f32 %v637, %v657
    %v666 = vsub.f32 %v640, %v660
    %v667 = vmul.f32 %v661, 1.442695
    %v668 = vpow.pop %v667
    %v669 = vmul.f32 %v662, 1.442695
    %v670 = vpow.pop %v669
    %v671 = vmul.f32 %v663, 1.442695
    %v672 = vpow.pop %v671
    %v673 = vmul.f32 %v664, 1.442695
    %v674 = vpow.pop %v673
    %v675 = vmul.f32 %v665, 1.442695
    %v676 = vpow.pop %v675
    %v677 = vmul.f32 %v666, 1.442695
    %v678 = vpow.pop %v677
    %v679 = vsel %vm131, %v668, 0.0
    %680 = vadd.xlane.f32.xlu0 %v679
    %v681 = vpop.xlane.xlu0 %680
    %v682 = vsel %vm131, %v670, 0.0
    %683 = vadd.xlane.f32.xlu0 %v682
    %v684 = vpop.xlane.xlu0 %683
    %v685 = vsel %vm131, %v672, 0.0
    %686 = vadd.xlane.f32.xlu0 %v685
    %v687 = vpop.xlane.xlu0 %686
    %v688 = vsel %vm131, %v674, 0.0
    %689 = vadd.xlane.f32.xlu0 %v688
    %v690 = vpop.xlane.xlu0 %689
    %v691 = vsel %vm131, %v676, 0.0
    %692 = vadd.xlane.f32.xlu0 %v691
    %v693 = vpop.xlane.xlu0 %692
    %v694 = vsel %vm131, %v678, 0.0
    %695 = vadd.xlane.f32.xlu0 %v694
    %v696 = vpop.xlane.xlu0 %695
    %v697 = vrcp.pop %v681
    %v698 = vrcp.pop %v684
    %v699 = vrcp.pop %v687
    %v700 = vrcp.pop %v690
    %v701 = vrcp.pop %v693
    %v702 = vrcp.pop %v696
    %v703 = vmul.f32 %v668, %v697
    %v704 = vmul.f32 %v670, %v698
    %v705 = vmul.f32 %v672, %v699
    %v706 = vmul.f32 %v674, %v700
    %v707 = vmul.f32 %v676, %v701
    %v708 = vmul.f32 %v678, %v702
    %709 = vrot.lane.b32.xlu0 %v572, 64
    %v710 = vpop.permute.xlu0 %709
    %vm711 = vcmp.ne.s16.totalorder %v710, 0
    %v712 = vsel %vm711, %v391, 0
    %v713 = vsel %vm711, %v392, 0
    %v714 = vsel %vm711, %v393, 0
    %v715 = vpack.c.bf16 %v704, %v703
    %v716 = vpack.c.bf16 %v706, %v705
    %v717 = vpack.c.bf16 %v708, %v707
    %721 = vrot.lane.b32.xlu0 %v712, 64
    %v722 = vpop.permute.xlu0 %721
    %723 = vrot.lane.b32.xlu0 %v713, 64
    %v724 = vpop.permute.xlu0 %723
    %725 = vrot.lane.b32.xlu0 %v714, 64
    %v726 = vpop.permute.xlu0 %725
    %v731 = vsel %vm131, %v715, 0
    %v734 = vsel %vm131, %v716, 0
    %v737 = vsel %vm131, %v717, 0
    %739 = vmatprep.subr.bf16.mxu0 0
    %740 = vmatpush1.bf16.msra.mxu0 %v722
    %741 = vmatprep.subr.bf16.mxu0 0
    %742 = vmatpush1.bf16.msra.mxu0 %v724
    %743 = vmatprep.subr.bf16.mxu0 0
    %744 = vmatpush1.bf16.msra.mxu0 %v726
    %745 = vmatprep.subr.bf16.mxu0 0
    %746 = vmatpush1.bf16.msra.mxu0 0
    %747 = vmatprep.subr.bf16.mxu0 0
    %748 = vmatpush1.bf16.msra.mxu0 0
    %749 = vmatprep.subr.bf16.mxu0 0
    %750 = vmatpush1.bf16.msra.mxu0 0
    %751 = vmatprep.subr.bf16.mxu0 0
    %752 = vmatpush1.bf16.msra.mxu0 0
    %753 = vmatprep.subr.bf16.mxu0 0
    %754 = vmatpush1.bf16.msra.mxu0 0
    %755 = vmatprep.subr.bf16.mxu0 0
    %756 = vmatpush1.bf16.msra.mxu0 0
    %757 = vmatprep.subr.bf16.mxu0 0
    %758 = vmatpush1.bf16.msra.mxu0 0
    %759 = vmatprep.subr.bf16.mxu0 0
    %760 = vmatpush1.bf16.msra.mxu0 0
    %761 = vmatprep.subr.bf16.mxu0 0
    %762 = vmatpush1.bf16.msra.mxu0 0
    %763 = vmatprep.subr.bf16.mxu0 0
    %764 = vmatpush1.bf16.msra.mxu0 0
    %765 = vmatprep.subr.bf16.mxu0 0
    %766 = vmatpush1.bf16.msra.mxu0 0
    %767 = vmatprep.subr.bf16.mxu0 0
    %768 = vmatpush1.bf16.msra.mxu0 0
    %769 = vmatprep.subr.bf16.mxu0 0
    %770 = vmatpush1.bf16.msra.mxu0 0
    %771 = vmatprep.mubr.bf16.mxu0 0
    %772 = vmatmul.mubr.bf16.gmra.mrb[0].mxu0 %v731
    %v773 = vpop.f32.mrb[0].mxu0
    %v774 = vadd.f32 0.0, %v773
    %v775 = vpop.f32.mrb[0].mxu0
    %v776 = vpop.f32.mrb[0].mxu0
    %v777 = vadd.f32 0.0, %v776
    %v778 = vpop.f32.mrb[0].mxu0
    %779 = vmatprep.mubr.bf16.mxu0 0
    %780 = vmatmul.mubr.bf16.gmra.mrb[0].mxu0 %v734
    %v781 = vpop.f32.mrb[0].mxu0
    %v782 = vadd.f32 0.0, %v781
    %v783 = vpop.f32.mrb[0].mxu0
    %v784 = vpop.f32.mrb[0].mxu0
    %v785 = vadd.f32 0.0, %v784
    %v786 = vpop.f32.mrb[0].mxu0
    %787 = vmatprep.mubr.bf16.mxu0 0
    %788 = vmatmul.mubr.bf16.gmra.mrb[0].mxu0 %v737
    %v789 = vpop.f32.mrb[0].mxu0
    %v790 = vadd.f32 0.0, %v789
    %v791 = vpop.f32.mrb[0].mxu0
    %v792 = vpop.f32.mrb[0].mxu0
    %v793 = vadd.f32 0.0, %v792
    %v794 = vpop.f32.mrb[0].mxu0
    %795 = vdwg.mxu0
    %799 = vrot.lane.b32.xlu0 %v559, 64
    %v800 = vpop.permute.xlu0 %799
    %801 = vrot.lane.b32.xlu0 %v560, 64
    %v802 = vpop.permute.xlu0 %801
    %803 = vrot.lane.b32.xlu0 %v561, 64
    %v804 = vpop.permute.xlu0 %803
    %v809 = vsel %vm131, %v562, 0
    %v812 = vsel %vm131, %v563, 0
    %v815 = vsel %vm131, %v564, 0
    %817 = vmatprep.subr.bf16.mxu0 0
    %818 = vmatpush1.bf16.msra.mxu0 %v800
    %819 = vmatprep.subr.bf16.mxu0 0
    %820 = vmatpush1.bf16.msra.mxu0 %v802
    %821 = vmatprep.subr.bf16.mxu0 0
    %822 = vmatpush1.bf16.msra.mxu0 %v804
    %823 = vmatprep.subr.bf16.mxu0 0
    %824 = vmatpush1.bf16.msra.mxu0 0
    %825 = vmatprep.subr.bf16.mxu0 0
    %826 = vmatpush1.bf16.msra.mxu0 0
    %827 = vmatprep.subr.bf16.mxu0 0
    %828 = vmatpush1.bf16.msra.mxu0 0
    %829 = vmatprep.subr.bf16.mxu0 0
    %830 = vmatpush1.bf16.msra.mxu0 0
    %831 = vmatprep.subr.bf16.mxu0 0
    %832 = vmatpush1.bf16.msra.mxu0 0
    %833 = vmatprep.subr.bf16.mxu0 0
    %834 = vmatpush1.bf16.msra.mxu0 0
    %835 = vmatprep.subr.bf16.mxu0 0
    %836 = vmatpush1.bf16.msra.mxu0 0
    %837 = vmatprep.subr.bf16.mxu0 0
    %838 = vmatpush1.bf16.msra.mxu0 0
    %839 = vmatprep.subr.bf16.mxu0 0
    %840 = vmatpush1.bf16.msra.mxu0 0
    %841 = vmatprep.subr.bf16.mxu0 0
    %842 = vmatpush1.bf16.msra.mxu0 0
    %843 = vmatprep.subr.bf16.mxu0 0
    %844 = vmatpush1.bf16.msra.mxu0 0
    %845 = vmatprep.subr.bf16.mxu0 0
    %846 = vmatpush1.bf16.msra.mxu0 0
    %847 = vmatprep.subr.bf16.mxu0 0
    %848 = vmatpush1.bf16.msra.mxu0 0
    %849 = vmatprep.mubr.bf16.mxu0 0
    %850 = vmatmul.mubr.bf16.gmra.mrb[0].mxu0 %v809
    %v851 = vpop.f32.mrb[0].mxu0
    %v852 = vadd.f32 %v774, %v851
    %v853 = vpop.f32.mrb[0].mxu0
    %v854 = vpop.f32.mrb[0].mxu0
    %v855 = vadd.f32 %v777, %v854
    %v856 = vpop.f32.mrb[0].mxu0
    %857 = vmatprep.mubr.bf16.mxu0 0
    %858 = vmatmul.mubr.bf16.gmra.mrb[0].mxu0 %v812
    %v859 = vpop.f32.mrb[0].mxu0
    %v860 = vadd.f32 %v782, %v859
    %v861 = vpop.f32.mrb[0].mxu0
    %v862 = vpop.f32.mrb[0].mxu0
    %v863 = vadd.f32 %v785, %v862
    %v864 = vpop.f32.mrb[0].mxu0
    %865 = vmatprep.mubr.bf16.mxu0 0
    %866 = vmatmul.mubr.bf16.gmra.mrb[0].mxu0 %v815
    %v867 = vpop.f32.mrb[0].mxu0
    %v868 = vadd.f32 %v790, %v867
    %v869 = vpop.f32.mrb[0].mxu0
    %v870 = vpop.f32.mrb[0].mxu0
    %v871 = vadd.f32 %v793, %v870
    %v872 = vpop.f32.mrb[0].mxu0
    %873 = vdwg.mxu0
    %v874 = vsel %vm73, 1, 0
    %vm875 = vcmp.eq.s32.totalorder %v874, 1
    %vm876 = vmpackc.low %vm875, %vm875
    %v877 = vsel %vm876, 65537, 0
    %v878 = vlaneseq
    %v879 = vshrl.u32 %v878, 7
    %v880 = vsub.s32 0, %v879
    %v881 = vrot.slane %v877, %v880
    %vm882 = vcmp.ne.s16.totalorder %v881, 0
    %v883 = vsel %vm882, %v391, 0
    %v884 = vsel %vm882, %v392, 0
    %v885 = vsel %vm882, %v393, 0
    %v887 = vsel %vm199, %v883, 0
    %v890 = vsel %vm199, %v884, 0
    %v893 = vsel %vm199, %v885, 0
    %895 = vmatprep.subr.bf16.mxu0 0
    %896 = vmatpush1.bf16.xpose.msra.mxu0 %v425
    %897 = vmatprep.subr.bf16.mxu0 0
    %898 = vmatpush1.bf16.xpose.msra.mxu0 %v428
    %899 = vmatprep.subr.bf16.mxu0 0
    %900 = vmatpush1.bf16.xpose.msra.mxu0 %v431
    %901 = vmatprep.subr.bf16.mxu0 0
    %902 = vmatpush1.bf16.xpose.msra.mxu0 0
    %903 = vmatprep.subr.bf16.mxu0 0
    %904 = vmatpush1.bf16.xpose.msra.mxu0 0
    %905 = vmatprep.subr.bf16.mxu0 0
    %906 = vmatpush1.bf16.xpose.msra.mxu0 0
    %907 = vmatprep.subr.bf16.mxu0 0
    %908 = vmatpush1.bf16.xpose.msra.mxu0 0
    %909 = vmatprep.subr.bf16.mxu0 0
    %910 = vmatpush1.bf16.xpose.msra.mxu0 0
    %911 = vmatprep.subr.bf16.mxu0 0
    %912 = vmatpush1.bf16.xpose.msra.mxu0 0
    %913 = vmatprep.subr.bf16.mxu0 0
    %914 = vmatpush1.bf16.xpose.msra.mxu0 0
    %915 = vmatprep.subr.bf16.mxu0 0
    %916 = vmatpush1.bf16.xpose.msra.mxu0 0
    %917 = vmatprep.subr.bf16.mxu0 0
    %918 = vmatpush1.bf16.xpose.msra.mxu0 0
    %919 = vmatprep.subr.bf16.mxu0 0
    %920 = vmatpush1.bf16.xpose.msra.mxu0 0
    %921 = vmatprep.subr.bf16.mxu0 0
    %922 = vmatpush1.bf16.xpose.msra.mxu0 0
    %923 = vmatprep.subr.bf16.mxu0 0
    %924 = vmatpush1.bf16.xpose.msra.mxu0 0
    %925 = vmatprep.subr.bf16.mxu0 0
    %926 = vmatpush1.bf16.xpose.msra.mxu0 0
    %927 = vmatprep.mubr.bf16.mxu0 0
    %928 = vmatmul.mubr.bf16.gmra.mrb[0].mxu0 %v887
    %v929 = vpop.f32.mrb[0].mxu0
    %v930 = vadd.f32 %v77, %v929
    %v931 = vpop.f32.mrb[0].mxu0
    %v932 = vpop.f32.mrb[0].mxu0
    %v933 = vadd.f32 %v78, %v932
    %v934 = vpop.f32.mrb[0].mxu0
    %935 = vmatprep.mubr.bf16.mxu0 0
    %936 = vmatmul.mubr.bf16.gmra.mrb[0].mxu0 %v890
    %v937 = vpop.f32.mrb[0].mxu0
    %v938 = vadd.f32 %v79, %v937
    %v939 = vpop.f32.mrb[0].mxu0
    %v940 = vpop.f32.mrb[0].mxu0
    %v941 = vadd.f32 %v80, %v940
    %v942 = vpop.f32.mrb[0].mxu0
    %943 = vmatprep.mubr.bf16.mxu0 0
    %944 = vmatmul.mubr.bf16.gmra.mrb[0].mxu0 %v893
    %v945 = vpop.f32.mrb[0].mxu0
    %v946 = vadd.f32 %v81, %v945
    %v947 = vpop.f32.mrb[0].mxu0
    %v948 = vpop.f32.mrb[0].mxu0
    %v949 = vadd.f32 %v82, %v948
    %v950 = vpop.f32.mrb[0].mxu0
    %951 = vdwg.mxu0
    %v952 = vsel %vm131, %v930, -inf
    %953 = vmax.xlane.f32.xlu0 %v952
    %v954 = vpop.xlane.xlu0 %953
    %v955 = vsel %vm131, %v933, -inf
    %956 = vmax.xlane.f32.xlu0 %v955
    %v957 = vpop.xlane.xlu0 %956
    %v958 = vsel %vm131, %v938, -inf
    %959 = vmax.xlane.f32.xlu0 %v958
    %v960 = vpop.xlane.xlu0 %959
    %v961 = vsel %vm131, %v941, -inf
    %962 = vmax.xlane.f32.xlu0 %v961
    %v963 = vpop.xlane.xlu0 %962
    %v964 = vsel %vm131, %v946, -inf
    %965 = vmax.xlane.f32.xlu0 %v964
    %v966 = vpop.xlane.xlu0 %965
    %v967 = vsel %vm131, %v949, -inf
    %968 = vmax.xlane.f32.xlu0 %v967
    %v969 = vpop.xlane.xlu0 %968
    %v970 = vsub.f32 %v930, %v954
    %v971 = vsub.f32 %v933, %v957
    %v972 = vsub.f32 %v938, %v960
    %v973 = vsub.f32 %v941, %v963
    %v974 = vsub.f32 %v946, %v966
    %v975 = vsub.f32 %v949, %v969
    %v976 = vmul.f32 %v970, 1.442695
    %v977 = vpow.pop %v976
    %v978 = vmul.f32 %v971, 1.442695
    %v979 = vpow.pop %v978
    %v980 = vmul.f32 %v972, 1.442695
    %v981 = vpow.pop %v980
    %v982 = vmul.f32 %v973, 1.442695
    %v983 = vpow.pop %v982
    %v984 = vmul.f32 %v974, 1.442695
    %v985 = vpow.pop %v984
    %v986 = vmul.f32 %v975, 1.442695
    %v987 = vpow.pop %v986
    %v988 = vsel %vm131, %v977, 0.0
    %989 = vadd.xlane.f32.xlu0 %v988
    %v990 = vpop.xlane.xlu0 %989
    %v991 = vsel %vm131, %v979, 0.0
    %992 = vadd.xlane.f32.xlu0 %v991
    %v993 = vpop.xlane.xlu0 %992
    %v994 = vsel %vm131, %v981, 0.0
    %995 = vadd.xlane.f32.xlu0 %v994
    %v996 = vpop.xlane.xlu0 %995
    %v997 = vsel %vm131, %v983, 0.0
    %998 = vadd.xlane.f32.xlu0 %v997
    %v999 = vpop.xlane.xlu0 %998
    %v1000 = vsel %vm131, %v985, 0.0
    %1001 = vadd.xlane.f32.xlu0 %v1000
    %v1002 = vpop.xlane.xlu0 %1001
    %v1003 = vsel %vm131, %v987, 0.0
    %1004 = vadd.xlane.f32.xlu0 %v1003
    %v1005 = vpop.xlane.xlu0 %1004
    %v1006 = vrcp.pop %v990
    %v1007 = vrcp.pop %v993
    %v1008 = vrcp.pop %v996
    %v1009 = vrcp.pop %v999
    %v1010 = vrcp.pop %v1002
    %v1011 = vrcp.pop %v1005
    %v1012 = vmul.f32 %v977, %v1006
    %v1013 = vmul.f32 %v979, %v1007
    %v1014 = vmul.f32 %v981, %v1008
    %v1015 = vmul.f32 %v983, %v1009
    %v1016 = vmul.f32 %v985, %v1010
    %v1017 = vmul.f32 %v987, %v1011
    %1018 = vrot.lane.b32.xlu0 %v881, 64
    %v1019 = vpop.permute.xlu0 %1018
    %vm1020 = vcmp.ne.s16.totalorder %v1019, 0
    %v1021 = vsel %vm1020, %v391, 0
    %v1022 = vsel %vm1020, %v392, 0
    %v1023 = vsel %vm1020, %v393, 0
    %v1024 = vpack.c.bf16 %v1013, %v1012
    %v1025 = vpack.c.bf16 %v1015, %v1014
    %v1026 = vpack.c.bf16 %v1017, %v1016
    %1030 = vrot.lane.b32.xlu0 %v1021, 64
    %v1031 = vpop.permute.xlu0 %1030
    %1032 = vrot.lane.b32.xlu0 %v1022, 64
    %v1033 = vpop.permute.xlu0 %1032
    %1034 = vrot.lane.b32.xlu0 %v1023, 64
    %v1035 = vpop.permute.xlu0 %1034
    %v1040 = vsel %vm131, %v1024, 0
    %v1043 = vsel %vm131, %v1025, 0
    %v1046 = vsel %vm131, %v1026, 0
    %1048 = vmatprep.subr.bf16.mxu0 0
    %1049 = vmatpush1.bf16.msra.mxu0 %v1031
    %1050 = vmatprep.subr.bf16.mxu0 0
    %1051 = vmatpush1.bf16.msra.mxu0 %v1033
    %1052 = vmatprep.subr.bf16.mxu0 0
    %1053 = vmatpush1.bf16.msra.mxu0 %v1035
    %1054 = vmatprep.subr.bf16.mxu0 0
    %1055 = vmatpush1.bf16.msra.mxu0 0
    %1056 = vmatprep.subr.bf16.mxu0 0
    %1057 = vmatpush1.bf16.msra.mxu0 0
    %1058 = vmatprep.subr.bf16.mxu0 0
    %1059 = vmatpush1.bf16.msra.mxu0 0
    %1060 = vmatprep.subr.bf16.mxu0 0
    %1061 = vmatpush1.bf16.msra.mxu0 0
    %1062 = vmatprep.subr.bf16.mxu0 0
    %1063 = vmatpush1.bf16.msra.mxu0 0
    %1064 = vmatprep.subr.bf16.mxu0 0
    %1065 = vmatpush1.bf16.msra.mxu0 0
    %1066 = vmatprep.subr.bf16.mxu0 0
    %1067 = vmatpush1.bf16.msra.mxu0 0
    %1068 = vmatprep.subr.bf16.mxu0 0
    %1069 = vmatpush1.bf16.msra.mxu0 0
    %1070 = vmatprep.subr.bf16.mxu0 0
    %1071 = vmatpush1.bf16.msra.mxu0 0
    %1072 = vmatprep.subr.bf16.mxu0 0
    %1073 = vmatpush1.bf16.msra.mxu0 0
    %1074 = vmatprep.subr.bf16.mxu0 0
    %1075 = vmatpush1.bf16.msra.mxu0 0
    %1076 = vmatprep.subr.bf16.mxu0 0
    %1077 = vmatpush1.bf16.msra.mxu0 0
    %1078 = vmatprep.subr.bf16.mxu0 0
    %1079 = vmatpush1.bf16.msra.mxu0 0
    %1080 = vmatprep.mubr.bf16.mxu0 0
    %1081 = vmatmul.mubr.bf16.gmra.mrb[0].mxu0 %v1040
    %v1082 = vpop.f32.mrb[0].mxu0
    %v1083 = vadd.f32 0.0, %v1082
    %v1084 = vpop.f32.mrb[0].mxu0
    %v1085 = vpop.f32.mrb[0].mxu0
    %v1086 = vadd.f32 0.0, %v1085
    %v1087 = vpop.f32.mrb[0].mxu0
    %1088 = vmatprep.mubr.bf16.mxu0 0
    %1089 = vmatmul.mubr.bf16.gmra.mrb[0].mxu0 %v1043
    %v1090 = vpop.f32.mrb[0].mxu0
    %v1091 = vadd.f32 0.0, %v1090
    %v1092 = vpop.f32.mrb[0].mxu0
    %v1093 = vpop.f32.mrb[0].mxu0
    %v1094 = vadd.f32 0.0, %v1093
    %v1095 = vpop.f32.mrb[0].mxu0
    %1096 = vmatprep.mubr.bf16.mxu0 0
    %1097 = vmatmul.mubr.bf16.gmra.mrb[0].mxu0 %v1046
    %v1098 = vpop.f32.mrb[0].mxu0
    %v1099 = vadd.f32 0.0, %v1098
    %v1100 = vpop.f32.mrb[0].mxu0
    %v1101 = vpop.f32.mrb[0].mxu0
    %v1102 = vadd.f32 0.0, %v1101
    %v1103 = vpop.f32.mrb[0].mxu0
    %1104 = vdwg.mxu0
    %v1105 = vadd.f32 %v852, %v1083
    %v1106 = vadd.f32 %v855, %v1086
    %v1107 = vadd.f32 %v860, %v1091
    %v1108 = vadd.f32 %v863, %v1094
    %v1109 = vadd.f32 %v868, %v1099
    %v1110 = vadd.f32 %v871, %v1102
    %v1111 = vsel %vm76, 1, 0
    %vm1112 = vcmp.eq.s32.totalorder %v1111, 1
    %vm1113 = vmpackc.low %vm1112, %vm1112
    %v1114 = vsel %vm1113, 65537, 0
    %v1115 = vlaneseq
    %v1116 = vshrl.u32 %v1115, 7
    %v1117 = vsub.s32 0, %v1116
    %v1118 = vrot.slane %v1114, %v1117
    %vm1119 = vcmp.ne.s16.totalorder %v1118, 0
    %v1120 = vsel %vm1119, %v391, 0
    %v1121 = vsel %vm1119, %v392, 0
    %v1122 = vsel %vm1119, %v393, 0
    %v1124 = vsel %vm199, %v1120, 0
    %v1127 = vsel %vm199, %v1121, 0
    %v1130 = vsel %vm199, %v1122, 0
    %1132 = vmatprep.subr.bf16.mxu0 0
    %1133 = vmatpush1.bf16.xpose.msra.mxu0 %v425
    %1134 = vmatprep.subr.bf16.mxu0 0
    %1135 = vmatpush1.bf16.xpose.msra.mxu0 %v428
    %1136 = vmatprep.subr.bf16.mxu0 0
    %1137 = vmatpush1.bf16.xpose.msra.mxu0 %v431
    %1138 = vmatprep.subr.bf16.mxu0 0
    %1139 = vmatpush1.bf16.xpose.msra.mxu0 0
    %1140 = vmatprep.subr.bf16.mxu0 0
    %1141 = vmatpush1.bf16.xpose.msra.mxu0 0
    %1142 = vmatprep.subr.bf16.mxu0 0
    %1143 = vmatpush1.bf16.xpose.msra.mxu0 0
    %1144 = vmatprep.subr.bf16.mxu0 0
    %1145 = vmatpush1.bf16.xpose.msra.mxu0 0
    %1146 = vmatprep.subr.bf16.mxu0 0
    %1147 = vmatpush1.bf16.xpose.msra.mxu0 0
    %1148 = vmatprep.subr.bf16.mxu0 0
    %1149 = vmatpush1.bf16.xpose.msra.mxu0 0
    %1150 = vmatprep.subr.bf16.mxu0 0
    %1151 = vmatpush1.bf16.xpose.msra.mxu0 0
    %1152 = vmatprep.subr.bf16.mxu0 0
    %1153 = vmatpush1.bf16.xpose.msra.mxu0 0
    %1154 = vmatprep.subr.bf16.mxu0 0
    %1155 = vmatpush1.bf16.xpose.msra.mxu0 0
    %1156 = vmatprep.subr.bf16.mxu0 0
    %1157 = vmatpush1.bf16.xpose.msra.mxu0 0
    %1158 = vmatprep.subr.bf16.mxu0 0
    %1159 = vmatpush1.bf16.xpose.msra.mxu0 0
    %1160 = vmatprep.subr.bf16.mxu0 0
    %1161 = vmatpush1.bf16.xpose.msra.mxu0 0
    %1162 = vmatprep.subr.bf16.mxu0 0
    %1163 = vmatpush1.bf16.xpose.msra.mxu0 0
    %1164 = vmatprep.mubr.bf16.mxu0 0
    %1165 = vmatmul.mubr.bf16.gmra.mrb[0].mxu0 %v1124
    %v1166 = vpop.f32.mrb[0].mxu0
    %v1167 = vadd.f32 %v77, %v1166
    %v1168 = vpop.f32.mrb[0].mxu0
    %v1169 = vpop.f32.mrb[0].mxu0
    %v1170 = vadd.f32 %v78, %v1169
    %v1171 = vpop.f32.mrb[0].mxu0
    %1172 = vmatprep.mubr.bf16.mxu0 0
    %1173 = vmatmul.mubr.bf16.gmra.mrb[0].mxu0 %v1127
    %v1174 = vpop.f32.mrb[0].mxu0
    %v1175 = vadd.f32 %v79, %v1174
    %v1176 = vpop.f32.mrb[0].mxu0
    %v1177 = vpop.f32.mrb[0].mxu0
    %v1178 = vadd.f32 %v80, %v1177
    %v1179 = vpop.f32.mrb[0].mxu0
    %1180 = vmatprep.mubr.bf16.mxu0 0
    %1181 = vmatmul.mubr.bf16.gmra.mrb[0].mxu0 %v1130
    %v1182 = vpop.f32.mrb[0].mxu0
    %v1183 = vadd.f32 %v81, %v1182
    %v1184 = vpop.f32.mrb[0].mxu0
    %v1185 = vpop.f32.mrb[0].mxu0
    %v1186 = vadd.f32 %v82, %v1185
    %v1187 = vpop.f32.mrb[0].mxu0
    %1188 = vdwg.mxu0
    %v1189 = vsel %vm131, %v1167, -inf
    %1190 = vmax.xlane.f32.xlu0 %v1189
    %v1191 = vpop.xlane.xlu0 %1190
    %v1192 = vsel %vm131, %v1170, -inf
    %1193 = vmax.xlane.f32.xlu0 %v1192
    %v1194 = vpop.xlane.xlu0 %1193
    %v1195 = vsel %vm131, %v1175, -inf
    %1196 = vmax.xlane.f32.xlu0 %v1195
    %v1197 = vpop.xlane.xlu0 %1196
    %v1198 = vsel %vm131, %v1178, -inf
    %1199 = vmax.xlane.f32.xlu0 %v1198
    %v1200 = vpop.xlane.xlu0 %1199
    %v1201 = vsel %vm131, %v1183, -inf
    %1202 = vmax.xlane.f32.xlu0 %v1201
    %v1203 = vpop.xlane.xlu0 %1202
    %v1204 = vsel %vm131, %v1186, -inf
    %1205 = vmax.xlane.f32.xlu0 %v1204
    %v1206 = vpop.xlane.xlu0 %1205
    %v1207 = vsub.f32 %v1167, %v1191
    %v1208 = vsub.f32 %v1170, %v1194
    %v1209 = vsub.f32 %v1175, %v1197
    %v1210 = vsub.f32 %v1178, %v1200
    %v1211 = vsub.f32 %v1183, %v1203
    %v1212 = vsub.f32 %v1186, %v1206
    %v1213 = vmul.f32 %v1207, 1.442695
    %v1214 = vpow.pop %v1213
    %v1215 = vmul.f32 %v1208, 1.442695
    %v1216 = vpow.pop %v1215
    %v1217 = vmul.f32 %v1209, 1.442695
    %v1218 = vpow.pop %v1217
    %v1219 = vmul.f32 %v1210, 1.442695
    %v1220 = vpow.pop %v1219
    %v1221 = vmul.f32 %v1211, 1.442695
    %v1222 = vpow.pop %v1221
    %v1223 = vmul.f32 %v1212, 1.442695
    %v1224 = vpow.pop %v1223
    %v1225 = vsel %vm131, %v1214, 0.0
    %1226 = vadd.xlane.f32.xlu0 %v1225
    %v1227 = vpop.xlane.xlu0 %1226
    %v1228 = vsel %vm131, %v1216, 0.0
    %1229 = vadd.xlane.f32.xlu0 %v1228
    %v1230 = vpop.xlane.xlu0 %1229
    %v1231 = vsel %vm131, %v1218, 0.0
    %1232 = vadd.xlane.f32.xlu0 %v1231
    %v1233 = vpop.xlane.xlu0 %1232
    %v1234 = vsel %vm131, %v1220, 0.0
    %1235 = vadd.xlane.f32.xlu0 %v1234
    %v1236 = vpop.xlane.xlu0 %1235
    %v1237 = vsel %vm131, %v1222, 0.0
    %1238 = vadd.xlane.f32.xlu0 %v1237
    %v1239 = vpop.xlane.xlu0 %1238
    %v1240 = vsel %vm131, %v1224, 0.0
    %1241 = vadd.xlane.f32.xlu0 %v1240
    %v1242 = vpop.xlane.xlu0 %1241
    %v1243 = vrcp.pop %v1227
    %v1244 = vrcp.pop %v1230
    %v1245 = vrcp.pop %v1233
    %v1246 = vrcp.pop %v1236
    %v1247 = vrcp.pop %v1239
    %v1248 = vrcp.pop %v1242
    %v1249 = vmul.f32 %v1214, %v1243
    %v1250 = vmul.f32 %v1216, %v1244
    %v1251 = vmul.f32 %v1218, %v1245
    %v1252 = vmul.f32 %v1220, %v1246
    %v1253 = vmul.f32 %v1222, %v1247
    %v1254 = vmul.f32 %v1224, %v1248
    %1255 = vrot.lane.b32.xlu0 %v1118, 64
    %v1256 = vpop.permute.xlu0 %1255
    %vm1257 = vcmp.ne.s16.totalorder %v1256, 0
    %v1258 = vsel %vm1257, %v391, 0
    %v1259 = vsel %vm1257, %v392, 0
    %v1260 = vsel %vm1257, %v393, 0
    %v1261 = vpack.c.bf16 %v1250, %v1249
    %v1262 = vpack.c.bf16 %v1252, %v1251
    %v1263 = vpack.c.bf16 %v1254, %v1253
    %1267 = vrot.lane.b32.xlu0 %v1258, 64
    %v1268 = vpop.permute.xlu0 %1267
    %1269 = vrot.lane.b32.xlu0 %v1259, 64
    %v1270 = vpop.permute.xlu0 %1269
    %1271 = vrot.lane.b32.xlu0 %v1260, 64
    %v1272 = vpop.permute.xlu0 %1271
    %v1277 = vsel %vm131, %v1261, 0
    %v1280 = vsel %vm131, %v1262, 0
    %v1283 = vsel %vm131, %v1263, 0
    %1285 = vmatprep.subr.bf16.mxu0 0
    %1286 = vmatpush1.bf16.msra.mxu0 %v1268
    %1287 = vmatprep.subr.bf16.mxu0 0
    %1288 = vmatpush1.bf16.msra.mxu0 %v1270
    %1289 = vmatprep.subr.bf16.mxu0 0
    %1290 = vmatpush1.bf16.msra.mxu0 %v1272
    %1291 = vmatprep.subr.bf16.mxu0 0
    %1292 = vmatpush1.bf16.msra.mxu0 0
    %1293 = vmatprep.subr.bf16.mxu0 0
    %1294 = vmatpush1.bf16.msra.mxu0 0
    %1295 = vmatprep.subr.bf16.mxu0 0
    %1296 = vmatpush1.bf16.msra.mxu0 0
    %1297 = vmatprep.subr.bf16.mxu0 0
    %1298 = vmatpush1.bf16.msra.mxu0 0
    %1299 = vmatprep.subr.bf16.mxu0 0
    %1300 = vmatpush1.bf16.msra.mxu0 0
    %1301 = vmatprep.subr.bf16.mxu0 0
    %1302 = vmatpush1.bf16.msra.mxu0 0
    %1303 = vmatprep.subr.bf16.mxu0 0
    %1304 = vmatpush1.bf16.msra.mxu0 0
    %1305 = vmatprep.subr.bf16.mxu0 0
    %1306 = vmatpush1.bf16.msra.mxu0 0
    %1307 = vmatprep.subr.bf16.mxu0 0
    %1308 = vmatpush1.bf16.msra.mxu0 0
    %1309 = vmatprep.subr.bf16.mxu0 0
    %1310 = vmatpush1.bf16.msra.mxu0 0
    %1311 = vmatprep.subr.bf16.mxu0 0
    %1312 = vmatpush1.bf16.msra.mxu0 0
    %1313 = vmatprep.subr.bf16.mxu0 0
    %1314 = vmatpush1.bf16.msra.mxu0 0
    %1315 = vmatprep.subr.bf16.mxu0 0
    %1316 = vmatpush1.bf16.msra.mxu0 0
    %1317 = vmatprep.mubr.bf16.mxu0 0
    %1318 = vmatmul.mubr.bf16.gmra.mrb[0].mxu0 %v1277
    %v1319 = vpop.f32.mrb[0].mxu0
    %v1320 = vadd.f32 0.0, %v1319
    %v1321 = vpop.f32.mrb[0].mxu0
    %v1322 = vpop.f32.mrb[0].mxu0
    %v1323 = vadd.f32 0.0, %v1322
    %v1324 = vpop.f32.mrb[0].mxu0
    %1325 = vmatprep.mubr.bf16.mxu0 0
    %1326 = vmatmul.mubr.bf16.gmra.mrb[0].mxu0 %v1280
    %v1327 = vpop.f32.mrb[0].mxu0
    %v1328 = vadd.f32 0.0, %v1327
    %v1329 = vpop.f32.mrb[0].mxu0
    %v1330 = vpop.f32.mrb[0].mxu0
    %v1331 = vadd.f32 0.0, %v1330
    %v1332 = vpop.f32.mrb[0].mxu0
    %1333 = vmatprep.mubr.bf16.mxu0 0
    %1334 = vmatmul.mubr.bf16.gmra.mrb[0].mxu0 %v1283
    %v1335 = vpop.f32.mrb[0].mxu0
    %v1336 = vadd.f32 0.0, %v1335
    %v1337 = vpop.f32.mrb[0].mxu0
    %v1338 = vpop.f32.mrb[0].mxu0
    %v1339 = vadd.f32 0.0, %v1338
    %v1340 = vpop.f32.mrb[0].mxu0
    %1341 = vdwg.mxu0
    %v1342 = vadd.f32 %v1105, %v1320
    %v1343 = vadd.f32 %v1106, %v1323
    %v1344 = vadd.f32 %v1107, %v1328
    %v1345 = vadd.f32 %v1108, %v1331
    %v1346 = vadd.f32 %v1109, %v1336
    %v1347 = vadd.f32 %v1110, %v1339
    %v1348 = vpack.c.bf16 %v1343, %v1342
    %v1349 = vpack.c.bf16 %v1345, %v1344
    %v1350 = vpack.c.bf16 %v1347, %v1346
    %v1351 = vld [vmem:[%s6] sm:$0xf]
    %v1352 = vld [vmem:[%s6 + $0x4] sm:$0xf]
    %v1353 = vld [vmem:[%s6 + $0x8] sm:$0xf]
    %v1354 = vld [vmem:[%s6 + $0xc] sm:$0xf]
    %v1359 = vunpack.c.l.b16 %v1351
    %v1360 = vunpack.c.l.b16 %v1352
    %v1361 = vunpack.c.l.b16 %v1353
    %v1362 = vunpack.c.l.b16 %v1354
    %v1363 = vpack.c.b16 %v1360, %v1359
    %v1364 = vpack.c.b16 %v1362, %v1361
    %v1368 = vsel %vm199, %v1348, 0
    %v1371 = vsel %vm199, %v1349, 0
    %v1374 = vsel %vm199, %v1350, 0
    %1376 = vmatprep.subr.bf16.mxu0 0
    %1377 = vmatpush1.bf16.msra.mxu0 %v1363
    %1378 = vmatprep.subr.bf16.mxu0 0
    %1379 = vmatpush1.bf16.msra.mxu0 %v1364
    %1380 = vmatprep.subr.bf16.mxu0 0
    %1381 = vmatpush1.bf16.msra.mxu0 0
    %1382 = vmatprep.subr.bf16.mxu0 0
    %1383 = vmatpush1.bf16.msra.mxu0 0
    %1384 = vmatprep.subr.bf16.mxu0 0
    %1385 = vmatpush1.bf16.msra.mxu0 0
    %1386 = vmatprep.subr.bf16.mxu0 0
    %1387 = vmatpush1.bf16.msra.mxu0 0
    %1388 = vmatprep.subr.bf16.mxu0 0
    %1389 = vmatpush1.bf16.msra.mxu0 0
    %1390 = vmatprep.subr.bf16.mxu0 0
    %1391 = vmatpush1.bf16.msra.mxu0 0
    %1392 = vmatprep.subr.bf16.mxu0 0
    %1393 = vmatpush1.bf16.msra.mxu0 0
    %1394 = vmatprep.subr.bf16.mxu0 0
    %1395 = vmatpush1.bf16.msra.mxu0 0
    %1396 = vmatprep.subr.bf16.mxu0 0
    %1397 = vmatpush1.bf16.msra.mxu0 0
    %1398 = vmatprep.subr.bf16.mxu0 0
    %1399 = vmatpush1.bf16.msra.mxu0 0
    %1400 = vmatprep.subr.bf16.mxu0 0
    %1401 = vmatpush1.bf16.msra.mxu0 0
    %1402 = vmatprep.subr.bf16.mxu0 0
    %1403 = vmatpush1.bf16.msra.mxu0 0
    %1404 = vmatprep.subr.bf16.mxu0 0
    %1405 = vmatpush1.bf16.msra.mxu0 0
    %1406 = vmatprep.subr.bf16.mxu0 0
    %1407 = vmatpush1.bf16.msra.mxu0 0
    %1408 = vmatprep.mubr.bf16.mxu0 0
    %1409 = vmatmul.mubr.bf16.gmra.mrb[0].mxu0 %v1368
    %v1410 = vpop.f32.mrb[0].mxu0
    %v1411 = vadd.f32 0.0, %v1410
    %v1412 = vpop.f32.mrb[0].mxu0
    %v1413 = vpop.f32.mrb[0].mxu0
    %v1414 = vadd.f32 0.0, %v1413
    %v1415 = vpop.f32.mrb[0].mxu0
    %1416 = vmatprep.mubr.bf16.mxu0 0
    %1417 = vmatmul.mubr.bf16.gmra.mrb[0].mxu0 %v1371
    %v1418 = vpop.f32.mrb[0].mxu0
    %v1419 = vadd.f32 0.0, %v1418
    %v1420 = vpop.f32.mrb[0].mxu0
    %v1421 = vpop.f32.mrb[0].mxu0
    %v1422 = vadd.f32 0.0, %v1421
    %v1423 = vpop.f32.mrb[0].mxu0
    %1424 = vmatprep.mubr.bf16.mxu0 0
    %1425 = vmatmul.mubr.bf16.gmra.mrb[0].mxu0 %v1374
    %v1426 = vpop.f32.mrb[0].mxu0
    %v1427 = vadd.f32 0.0, %v1426
    %v1428 = vpop.f32.mrb[0].mxu0
    %v1429 = vpop.f32.mrb[0].mxu0
    %v1430 = vadd.f32 0.0, %v1429
    %v1431 = vpop.f32.mrb[0].mxu0
    %1432 = vdwg.mxu0
    %v1433 = vadd.f32 %v176, %v1411
    %v1434 = vadd.f32 %v179, %v1414
    %v1435 = vadd.f32 %v184, %v1419
    %v1436 = vadd.f32 %v187, %v1422
    %v1437 = vadd.f32 %v192, %v1427
    %v1438 = vadd.f32 %v195, %v1430
    %v1439 = vlaneseq
    %v1440 = vshrl.u32 %v1439, 7
    %v1441 = vsub.s32 2, %v1440
    %v1442 = vrot.slane %v198, %v1441
    %v1443 = vadd.f32 %v1433, %v1442
    %v1444 = vadd.f32 %v1434, %v1442
    %v1445 = vadd.f32 %v1435, %v1442
    %v1446 = vadd.f32 %v1436, %v1442
    %v1447 = vadd.f32 %v1437, %v1442
    %v1448 = vadd.f32 %v1438, %v1442
    %v1449 = vsel %vm199, %v1443, 0.0
    %1450 = vadd.xlane.f32.xlu0 %v1449
    %v1451 = vpop.xlane.xlu0 %1450
    %v1452 = vsel %vm199, %v1444, 0.0
    %1453 = vadd.xlane.f32.xlu0 %v1452
    %v1454 = vpop.xlane.xlu0 %1453
    %v1455 = vsel %vm199, %v1445, 0.0
    %1456 = vadd.xlane.f32.xlu0 %v1455
    %v1457 = vpop.xlane.xlu0 %1456
    %v1458 = vsel %vm199, %v1446, 0.0
    %1459 = vadd.xlane.f32.xlu0 %v1458
    %v1460 = vpop.xlane.xlu0 %1459
    %v1461 = vsel %vm199, %v1447, 0.0
    %1462 = vadd.xlane.f32.xlu0 %v1461
    %v1463 = vpop.xlane.xlu0 %1462
    %v1464 = vsel %vm199, %v1448, 0.0
    %1465 = vadd.xlane.f32.xlu0 %v1464
    %v1466 = vpop.xlane.xlu0 %1465
    %v1467 = vmul.f32 %v1451, %v218
    %v1468 = vmul.f32 %v1454, %v218
    %v1469 = vmul.f32 %v1457, %v218
    %v1470 = vmul.f32 %v1460, %v218
    %v1471 = vmul.f32 %v1463, %v218
    %v1472 = vmul.f32 %v1466, %v218
    %v1473 = vsub.f32 %v1443, %v1467
    %v1474 = vsub.f32 %v1444, %v1468
    %v1475 = vsub.f32 %v1445, %v1469
    %v1476 = vsub.f32 %v1446, %v1470
    %v1477 = vsub.f32 %v1447, %v1471
    %v1478 = vsub.f32 %v1448, %v1472
    %v1479 = vmul.f32 %v1473, %v1473
    %v1480 = vmul.f32 %v1474, %v1474
    %v1481 = vmul.f32 %v1475, %v1475
    %v1482 = vmul.f32 %v1476, %v1476
    %v1483 = vmul.f32 %v1477, %v1477
    %v1484 = vmul.f32 %v1478, %v1478
    %v1485 = vsel %vm199, %v1479, 0.0
    %1486 = vadd.xlane.f32.xlu0 %v1485
    %v1487 = vpop.xlane.xlu0 %1486
    %v1488 = vsel %vm199, %v1480, 0.0
    %1489 = vadd.xlane.f32.xlu0 %v1488
    %v1490 = vpop.xlane.xlu0 %1489
    %v1491 = vsel %vm199, %v1481, 0.0
    %1492 = vadd.xlane.f32.xlu0 %v1491
    %v1493 = vpop.xlane.xlu0 %1492
    %v1494 = vsel %vm199, %v1482, 0.0
    %1495 = vadd.xlane.f32.xlu0 %v1494
    %v1496 = vpop.xlane.xlu0 %1495
    %v1497 = vsel %vm199, %v1483, 0.0
    %1498 = vadd.xlane.f32.xlu0 %v1497
    %v1499 = vpop.xlane.xlu0 %1498
    %v1500 = vsel %vm199, %v1484, 0.0
    %1501 = vadd.xlane.f32.xlu0 %v1500
    %v1502 = vpop.xlane.xlu0 %1501
    %v1503 = vmul.f32 %v1487, %v218
    %v1504 = vmul.f32 %v1490, %v218
    %v1505 = vmul.f32 %v1493, %v218
    %v1506 = vmul.f32 %v1496, %v218
    %v1507 = vmul.f32 %v1499, %v218
    %v1508 = vmul.f32 %v1502, %v218
    %v1509 = vadd.f32 %v1503, 1e-06
    %v1510 = vadd.f32 %v1504, 1e-06
    %v1511 = vadd.f32 %v1505, 1e-06
    %v1512 = vadd.f32 %v1506, 1e-06
    %v1513 = vadd.f32 %v1507, 1e-06
    %v1514 = vadd.f32 %v1508, 1e-06
    %v1515 = vrsqrt.pop %v1509
    %v1516 = vrsqrt.pop %v1510
    %v1517 = vrsqrt.pop %v1511
    %v1518 = vrsqrt.pop %v1512
    %v1519 = vrsqrt.pop %v1513
    %v1520 = vrsqrt.pop %v1514
    %v1521 = vmul.f32 %v1473, %v1515
    %v1522 = vmul.f32 %v1474, %v1516
    %v1523 = vmul.f32 %v1475, %v1517
    %v1524 = vmul.f32 %v1476, %v1518
    %v1525 = vmul.f32 %v1477, %v1519
    %v1526 = vmul.f32 %v1478, %v1520
    %v1527 = vlaneseq
    %v1528 = vshrl.u32 %v1527, 7
    %v1529 = vsub.s32 3, %v1528
    %v1530 = vrot.slane %v198, %v1529
    %v1531 = vmul.f32 %v1521, %v1530
    %v1532 = vmul.f32 %v1522, %v1530
    %v1533 = vmul.f32 %v1523, %v1530
    %v1534 = vmul.f32 %v1524, %v1530
    %v1535 = vmul.f32 %v1525, %v1530
    %v1536 = vmul.f32 %v1526, %v1530
    %v1537 = vlaneseq
    %v1538 = vshrl.u32 %v1537, 7
    %v1539 = vsub.s32 4, %v1538
    %v1540 = vrot.slane %v198, %v1539
    %v1541 = vadd.f32 %v1531, %v1540
    %v1542 = vadd.f32 %v1532, %v1540
    %v1543 = vadd.f32 %v1533, %v1540
    %v1544 = vadd.f32 %v1534, %v1540
    %v1545 = vadd.f32 %v1535, %v1540
    %v1546 = vadd.f32 %v1536, %v1540
    %v1547 = vpack.c.bf16 %v1542, %v1541
    %v1548 = vpack.c.bf16 %v1544, %v1543
    %v1549 = vpack.c.bf16 %v1546, %v1545
    %v1550 = vld [vmem:[%s8] sm:$0xf]
    %v1551 = vld [vmem:[%s8 + $0x4] sm:$0xf]
    %v1552 = vld [vmem:[%s8 + $0x8] sm:$0xf]
    %v1553 = vld [vmem:[%s8 + $0xc] sm:$0xf]
    %v1554 = vld [vmem:[%s9] sm:$0x1]
    %v1556 = vlaneseq
    %v1557 = vshrl.u32 %v1556, 7
    %v1558 = vsub.s32 0, %v1557
    %v1559 = vrot.slane %v1554, %v1558
    %v1565 = vunpack.c.l.b16 %v1550
    %v1566 = vunpack.c.l.b16 %v1551
    %v1567 = vunpack.c.l.b16 %v1552
    %v1568 = vunpack.c.l.b16 %v1553
    %v1569 = vpack.c.b16 %v1566, %v1565
    %v1570 = vpack.c.b16 %v1568, %v1567
    %v1574 = vsel %vm199, %v1547, 0
    %v1577 = vsel %vm199, %v1548, 0
    %v1580 = vsel %vm199, %v1549, 0
    %1582 = vmatprep.subr.bf16.mxu0 0
    %1583 = vmatpush1.bf16.msra.mxu0 %v1569
    %1584 = vmatprep.subr.bf16.mxu0 0
    %1585 = vmatpush1.bf16.msra.mxu0 %v1570
    %1586 = vmatprep.subr.bf16.mxu0 0
    %1587 = vmatpush1.bf16.msra.mxu0 0
    %1588 = vmatprep.subr.bf16.mxu0 0
    %1589 = vmatpush1.bf16.msra.mxu0 0
    %1590 = vmatprep.subr.bf16.mxu0 0
    %1591 = vmatpush1.bf16.msra.mxu0 0
    %1592 = vmatprep.subr.bf16.mxu0 0
    %1593 = vmatpush1.bf16.msra.mxu0 0
    %1594 = vmatprep.subr.bf16.mxu0 0
    %1595 = vmatpush1.bf16.msra.mxu0 0
    %1596 = vmatprep.subr.bf16.mxu0 0
    %1597 = vmatpush1.bf16.msra.mxu0 0
    %1598 = vmatprep.subr.bf16.mxu0 0
    %1599 = vmatpush1.bf16.msra.mxu0 0
    %1600 = vmatprep.subr.bf16.mxu0 0
    %1601 = vmatpush1.bf16.msra.mxu0 0
    %1602 = vmatprep.subr.bf16.mxu0 0
    %1603 = vmatpush1.bf16.msra.mxu0 0
    %1604 = vmatprep.subr.bf16.mxu0 0
    %1605 = vmatpush1.bf16.msra.mxu0 0
    %1606 = vmatprep.subr.bf16.mxu0 0
    %1607 = vmatpush1.bf16.msra.mxu0 0
    %1608 = vmatprep.subr.bf16.mxu0 0
    %1609 = vmatpush1.bf16.msra.mxu0 0
    %1610 = vmatprep.subr.bf16.mxu0 0
    %1611 = vmatpush1.bf16.msra.mxu0 0
    %1612 = vmatprep.subr.bf16.mxu0 0
    %1613 = vmatpush1.bf16.msra.mxu0 0
    %1614 = vmatprep.mubr.bf16.mxu0 0
    %1615 = vmatmul.mubr.bf16.gmra.mrb[0].mxu0 %v1574
    %v1616 = vpop.f32.mrb[0].mxu0
    %v1617 = vadd.f32 %v1559, %v1616
    %v1618 = vpop.f32.mrb[0].mxu0
    %v1619 = vpop.f32.mrb[0].mxu0
    %v1620 = vadd.f32 %v1559, %v1619
    %v1621 = vpop.f32.mrb[0].mxu0
    %1622 = vmatprep.mubr.bf16.mxu0 0
    %1623 = vmatmul.mubr.bf16.gmra.mrb[0].mxu0 %v1577
    %v1624 = vpop.f32.mrb[0].mxu0
    %v1625 = vadd.f32 %v1559, %v1624
    %v1626 = vpop.f32.mrb[0].mxu0
    %v1627 = vpop.f32.mrb[0].mxu0
    %v1628 = vadd.f32 %v1559, %v1627
    %v1629 = vpop.f32.mrb[0].mxu0
    %1630 = vmatprep.mubr.bf16.mxu0 0
    %1631 = vmatmul.mubr.bf16.gmra.mrb[0].mxu0 %v1580
    %v1632 = vpop.f32.mrb[0].mxu0
    %v1633 = vadd.f32 %v1559, %v1632
    %v1634 = vpop.f32.mrb[0].mxu0
    %v1635 = vpop.f32.mrb[0].mxu0
    %v1636 = vadd.f32 %v1559, %v1635
    %v1637 = vpop.f32.mrb[0].mxu0
    %1638 = vdwg.mxu0
    %v1639 = vmul.f32 %v1617, 0.5
    %v1640 = vmul.f32 %v1620, 0.5
    %v1641 = vmul.f32 %v1625, 0.5
    %v1642 = vmul.f32 %v1628, 0.5
    %v1643 = vmul.f32 %v1633, 0.5
    %v1644 = vmul.f32 %v1636, 0.5
    %v1645 = vmul.f32 %v1617, %v1617
    %v1646 = vmul.f32 %v1620, %v1620
    %v1647 = vmul.f32 %v1625, %v1625
    %v1648 = vmul.f32 %v1628, %v1628
    %v1649 = vmul.f32 %v1633, %v1633
    %v1650 = vmul.f32 %v1636, %v1636
    %v1651 = vmul.f32 %v1645, %v1617
    %v1652 = vmul.f32 %v1646, %v1620
    %v1653 = vmul.f32 %v1647, %v1625
    %v1654 = vmul.f32 %v1648, %v1628
    %v1655 = vmul.f32 %v1649, %v1633
    %v1656 = vmul.f32 %v1650, %v1636
    %v1657 = vmul.f32 %v1651, 0.044715
    %v1658 = vmul.f32 %v1652, 0.044715
    %v1659 = vmul.f32 %v1653, 0.044715
    %v1660 = vmul.f32 %v1654, 0.044715
    %v1661 = vmul.f32 %v1655, 0.044715
    %v1662 = vmul.f32 %v1656, 0.044715
    %v1663 = vadd.f32 %v1617, %v1657
    %v1664 = vadd.f32 %v1620, %v1658
    %v1665 = vadd.f32 %v1625, %v1659
    %v1666 = vadd.f32 %v1628, %v1660
    %v1667 = vadd.f32 %v1633, %v1661
    %v1668 = vadd.f32 %v1636, %v1662
    %v1669 = vmul.f32 %v1663, 0.7978845
    %v1670 = vmul.f32 %v1664, 0.7978845
    %v1671 = vmul.f32 %v1665, 0.7978845
    %v1672 = vmul.f32 %v1666, 0.7978845
    %v1673 = vmul.f32 %v1667, 0.7978845
    %v1674 = vmul.f32 %v1668, 0.7978845
    %v1675 = vtanh.pop %v1669
    %v1676 = vtanh.pop %v1670
    %v1677 = vtanh.pop %v1671
    %v1678 = vtanh.pop %v1672
    %v1679 = vtanh.pop %v1673
    %v1680 = vtanh.pop %v1674
    %v1681 = vadd.f32 %v1675, 1.0
    %v1682 = vadd.f32 %v1676, 1.0
    %v1683 = vadd.f32 %v1677, 1.0
    %v1684 = vadd.f32 %v1678, 1.0
    %v1685 = vadd.f32 %v1679, 1.0
    %v1686 = vadd.f32 %v1680, 1.0
    %v1687 = vmul.f32 %v1639, %v1681
    %v1688 = vmul.f32 %v1640, %v1682
    %v1689 = vmul.f32 %v1641, %v1683
    %v1690 = vmul.f32 %v1642, %v1684
    %v1691 = vmul.f32 %v1643, %v1685
    %v1692 = vmul.f32 %v1644, %v1686
    %v1693 = vpack.c.bf16 %v1688, %v1687
    %v1694 = vpack.c.bf16 %v1690, %v1689
    %v1695 = vpack.c.bf16 %v1692, %v1691
    %v1696 = vld [vmem:[%s10] sm:$0xf]
    %v1697 = vld [vmem:[%s10 + $0x4] sm:$0xf]
    %v1698 = vld [vmem:[%s10 + $0x8] sm:$0xf]
    %v1699 = vld [vmem:[%s10 + $0xc] sm:$0xf]
    %v1700 = vld [vmem:[%s10 + $0x10] sm:$0xf]
    %v1701 = vld [vmem:[%s10 + $0x14] sm:$0xf]
    %v1702 = vld [vmem:[%s10 + $0x18] sm:$0xf]
    %v1703 = vld [vmem:[%s10 + $0x1c] sm:$0xf]
    %v1704 = vld [vmem:[%s10 + $0x20] sm:$0xf]
    %v1705 = vld [vmem:[%s10 + $0x24] sm:$0xf]
    %v1706 = vld [vmem:[%s10 + $0x28] sm:$0xf]
    %v1707 = vld [vmem:[%s10 + $0x2c] sm:$0xf]
    %v1708 = vld [vmem:[%s10 + $0x30] sm:$0xf]
    %v1709 = vld [vmem:[%s10 + $0x34] sm:$0xf]
    %v1710 = vld [vmem:[%s10 + $0x38] sm:$0xf]
    %v1711 = vld [vmem:[%s10 + $0x3c] sm:$0xf]
    %v1728 = vunpack.c.l.b16 %v1696
    %v1729 = vunpack.c.l.b16 %v1697
    %v1730 = vunpack.c.l.b16 %v1698
    %v1731 = vunpack.c.l.b16 %v1699
    %v1732 = vunpack.c.l.b16 %v1700
    %v1733 = vunpack.c.l.b16 %v1701
    %v1734 = vunpack.c.l.b16 %v1702
    %v1735 = vunpack.c.l.b16 %v1703
    %v1736 = vunpack.c.l.b16 %v1704
    %v1737 = vunpack.c.l.b16 %v1705
    %v1738 = vunpack.c.l.b16 %v1706
    %v1739 = vunpack.c.l.b16 %v1707
    %v1740 = vunpack.c.l.b16 %v1708
    %v1741 = vunpack.c.l.b16 %v1709
    %v1742 = vunpack.c.l.b16 %v1710
    %v1743 = vunpack.c.l.b16 %v1711
    %v1744 = vpack.c.b16 %v1729, %v1728
    %v1745 = vpack.c.b16 %v1731, %v1730
    %v1746 = vpack.c.b16 %v1733, %v1732
    %v1747 = vpack.c.b16 %v1735, %v1734
    %v1748 = vpack.c.b16 %v1737, %v1736
    %v1749 = vpack.c.b16 %v1739, %v1738
    %v1750 = vpack.c.b16 %v1741, %v1740
    %v1751 = vpack.c.b16 %v1743, %v1742
    %1760 = vmatprep.subr.bf16.mxu0 0
    %1761 = vmatpush1.bf16.msra.mxu0 %v1744
    %1762 = vmatprep.subr.bf16.mxu0 0
    %1763 = vmatpush1.bf16.msra.mxu0 %v1745
    %1764 = vmatprep.subr.bf16.mxu0 0
    %1765 = vmatpush1.bf16.msra.mxu0 %v1746
    %1766 = vmatprep.subr.bf16.mxu0 0
    %1767 = vmatpush1.bf16.msra.mxu0 %v1747
    %1768 = vmatprep.subr.bf16.mxu0 0
    %1769 = vmatpush1.bf16.msra.mxu0 %v1748
    %1770 = vmatprep.subr.bf16.mxu0 0
    %1771 = vmatpush1.bf16.msra.mxu0 %v1749
    %1772 = vmatprep.subr.bf16.mxu0 0
    %1773 = vmatpush1.bf16.msra.mxu0 %v1750
    %1774 = vmatprep.subr.bf16.mxu0 0
    %1775 = vmatpush1.bf16.msra.mxu0 %v1751
    %1776 = vmatprep.subr.bf16.mxu0 0
    %1777 = vmatpush1.bf16.msra.mxu0 0
    %1778 = vmatprep.subr.bf16.mxu0 0
    %1779 = vmatpush1.bf16.msra.mxu0 0
    %1780 = vmatprep.subr.bf16.mxu0 0
    %1781 = vmatpush1.bf16.msra.mxu0 0
    %1782 = vmatprep.subr.bf16.mxu0 0
    %1783 = vmatpush1.bf16.msra.mxu0 0
    %1784 = vmatprep.subr.bf16.mxu0 0
    %1785 = vmatpush1.bf16.msra.mxu0 0
    %1786 = vmatprep.subr.bf16.mxu0 0
    %1787 = vmatpush1.bf16.msra.mxu0 0
    %1788 = vmatprep.subr.bf16.mxu0 0
    %1789 = vmatpush1.bf16.msra.mxu0 0
    %1790 = vmatprep.subr.bf16.mxu0 0
    %1791 = vmatpush1.bf16.msra.mxu0 0
    %1792 = vmatprep.mubr.bf16.mxu0 0
    %1793 = vmatmul.mubr.bf16.gmra.mrb[0].mxu0 %v1693
    %v1794 = vpop.f32.mrb[0].mxu0
    %v1795 = vadd.f32 0.0, %v1794
    %v1796 = vpop.f32.mrb[0].mxu0
    %v1797 = vpop.f32.mrb[0].mxu0
    %v1798 = vadd.f32 0.0, %v1797
    %v1799 = vpop.f32.mrb[0].mxu0
    %1800 = vmatprep.mubr.bf16.mxu0 0
    %1801 = vmatmul.mubr.bf16.gmra.mrb[0].mxu0 %v1694
    %v1802 = vpop.f32.mrb[0].mxu0
    %v1803 = vadd.f32 0.0, %v1802
    %v1804 = vpop.f32.mrb[0].mxu0
    %v1805 = vpop.f32.mrb[0].mxu0
    %v1806 = vadd.f32 0.0, %v1805
    %v1807 = vpop.f32.mrb[0].mxu0
    %1808 = vmatprep.mubr.bf16.mxu0 0
    %1809 = vmatmul.mubr.bf16.gmra.mrb[0].mxu0 %v1695
    %v1810 = vpop.f32.mrb[0].mxu0
    %v1811 = vadd.f32 0.0, %v1810
    %v1812 = vpop.f32.mrb[0].mxu0
    %v1813 = vpop.f32.mrb[0].mxu0
    %v1814 = vadd.f32 0.0, %v1813
    %v1815 = vpop.f32.mrb[0].mxu0
    %1816 = vdwg.mxu0
    %v1817 = vadd.f32 %v1443, %v1795
    %v1818 = vadd.f32 %v1444, %v1798
    %v1819 = vadd.f32 %v1445, %v1803
    %v1820 = vadd.f32 %v1446, %v1806
    %v1821 = vadd.f32 %v1447, %v1811
    %v1822 = vadd.f32 %v1448, %v1814
    %v1823 = vlaneseq
    %v1824 = vshrl.u32 %v1823, 7
    %v1825 = vsub.s32 5, %v1824
    %v1826 = vrot.slane %v198, %v1825
    %v1827 = vadd.f32 %v1817, %v1826
    %v1828 = vadd.f32 %v1818, %v1826
    %v1829 = vadd.f32 %v1819, %v1826
    %v1830 = vadd.f32 %v1820, %v1826
    %v1831 = vadd.f32 %v1821, %v1826
    %v1832 = vadd.f32 %v1822, %v1826
    %s1833 = scalar_lea.vmem %s7, 8
    %v1834 = vld [vmem:[%s1833] sm:$0x3f]
    %v1835 = vsel %vm199, %v1827, 0.0
    %1836 = vadd.xlane.f32.xlu0 %v1835
    %v1837 = vpop.xlane.xlu0 %1836
    %v1838 = vsel %vm199, %v1828, 0.0
    %1839 = vadd.xlane.f32.xlu0 %v1838
    %v1840 = vpop.xlane.xlu0 %1839
    %v1841 = vsel %vm199, %v1829, 0.0
    %1842 = vadd.xlane.f32.xlu0 %v1841
    %v1843 = vpop.xlane.xlu0 %1842
    %v1844 = vsel %vm199, %v1830, 0.0
    %1845 = vadd.xlane.f32.xlu0 %v1844
    %v1846 = vpop.xlane.xlu0 %1845
    %v1847 = vsel %vm199, %v1831, 0.0
    %1848 = vadd.xlane.f32.xlu0 %v1847
    %v1849 = vpop.xlane.xlu0 %1848
    %v1850 = vsel %vm199, %v1832, 0.0
    %1851 = vadd.xlane.f32.xlu0 %v1850
    %v1852 = vpop.xlane.xlu0 %1851
    %v1853 = vmul.f32 %v1837, %v218
    %v1854 = vmul.f32 %v1840, %v218
    %v1855 = vmul.f32 %v1843, %v218
    %v1856 = vmul.f32 %v1846, %v218
    %v1857 = vmul.f32 %v1849, %v218
    %v1858 = vmul.f32 %v1852, %v218
    %v1859 = vsub.f32 %v1827, %v1853
    %v1860 = vsub.f32 %v1828, %v1854
    %v1861 = vsub.f32 %v1829, %v1855
    %v1862 = vsub.f32 %v1830, %v1856
    %v1863 = vsub.f32 %v1831, %v1857
    %v1864 = vsub.f32 %v1832, %v1858
    %v1865 = vmul.f32 %v1859, %v1859
    %v1866 = vmul.f32 %v1860, %v1860
    %v1867 = vmul.f32 %v1861, %v1861
    %v1868 = vmul.f32 %v1862, %v1862
    %v1869 = vmul.f32 %v1863, %v1863
    %v1870 = vmul.f32 %v1864, %v1864
    %v1871 = vsel %vm199, %v1865, 0.0
    %1872 = vadd.xlane.f32.xlu0 %v1871
    %v1873 = vpop.xlane.xlu0 %1872
    %v1874 = vsel %vm199, %v1866, 0.0
    %1875 = vadd.xlane.f32.xlu0 %v1874
    %v1876 = vpop.xlane.xlu0 %1875
    %v1877 = vsel %vm199, %v1867, 0.0
    %1878 = vadd.xlane.f32.xlu0 %v1877
    %v1879 = vpop.xlane.xlu0 %1878
    %v1880 = vsel %vm199, %v1868, 0.0
    %1881 = vadd.xlane.f32.xlu0 %v1880
    %v1882 = vpop.xlane.xlu0 %1881
    %v1883 = vsel %vm199, %v1869, 0.0
    %1884 = vadd.xlane.f32.xlu0 %v1883
    %v1885 = vpop.xlane.xlu0 %1884
    %v1886 = vsel %vm199, %v1870, 0.0
    %1887 = vadd.xlane.f32.xlu0 %v1886
    %v1888 = vpop.xlane.xlu0 %1887
    %v1889 = vmul.f32 %v1873, %v218
    %v1890 = vmul.f32 %v1876, %v218
    %v1891 = vmul.f32 %v1879, %v218
    %v1892 = vmul.f32 %v1882, %v218
    %v1893 = vmul.f32 %v1885, %v218
    %v1894 = vmul.f32 %v1888, %v218
    %v1895 = vadd.f32 %v1889, 1e-06
    %v1896 = vadd.f32 %v1890, 1e-06
    %v1897 = vadd.f32 %v1891, 1e-06
    %v1898 = vadd.f32 %v1892, 1e-06
    %v1899 = vadd.f32 %v1893, 1e-06
    %v1900 = vadd.f32 %v1894, 1e-06
    %v1901 = vrsqrt.pop %v1895
    %v1902 = vrsqrt.pop %v1896
    %v1903 = vrsqrt.pop %v1897
    %v1904 = vrsqrt.pop %v1898
    %v1905 = vrsqrt.pop %v1899
    %v1906 = vrsqrt.pop %v1900
    %v1907 = vmul.f32 %v1859, %v1901
    %v1908 = vmul.f32 %v1860, %v1902
    %v1909 = vmul.f32 %v1861, %v1903
    %v1910 = vmul.f32 %v1862, %v1904
    %v1911 = vmul.f32 %v1863, %v1905
    %v1912 = vmul.f32 %v1864, %v1906
    %v1913 = vlaneseq
    %v1914 = vshrl.u32 %v1913, 7
    %v1915 = vsub.s32 0, %v1914
    %v1916 = vrot.slane %v1834, %v1915
    %v1917 = vmul.f32 %v1907, %v1916
    %v1918 = vmul.f32 %v1908, %v1916
    %v1919 = vmul.f32 %v1909, %v1916
    %v1920 = vmul.f32 %v1910, %v1916
    %v1921 = vmul.f32 %v1911, %v1916
    %v1922 = vmul.f32 %v1912, %v1916
    %v1923 = vlaneseq
    %v1924 = vshrl.u32 %v1923, 7
    %v1925 = vsub.s32 1, %v1924
    %v1926 = vrot.slane %v1834, %v1925
    %v1927 = vadd.f32 %v1917, %v1926
    %v1928 = vadd.f32 %v1918, %v1926
    %v1929 = vadd.f32 %v1919, %v1926
    %v1930 = vadd.f32 %v1920, %v1926
    %v1931 = vadd.f32 %v1921, %v1926
    %v1932 = vadd.f32 %v1922, %v1926
    %v1933 = vpack.c.bf16 %v1928, %v1927
    %v1934 = vpack.c.bf16 %v1930, %v1929
    %v1935 = vpack.c.bf16 %v1932, %v1931
    %s1936 = scalar_lea.vmem %s4, 16
    %v1937 = vld [vmem:[%s1936] sm:$0xf]
    %v1938 = vld [vmem:[%s1936 + $0x4] sm:$0xf]
    %v1939 = vld [vmem:[%s1936 + $0x8] sm:$0xf]
    %v1940 = vld [vmem:[%s1936 + $0xc] sm:$0xf]
    %s1941 = scalar_lea.vmem %s5, 1
    %v1942 = vld [vmem:[%s1941] sm:$0x1]
    %v1944 = vlaneseq
    %v1945 = vshrl.u32 %v1944, 7
    %v1946 = vsub.s32 0, %v1945
    %v1947 = vrot.slane %v1942, %v1946
    %v1953 = vunpack.c.l.b16 %v1937
    %v1954 = vunpack.c.l.b16 %v1938
    %v1955 = vunpack.c.l.b16 %v1939
    %v1956 = vunpack.c.l.b16 %v1940
    %v1957 = vpack.c.b16 %v1954, %v1953
    %v1958 = vpack.c.b16 %v1956, %v1955
    %v1962 = vsel %vm199, %v1933, 0
    %v1965 = vsel %vm199, %v1934, 0
    %v1968 = vsel %vm199, %v1935, 0
    %1970 = vmatprep.subr.bf16.mxu0 0
    %1971 = vmatpush1.bf16.msra.mxu0 %v1957
    %1972 = vmatprep.subr.bf16.mxu0 0
    %1973 = vmatpush1.bf16.msra.mxu0 %v1958
    %1974 = vmatprep.subr.bf16.mxu0 0
    %1975 = vmatpush1.bf16.msra.mxu0 0
    %1976 = vmatprep.subr.bf16.mxu0 0
    %1977 = vmatpush1.bf16.msra.mxu0 0
    %1978 = vmatprep.subr.bf16.mxu0 0
    %1979 = vmatpush1.bf16.msra.mxu0 0
    %1980 = vmatprep.subr.bf16.mxu0 0
    %1981 = vmatpush1.bf16.msra.mxu0 0
    %1982 = vmatprep.subr.bf16.mxu0 0
    %1983 = vmatpush1.bf16.msra.mxu0 0
    %1984 = vmatprep.subr.bf16.mxu0 0
    %1985 = vmatpush1.bf16.msra.mxu0 0
    %1986 = vmatprep.subr.bf16.mxu0 0
    %1987 = vmatpush1.bf16.msra.mxu0 0
    %1988 = vmatprep.subr.bf16.mxu0 0
    %1989 = vmatpush1.bf16.msra.mxu0 0
    %1990 = vmatprep.subr.bf16.mxu0 0
    %1991 = vmatpush1.bf16.msra.mxu0 0
    %1992 = vmatprep.subr.bf16.mxu0 0
    %1993 = vmatpush1.bf16.msra.mxu0 0
    %1994 = vmatprep.subr.bf16.mxu0 0
    %1995 = vmatpush1.bf16.msra.mxu0 0
    %1996 = vmatprep.subr.bf16.mxu0 0
    %1997 = vmatpush1.bf16.msra.mxu0 0
    %1998 = vmatprep.subr.bf16.mxu0 0
    %1999 = vmatpush1.bf16.msra.mxu0 0
    %2000 = vmatprep.subr.bf16.mxu0 0
    %2001 = vmatpush1.bf16.msra.mxu0 0
    %2002 = vmatprep.mubr.bf16.mxu0 0
    %2003 = vmatmul.mubr.bf16.gmra.mrb[0].mxu0 %v1962
    %v2004 = vpop.f32.mrb[0].mxu0
    %v2005 = vadd.f32 %v1947, %v2004
    %v2006 = vpop.f32.mrb[0].mxu0
    %v2007 = vpop.f32.mrb[0].mxu0
    %v2008 = vadd.f32 %v1947, %v2007
    %v2009 = vpop.f32.mrb[0].mxu0
    %2010 = vmatprep.mubr.bf16.mxu0 0
    %2011 = vmatmul.mubr.bf16.gmra.mrb[0].mxu0 %v1965
    %v2012 = vpop.f32.mrb[0].mxu0
    %v2013 = vadd.f32 %v1947, %v2012
    %v2014 = vpop.f32.mrb[0].mxu0
    %v2015 = vpop.f32.mrb[0].mxu0
    %v2016 = vadd.f32 %v1947, %v2015
    %v2017 = vpop.f32.mrb[0].mxu0
    %2018 = vmatprep.mubr.bf16.mxu0 0
    %2019 = vmatmul.mubr.bf16.gmra.mrb[0].mxu0 %v1968
    %v2020 = vpop.f32.mrb[0].mxu0
    %v2021 = vadd.f32 %v1947, %v2020
    %v2022 = vpop.f32.mrb[0].mxu0
    %v2023 = vpop.f32.mrb[0].mxu0
    %v2024 = vadd.f32 %v1947, %v2023
    %v2025 = vpop.f32.mrb[0].mxu0
    %2026 = vdwg.mxu0
    %v2027 = vpack.c.bf16 %v2008, %v2005
    %v2028 = vpack.c.bf16 %v2016, %v2013
    %v2029 = vpack.c.bf16 %v2024, %v2021
    %v2030 = vsel %vm402, %v2027, 0
    %v2031 = vsel %vm402, %v2028, 0
    %v2032 = vsel %vm402, %v2029, 0
    %2036 = vrot.lane.b32.xlu0 %v2027, 96
    %v2037 = vpop.permute.xlu0 %2036
    %2038 = vrot.lane.b32.xlu0 %v2028, 96
    %v2039 = vpop.permute.xlu0 %2038
    %2040 = vrot.lane.b32.xlu0 %v2029, 96
    %v2041 = vpop.permute.xlu0 %2040
    %v2043 = vsel %vm199, %v2030, 0
    %v2046 = vsel %vm199, %v2031, 0
    %v2049 = vsel %vm199, %v2032, 0
    %v2052 = vsel %vm199, %v2037, 0
    %v2055 = vsel %vm199, %v2039, 0
    %v2058 = vsel %vm199, %v2041, 0
    %2060 = vmatprep.subr.bf16.mxu0 0
    %2061 = vmatpush1.bf16.xpose.msra.mxu0 %v2052
    %2062 = vmatprep.subr.bf16.mxu0 0
    %2063 = vmatpush1.bf16.xpose.msra.mxu0 %v2055
    %2064 = vmatprep.subr.bf16.mxu0 0
    %2065 = vmatpush1.bf16.xpose.msra.mxu0 %v2058
    %2066 = vmatprep.subr.bf16.mxu0 0
    %2067 = vmatpush1.bf16.xpose.msra.mxu0 0
    %2068 = vmatprep.subr.bf16.mxu0 0
    %2069 = vmatpush1.bf16.xpose.msra.mxu0 0
    %2070 = vmatprep.subr.bf16.mxu0 0
    %2071 = vmatpush1.bf16.xpose.msra.mxu0 0
    %2072 = vmatprep.subr.bf16.mxu0 0
    %2073 = vmatpush1.bf16.xpose.msra.mxu0 0
    %2074 = vmatprep.subr.bf16.mxu0 0
    %2075 = vmatpush1.bf16.xpose.msra.mxu0 0
    %2076 = vmatprep.subr.bf16.mxu0 0
    %2077 = vmatpush1.bf16.xpose.msra.mxu0 0
    %2078 = vmatprep.subr.bf16.mxu0 0
    %2079 = vmatpush1.bf16.xpose.msra.mxu0 0
    %2080 = vmatprep.subr.bf16.mxu0 0
    %2081 = vmatpush1.bf16.xpose.msra.mxu0 0
    %2082 = vmatprep.subr.bf16.mxu0 0
    %2083 = vmatpush1.bf16.xpose.msra.mxu0 0
    %2084 = vmatprep.subr.bf16.mxu0 0
    %2085 = vmatpush1.bf16.xpose.msra.mxu0 0
    %2086 = vmatprep.subr.bf16.mxu0 0
    %2087 = vmatpush1.bf16.xpose.msra.mxu0 0
    %2088 = vmatprep.subr.bf16.mxu0 0
    %2089 = vmatpush1.bf16.xpose.msra.mxu0 0
    %2090 = vmatprep.subr.bf16.mxu0 0
    %2091 = vmatpush1.bf16.xpose.msra.mxu0 0
    %2092 = vmatprep.mubr.bf16.mxu0 0
    %2093 = vmatmul.mubr.bf16.gmra.mrb[0].mxu0 %v2043
    %v2094 = vpop.f32.mrb[0].mxu0
    %v2095 = vadd.f32 %v77, %v2094
    %v2096 = vpop.f32.mrb[0].mxu0
    %v2097 = vpop.f32.mrb[0].mxu0
    %v2098 = vadd.f32 %v78, %v2097
    %v2099 = vpop.f32.mrb[0].mxu0
    %2100 = vmatprep.mubr.bf16.mxu0 0
    %2101 = vmatmul.mubr.bf16.gmra.mrb[0].mxu0 %v2046
    %v2102 = vpop.f32.mrb[0].mxu0
    %v2103 = vadd.f32 %v79, %v2102
    %v2104 = vpop.f32.mrb[0].mxu0
    %v2105 = vpop.f32.mrb[0].mxu0
    %v2106 = vadd.f32 %v80, %v2105
    %v2107 = vpop.f32.mrb[0].mxu0
    %2108 = vmatprep.mubr.bf16.mxu0 0
    %2109 = vmatmul.mubr.bf16.gmra.mrb[0].mxu0 %v2049
    %v2110 = vpop.f32.mrb[0].mxu0
    %v2111 = vadd.f32 %v81, %v2110
    %v2112 = vpop.f32.mrb[0].mxu0
    %v2113 = vpop.f32.mrb[0].mxu0
    %v2114 = vadd.f32 %v82, %v2113
    %v2115 = vpop.f32.mrb[0].mxu0
    %2116 = vdwg.mxu0
    %v2117 = vsel %vm131, %v2095, -inf
    %2118 = vmax.xlane.f32.xlu0 %v2117
    %v2119 = vpop.xlane.xlu0 %2118
    %v2120 = vsel %vm131, %v2098, -inf
    %2121 = vmax.xlane.f32.xlu0 %v2120
    %v2122 = vpop.xlane.xlu0 %2121
    %v2123 = vsel %vm131, %v2103, -inf
    %2124 = vmax.xlane.f32.xlu0 %v2123
    %v2125 = vpop.xlane.xlu0 %2124
    %v2126 = vsel %vm131, %v2106, -inf
    %2127 = vmax.xlane.f32.xlu0 %v2126
    %v2128 = vpop.xlane.xlu0 %2127
    %v2129 = vsel %vm131, %v2111, -inf
    %2130 = vmax.xlane.f32.xlu0 %v2129
    %v2131 = vpop.xlane.xlu0 %2130
    %v2132 = vsel %vm131, %v2114, -inf
    %2133 = vmax.xlane.f32.xlu0 %v2132
    %v2134 = vpop.xlane.xlu0 %2133
    %v2135 = vsub.f32 %v2095, %v2119
    %v2136 = vsub.f32 %v2098, %v2122
    %v2137 = vsub.f32 %v2103, %v2125
    %v2138 = vsub.f32 %v2106, %v2128
    %v2139 = vsub.f32 %v2111, %v2131
    %v2140 = vsub.f32 %v2114, %v2134
    %v2141 = vmul.f32 %v2135, 1.442695
    %v2142 = vpow.pop %v2141
    %v2143 = vmul.f32 %v2136, 1.442695
    %v2144 = vpow.pop %v2143
    %v2145 = vmul.f32 %v2137, 1.442695
    %v2146 = vpow.pop %v2145
    %v2147 = vmul.f32 %v2138, 1.442695
    %v2148 = vpow.pop %v2147
    %v2149 = vmul.f32 %v2139, 1.442695
    %v2150 = vpow.pop %v2149
    %v2151 = vmul.f32 %v2140, 1.442695
    %v2152 = vpow.pop %v2151
    %v2153 = vsel %vm131, %v2142, 0.0
    %2154 = vadd.xlane.f32.xlu0 %v2153
    %v2155 = vpop.xlane.xlu0 %2154
    %v2156 = vsel %vm131, %v2144, 0.0
    %2157 = vadd.xlane.f32.xlu0 %v2156
    %v2158 = vpop.xlane.xlu0 %2157
    %v2159 = vsel %vm131, %v2146, 0.0
    %2160 = vadd.xlane.f32.xlu0 %v2159
    %v2161 = vpop.xlane.xlu0 %2160
    %v2162 = vsel %vm131, %v2148, 0.0
    %2163 = vadd.xlane.f32.xlu0 %v2162
    %v2164 = vpop.xlane.xlu0 %2163
    %v2165 = vsel %vm131, %v2150, 0.0
    %2166 = vadd.xlane.f32.xlu0 %v2165
    %v2167 = vpop.xlane.xlu0 %2166
    %v2168 = vsel %vm131, %v2152, 0.0
    %2169 = vadd.xlane.f32.xlu0 %v2168
    %v2170 = vpop.xlane.xlu0 %2169
    %v2171 = vrcp.pop %v2155
    %v2172 = vrcp.pop %v2158
    %v2173 = vrcp.pop %v2161
    %v2174 = vrcp.pop %v2164
    %v2175 = vrcp.pop %v2167
    %v2176 = vrcp.pop %v2170
    %v2177 = vmul.f32 %v2142, %v2171
    %v2178 = vmul.f32 %v2144, %v2172
    %v2179 = vmul.f32 %v2146, %v2173
    %v2180 = vmul.f32 %v2148, %v2174
    %v2181 = vmul.f32 %v2150, %v2175
    %v2182 = vmul.f32 %v2152, %v2176
    %v2183 = vsel %vm558, %v2027, 0
    %v2184 = vsel %vm558, %v2028, 0
    %v2185 = vsel %vm558, %v2029, 0
    %v2186 = vpack.c.bf16 %v2178, %v2177
    %v2187 = vpack.c.bf16 %v2180, %v2179
    %v2188 = vpack.c.bf16 %v2182, %v2181
    %v2189 = vsel %vm573, %v2027, 0
    %v2190 = vsel %vm573, %v2028, 0
    %v2191 = vsel %vm573, %v2029, 0
    %v2193 = vsel %vm199, %v2189, 0
    %v2196 = vsel %vm199, %v2190, 0
    %v2199 = vsel %vm199, %v2191, 0
    %2201 = vmatprep.subr.bf16.mxu0 0
    %2202 = vmatpush1.bf16.xpose.msra.mxu0 %v2052
    %2203 = vmatprep.subr.bf16.mxu0 0
    %2204 = vmatpush1.bf16.xpose.msra.mxu0 %v2055
    %2205 = vmatprep.subr.bf16.mxu0 0
    %2206 = vmatpush1.bf16.xpose.msra.mxu0 %v2058
    %2207 = vmatprep.subr.bf16.mxu0 0
    %2208 = vmatpush1.bf16.xpose.msra.mxu0 0
    %2209 = vmatprep.subr.bf16.mxu0 0
    %2210 = vmatpush1.bf16.xpose.msra.mxu0 0
    %2211 = vmatprep.subr.bf16.mxu0 0
    %2212 = vmatpush1.bf16.xpose.msra.mxu0 0
    %2213 = vmatprep.subr.bf16.mxu0 0
    %2214 = vmatpush1.bf16.xpose.msra.mxu0 0
    %2215 = vmatprep.subr.bf16.mxu0 0
    %2216 = vmatpush1.bf16.xpose.msra.mxu0 0
    %2217 = vmatprep.subr.bf16.mxu0 0
    %2218 = vmatpush1.bf16.xpose.msra.mxu0 0
    %2219 = vmatprep.subr.bf16.mxu0 0
    %2220 = vmatpush1.bf16.xpose.msra.mxu0 0
    %2221 = vmatprep.subr.bf16.mxu0 0
    %2222 = vmatpush1.bf16.xpose.msra.mxu0 0
    %2223 = vmatprep.subr.bf16.mxu0 0
    %2224 = vmatpush1.bf16.xpose.msra.mxu0 0
    %2225 = vmatprep.subr.bf16.mxu0 0
    %2226 = vmatpush1.bf16.xpose.msra.mxu0 0
    %2227 = vmatprep.subr.bf16.mxu0 0
    %2228 = vmatpush1.bf16.xpose.msra.mxu0 0
    %2229 = vmatprep.subr.bf16.mxu0 0
    %2230 = vmatpush1.bf16.xpose.msra.mxu0 0
    %2231 = vmatprep.subr.bf16.mxu0 0
    %2232 = vmatpush1.bf16.xpose.msra.mxu0 0
    %2233 = vmatprep.mubr.bf16.mxu0 0
    %2234 = vmatmul.mubr.bf16.gmra.mrb[0].mxu0 %v2193
    %v2235 = vpop.f32.mrb[0].mxu0
    %v2236 = vadd.f32 %v77, %v2235
    %v2237 = vpop.f32.mrb[0].mxu0
    %v2238 = vpop.f32.mrb[0].mxu0
    %v2239 = vadd.f32 %v78, %v2238
    %v2240 = vpop.f32.mrb[0].mxu0
    %2241 = vmatprep.mubr.bf16.mxu0 0
    %2242 = vmatmul.mubr.bf16.gmra.mrb[0].mxu0 %v2196
    %v2243 = vpop.f32.mrb[0].mxu0
    %v2244 = vadd.f32 %v79, %v2243
    %v2245 = vpop.f32.mrb[0].mxu0
    %v2246 = vpop.f32.mrb[0].mxu0
    %v2247 = vadd.f32 %v80, %v2246
    %v2248 = vpop.f32.mrb[0].mxu0
    %2249 = vmatprep.mubr.bf16.mxu0 0
    %2250 = vmatmul.mubr.bf16.gmra.mrb[0].mxu0 %v2199
    %v2251 = vpop.f32.mrb[0].mxu0
    %v2252 = vadd.f32 %v81, %v2251
    %v2253 = vpop.f32.mrb[0].mxu0
    %v2254 = vpop.f32.mrb[0].mxu0
    %v2255 = vadd.f32 %v82, %v2254
    %v2256 = vpop.f32.mrb[0].mxu0
    %2257 = vdwg.mxu0
    %v2258 = vsel %vm131, %v2236, -inf
    %2259 = vmax.xlane.f32.xlu0 %v2258
    %v2260 = vpop.xlane.xlu0 %2259
    %v2261 = vsel %vm131, %v2239, -inf
    %2262 = vmax.xlane.f32.xlu0 %v2261
    %v2263 = vpop.xlane.xlu0 %2262
    %v2264 = vsel %vm131, %v2244, -inf
    %2265 = vmax.xlane.f32.xlu0 %v2264
    %v2266 = vpop.xlane.xlu0 %2265
    %v2267 = vsel %vm131, %v2247, -inf
    %2268 = vmax.xlane.f32.xlu0 %v2267
    %v2269 = vpop.xlane.xlu0 %2268
    %v2270 = vsel %vm131, %v2252, -inf
    %2271 = vmax.xlane.f32.xlu0 %v2270
    %v2272 = vpop.xlane.xlu0 %2271
    %v2273 = vsel %vm131, %v2255, -inf
    %2274 = vmax.xlane.f32.xlu0 %v2273
    %v2275 = vpop.xlane.xlu0 %2274
    %v2276 = vsub.f32 %v2236, %v2260
    %v2277 = vsub.f32 %v2239, %v2263
    %v2278 = vsub.f32 %v2244, %v2266
    %v2279 = vsub.f32 %v2247, %v2269
    %v2280 = vsub.f32 %v2252, %v2272
    %v2281 = vsub.f32 %v2255, %v2275
    %v2282 = vmul.f32 %v2276, 1.442695
    %v2283 = vpow.pop %v2282
    %v2284 = vmul.f32 %v2277, 1.442695
    %v2285 = vpow.pop %v2284
    %v2286 = vmul.f32 %v2278, 1.442695
    %v2287 = vpow.pop %v2286
    %v2288 = vmul.f32 %v2279, 1.442695
    %v2289 = vpow.pop %v2288
    %v2290 = vmul.f32 %v2280, 1.442695
    %v2291 = vpow.pop %v2290
    %v2292 = vmul.f32 %v2281, 1.442695
    %v2293 = vpow.pop %v2292
    %v2294 = vsel %vm131, %v2283, 0.0
    %2295 = vadd.xlane.f32.xlu0 %v2294
    %v2296 = vpop.xlane.xlu0 %2295
    %v2297 = vsel %vm131, %v2285, 0.0
    %2298 = vadd.xlane.f32.xlu0 %v2297
    %v2299 = vpop.xlane.xlu0 %2298
    %v2300 = vsel %vm131, %v2287, 0.0
    %2301 = vadd.xlane.f32.xlu0 %v2300
    %v2302 = vpop.xlane.xlu0 %2301
    %v2303 = vsel %vm131, %v2289, 0.0
    %2304 = vadd.xlane.f32.xlu0 %v2303
    %v2305 = vpop.xlane.xlu0 %2304
    %v2306 = vsel %vm131, %v2291, 0.0
    %2307 = vadd.xlane.f32.xlu0 %v2306
    %v2308 = vpop.xlane.xlu0 %2307
    %v2309 = vsel %vm131, %v2293, 0.0
    %2310 = vadd.xlane.f32.xlu0 %v2309
    %v2311 = vpop.xlane.xlu0 %2310
    %v2312 = vrcp.pop %v2296
    %v2313 = vrcp.pop %v2299
    %v2314 = vrcp.pop %v2302
    %v2315 = vrcp.pop %v2305
    %v2316 = vrcp.pop %v2308
    %v2317 = vrcp.pop %v2311
    %v2318 = vmul.f32 %v2283, %v2312
    %v2319 = vmul.f32 %v2285, %v2313
    %v2320 = vmul.f32 %v2287, %v2314
    %v2321 = vmul.f32 %v2289, %v2315
    %v2322 = vmul.f32 %v2291, %v2316
    %v2323 = vmul.f32 %v2293, %v2317
    %v2324 = vsel %vm711, %v2027, 0
    %v2325 = vsel %vm711, %v2028, 0
    %v2326 = vsel %vm711, %v2029, 0
    %v2327 = vpack.c.bf16 %v2319, %v2318
    %v2328 = vpack.c.bf16 %v2321, %v2320
    %v2329 = vpack.c.bf16 %v2323, %v2322
    %2333 = vrot.lane.b32.xlu0 %v2324, 64
    %v2334 = vpop.permute.xlu0 %2333
    %2335 = vrot.lane.b32.xlu0 %v2325, 64
    %v2336 = vpop.permute.xlu0 %2335
    %2337 = vrot.lane.b32.xlu0 %v2326, 64
    %v2338 = vpop.permute.xlu0 %2337
    %v2343 = vsel %vm131, %v2327, 0
    %v2346 = vsel %vm131, %v2328, 0
    %v2349 = vsel %vm131, %v2329, 0
    %2351 = vmatprep.subr.bf16.mxu0 0
    %2352 = vmatpush1.bf16.msra.mxu0 %v2334
    %2353 = vmatprep.subr.bf16.mxu0 0
    %2354 = vmatpush1.bf16.msra.mxu0 %v2336
    %2355 = vmatprep.subr.bf16.mxu0 0
    %2356 = vmatpush1.bf16.msra.mxu0 %v2338
    %2357 = vmatprep.subr.bf16.mxu0 0
    %2358 = vmatpush1.bf16.msra.mxu0 0
    %2359 = vmatprep.subr.bf16.mxu0 0
    %2360 = vmatpush1.bf16.msra.mxu0 0
    %2361 = vmatprep.subr.bf16.mxu0 0
    %2362 = vmatpush1.bf16.msra.mxu0 0
    %2363 = vmatprep.subr.bf16.mxu0 0
    %2364 = vmatpush1.bf16.msra.mxu0 0
    %2365 = vmatprep.subr.bf16.mxu0 0
    %2366 = vmatpush1.bf16.msra.mxu0 0
    %2367 = vmatprep.subr.bf16.mxu0 0
    %2368 = vmatpush1.bf16.msra.mxu0 0
    %2369 = vmatprep.subr.bf16.mxu0 0
    %2370 = vmatpush1.bf16.msra.mxu0 0
    %2371 = vmatprep.subr.bf16.mxu0 0
    %2372 = vmatpush1.bf16.msra.mxu0 0
    %2373 = vmatprep.subr.bf16.mxu0 0
    %2374 = vmatpush1.bf16.msra.mxu0 0
    %2375 = vmatprep.subr.bf16.mxu0 0
    %2376 = vmatpush1.bf16.msra.mxu0 0
    %2377 = vmatprep.subr.bf16.mxu0 0
    %2378 = vmatpush1.bf16.msra.mxu0 0
    %2379 = vmatprep.subr.bf16.mxu0 0
    %2380 = vmatpush1.bf16.msra.mxu0 0
    %2381 = vmatprep.subr.bf16.mxu0 0
    %2382 = vmatpush1.bf16.msra.mxu0 0
    %2383 = vmatprep.mubr.bf16.mxu0 0
    %2384 = vmatmul.mubr.bf16.gmra.mrb[0].mxu0 %v2343
    %v2385 = vpop.f32.mrb[0].mxu0
    %v2386 = vadd.f32 0.0, %v2385
    %v2387 = vpop.f32.mrb[0].mxu0
    %v2388 = vpop.f32.mrb[0].mxu0
    %v2389 = vadd.f32 0.0, %v2388
    %v2390 = vpop.f32.mrb[0].mxu0
    %2391 = vmatprep.mubr.bf16.mxu0 0
    %2392 = vmatmul.mubr.bf16.gmra.mrb[0].mxu0 %v2346
    %v2393 = vpop.f32.mrb[0].mxu0
    %v2394 = vadd.f32 0.0, %v2393
    %v2395 = vpop.f32.mrb[0].mxu0
    %v2396 = vpop.f32.mrb[0].mxu0
    %v2397 = vadd.f32 0.0, %v2396
    %v2398 = vpop.f32.mrb[0].mxu0
    %2399 = vmatprep.mubr.bf16.mxu0 0
    %2400 = vmatmul.mubr.bf16.gmra.mrb[0].mxu0 %v2349
    %v2401 = vpop.f32.mrb[0].mxu0
    %v2402 = vadd.f32 0.0, %v2401
    %v2403 = vpop.f32.mrb[0].mxu0
    %v2404 = vpop.f32.mrb[0].mxu0
    %v2405 = vadd.f32 0.0, %v2404
    %v2406 = vpop.f32.mrb[0].mxu0
    %2407 = vdwg.mxu0
    %2411 = vrot.lane.b32.xlu0 %v2183, 64
    %v2412 = vpop.permute.xlu0 %2411
    %2413 = vrot.lane.b32.xlu0 %v2184, 64
    %v2414 = vpop.permute.xlu0 %2413
    %2415 = vrot.lane.b32.xlu0 %v2185, 64
    %v2416 = vpop.permute.xlu0 %2415
    %v2421 = vsel %vm131, %v2186, 0
    %v2424 = vsel %vm131, %v2187, 0
    %v2427 = vsel %vm131, %v2188, 0
    %2429 = vmatprep.subr.bf16.mxu0 0
    %2430 = vmatpush1.bf16.msra.mxu0 %v2412
    %2431 = vmatprep.subr.bf16.mxu0 0
    %2432 = vmatpush1.bf16.msra.mxu0 %v2414
    %2433 = vmatprep.subr.bf16.mxu0 0
    %2434 = vmatpush1.bf16.msra.mxu0 %v2416
    %2435 = vmatprep.subr.bf16.mxu0 0
    %2436 = vmatpush1.bf16.msra.mxu0 0
    %2437 = vmatprep.subr.bf16.mxu0 0
    %2438 = vmatpush1.bf16.msra.mxu0 0
    %2439 = vmatprep.subr.bf16.mxu0 0
    %2440 = vmatpush1.bf16.msra.mxu0 0
    %2441 = vmatprep.subr.bf16.mxu0 0
    %2442 = vmatpush1.bf16.msra.mxu0 0
    %2443 = vmatprep.subr.bf16.mxu0 0
    %2444 = vmatpush1.bf16.msra.mxu0 0
    %2445 = vmatprep.subr.bf16.mxu0 0
    %2446 = vmatpush1.bf16.msra.mxu0 0
    %2447 = vmatprep.subr.bf16.mxu0 0
    %2448 = vmatpush1.bf16.msra.mxu0 0
    %2449 = vmatprep.subr.bf16.mxu0 0
    %2450 = vmatpush1.bf16.msra.mxu0 0
    %2451 = vmatprep.subr.bf16.mxu0 0
    %2452 = vmatpush1.bf16.msra.mxu0 0
    %2453 = vmatprep.subr.bf16.mxu0 0
    %2454 = vmatpush1.bf16.msra.mxu0 0
    %2455 = vmatprep.subr.bf16.mxu0 0
    %2456 = vmatpush1.bf16.msra.mxu0 0
    %2457 = vmatprep.subr.bf16.mxu0 0
    %2458 = vmatpush1.bf16.msra.mxu0 0
    %2459 = vmatprep.subr.bf16.mxu0 0
    %2460 = vmatpush1.bf16.msra.mxu0 0
    %2461 = vmatprep.mubr.bf16.mxu0 0
    %2462 = vmatmul.mubr.bf16.gmra.mrb[0].mxu0 %v2421
    %v2463 = vpop.f32.mrb[0].mxu0
    %v2464 = vadd.f32 %v2386, %v2463
    %v2465 = vpop.f32.mrb[0].mxu0
    %v2466 = vpop.f32.mrb[0].mxu0
    %v2467 = vadd.f32 %v2389, %v2466
    %v2468 = vpop.f32.mrb[0].mxu0
    %2469 = vmatprep.mubr.bf16.mxu0 0
    %2470 = vmatmul.mubr.bf16.gmra.mrb[0].mxu0 %v2424
    %v2471 = vpop.f32.mrb[0].mxu0
    %v2472 = vadd.f32 %v2394, %v2471
    %v2473 = vpop.f32.mrb[0].mxu0
    %v2474 = vpop.f32.mrb[0].mxu0
    %v2475 = vadd.f32 %v2397, %v2474
    %v2476 = vpop.f32.mrb[0].mxu0
    %2477 = vmatprep.mubr.bf16.mxu0 0
    %2478 = vmatmul.mubr.bf16.gmra.mrb[0].mxu0 %v2427
    %v2479 = vpop.f32.mrb[0].mxu0
    %v2480 = vadd.f32 %v2402, %v2479
    %v2481 = vpop.f32.mrb[0].mxu0
    %v2482 = vpop.f32.mrb[0].mxu0
    %v2483 = vadd.f32 %v2405, %v2482
    %v2484 = vpop.f32.mrb[0].mxu0
    %2485 = vdwg.mxu0
    %v2486 = vsel %vm882, %v2027, 0
    %v2487 = vsel %vm882, %v2028, 0
    %v2488 = vsel %vm882, %v2029, 0
    %v2490 = vsel %vm199, %v2486, 0
    %v2493 = vsel %vm199, %v2487, 0
    %v2496 = vsel %vm199, %v2488, 0
    %2498 = vmatprep.subr.bf16.mxu0 0
    %2499 = vmatpush1.bf16.xpose.msra.mxu0 %v2052
    %2500 = vmatprep.subr.bf16.mxu0 0
    %2501 = vmatpush1.bf16.xpose.msra.mxu0 %v2055
    %2502 = vmatprep.subr.bf16.mxu0 0
    %2503 = vmatpush1.bf16.xpose.msra.mxu0 %v2058
    %2504 = vmatprep.subr.bf16.mxu0 0
    %2505 = vmatpush1.bf16.xpose.msra.mxu0 0
    %2506 = vmatprep.subr.bf16.mxu0 0
    %2507 = vmatpush1.bf16.xpose.msra.mxu0 0
    %2508 = vmatprep.subr.bf16.mxu0 0
    %2509 = vmatpush1.bf16.xpose.msra.mxu0 0
    %2510 = vmatprep.subr.bf16.mxu0 0
    %2511 = vmatpush1.bf16.xpose.msra.mxu0 0
    %2512 = vmatprep.subr.bf16.mxu0 0
    %2513 = vmatpush1.bf16.xpose.msra.mxu0 0
    %2514 = vmatprep.subr.bf16.mxu0 0
    %2515 = vmatpush1.bf16.xpose.msra.mxu0 0
    %2516 = vmatprep.subr.bf16.mxu0 0
    %2517 = vmatpush1.bf16.xpose.msra.mxu0 0
    %2518 = vmatprep.subr.bf16.mxu0 0
    %2519 = vmatpush1.bf16.xpose.msra.mxu0 0
    %2520 = vmatprep.subr.bf16.mxu0 0
    %2521 = vmatpush1.bf16.xpose.msra.mxu0 0
    %2522 = vmatprep.subr.bf16.mxu0 0
    %2523 = vmatpush1.bf16.xpose.msra.mxu0 0
    %2524 = vmatprep.subr.bf16.mxu0 0
    %2525 = vmatpush1.bf16.xpose.msra.mxu0 0
    %2526 = vmatprep.subr.bf16.mxu0 0
    %2527 = vmatpush1.bf16.xpose.msra.mxu0 0
    %2528 = vmatprep.subr.bf16.mxu0 0
    %2529 = vmatpush1.bf16.xpose.msra.mxu0 0
    %2530 = vmatprep.mubr.bf16.mxu0 0
    %2531 = vmatmul.mubr.bf16.gmra.mrb[0].mxu0 %v2490
    %v2532 = vpop.f32.mrb[0].mxu0
    %v2533 = vadd.f32 %v77, %v2532
    %v2534 = vpop.f32.mrb[0].mxu0
    %v2535 = vpop.f32.mrb[0].mxu0
    %v2536 = vadd.f32 %v78, %v2535
    %v2537 = vpop.f32.mrb[0].mxu0
    %2538 = vmatprep.mubr.bf16.mxu0 0
    %2539 = vmatmul.mubr.bf16.gmra.mrb[0].mxu0 %v2493
    %v2540 = vpop.f32.mrb[0].mxu0
    %v2541 = vadd.f32 %v79, %v2540
    %v2542 = vpop.f32.mrb[0].mxu0
    %v2543 = vpop.f32.mrb[0].mxu0
    %v2544 = vadd.f32 %v80, %v2543
    %v2545 = vpop.f32.mrb[0].mxu0
    %2546 = vmatprep.mubr.bf16.mxu0 0
    %2547 = vmatmul.mubr.bf16.gmra.mrb[0].mxu0 %v2496
    %v2548 = vpop.f32.mrb[0].mxu0
    %v2549 = vadd.f32 %v81, %v2548
    %v2550 = vpop.f32.mrb[0].mxu0
    %v2551 = vpop.f32.mrb[0].mxu0
    %v2552 = vadd.f32 %v82, %v2551
    %v2553 = vpop.f32.mrb[0].mxu0
    %2554 = vdwg.mxu0
    %v2555 = vsel %vm131, %v2533, -inf
    %2556 = vmax.xlane.f32.xlu0 %v2555
    %v2557 = vpop.xlane.xlu0 %2556
    %v2558 = vsel %vm131, %v2536, -inf
    %2559 = vmax.xlane.f32.xlu0 %v2558
    %v2560 = vpop.xlane.xlu0 %2559
    %v2561 = vsel %vm131, %v2541, -inf
    %2562 = vmax.xlane.f32.xlu0 %v2561
    %v2563 = vpop.xlane.xlu0 %2562
    %v2564 = vsel %vm131, %v2544, -inf
    %2565 = vmax.xlane.f32.xlu0 %v2564
    %v2566 = vpop.xlane.xlu0 %2565
    %v2567 = vsel %vm131, %v2549, -inf
    %2568 = vmax.xlane.f32.xlu0 %v2567
    %v2569 = vpop.xlane.xlu0 %2568
    %v2570 = vsel %vm131, %v2552, -inf
    %2571 = vmax.xlane.f32.xlu0 %v2570
    %v2572 = vpop.xlane.xlu0 %2571
    %v2573 = vsub.f32 %v2533, %v2557
    %v2574 = vsub.f32 %v2536, %v2560
    %v2575 = vsub.f32 %v2541, %v2563
    %v2576 = vsub.f32 %v2544, %v2566
    %v2577 = vsub.f32 %v2549, %v2569
    %v2578 = vsub.f32 %v2552, %v2572
    %v2579 = vmul.f32 %v2573, 1.442695
    %v2580 = vpow.pop %v2579
    %v2581 = vmul.f32 %v2574, 1.442695
    %v2582 = vpow.pop %v2581
    %v2583 = vmul.f32 %v2575, 1.442695
    %v2584 = vpow.pop %v2583
    %v2585 = vmul.f32 %v2576, 1.442695
    %v2586 = vpow.pop %v2585
    %v2587 = vmul.f32 %v2577, 1.442695
    %v2588 = vpow.pop %v2587
    %v2589 = vmul.f32 %v2578, 1.442695
    %v2590 = vpow.pop %v2589
    %v2591 = vsel %vm131, %v2580, 0.0
    %2592 = vadd.xlane.f32.xlu0 %v2591
    %v2593 = vpop.xlane.xlu0 %2592
    %v2594 = vsel %vm131, %v2582, 0.0
    %2595 = vadd.xlane.f32.xlu0 %v2594
    %v2596 = vpop.xlane.xlu0 %2595
    %v2597 = vsel %vm131, %v2584, 0.0
    %2598 = vadd.xlane.f32.xlu0 %v2597
    %v2599 = vpop.xlane.xlu0 %2598
    %v2600 = vsel %vm131, %v2586, 0.0
    %2601 = vadd.xlane.f32.xlu0 %v2600
    %v2602 = vpop.xlane.xlu0 %2601
    %v2603 = vsel %vm131, %v2588, 0.0
    %2604 = vadd.xlane.f32.xlu0 %v2603
    %v2605 = vpop.xlane.xlu0 %2604
    %v2606 = vsel %vm131, %v2590, 0.0
    %2607 = vadd.xlane.f32.xlu0 %v2606
    %v2608 = vpop.xlane.xlu0 %2607
    %v2609 = vrcp.pop %v2593
    %v2610 = vrcp.pop %v2596
    %v2611 = vrcp.pop %v2599
    %v2612 = vrcp.pop %v2602
    %v2613 = vrcp.pop %v2605
    %v2614 = vrcp.pop %v2608
    %v2615 = vmul.f32 %v2580, %v2609
    %v2616 = vmul.f32 %v2582, %v2610
    %v2617 = vmul.f32 %v2584, %v2611
    %v2618 = vmul.f32 %v2586, %v2612
    %v2619 = vmul.f32 %v2588, %v2613
    %v2620 = vmul.f32 %v2590, %v2614
    %v2621 = vsel %vm1020, %v2027, 0
    %v2622 = vsel %vm1020, %v2028, 0
    %v2623 = vsel %vm1020, %v2029, 0
    %v2624 = vpack.c.bf16 %v2616, %v2615
    %v2625 = vpack.c.bf16 %v2618, %v2617
    %v2626 = vpack.c.bf16 %v2620, %v2619
    %2630 = vrot.lane.b32.xlu0 %v2621, 64
    %v2631 = vpop.permute.xlu0 %2630
    %2632 = vrot.lane.b32.xlu0 %v2622, 64
    %v2633 = vpop.permute.xlu0 %2632
    %2634 = vrot.lane.b32.xlu0 %v2623, 64
    %v2635 = vpop.permute.xlu0 %2634
    %v2640 = vsel %vm131, %v2624, 0
    %v2643 = vsel %vm131, %v2625, 0
    %v2646 = vsel %vm131, %v2626, 0
    %2648 = vmatprep.subr.bf16.mxu0 0
    %2649 = vmatpush1.bf16.msra.mxu0 %v2631
    %2650 = vmatprep.subr.bf16.mxu0 0
    %2651 = vmatpush1.bf16.msra.mxu0 %v2633
    %2652 = vmatprep.subr.bf16.mxu0 0
    %2653 = vmatpush1.bf16.msra.mxu0 %v2635
    %2654 = vmatprep.subr.bf16.mxu0 0
    %2655 = vmatpush1.bf16.msra.mxu0 0
    %2656 = vmatprep.subr.bf16.mxu0 0
    %2657 = vmatpush1.bf16.msra.mxu0 0
    %2658 = vmatprep.subr.bf16.mxu0 0
    %2659 = vmatpush1.bf16.msra.mxu0 0
    %2660 = vmatprep.subr.bf16.mxu0 0
    %2661 = vmatpush1.bf16.msra.mxu0 0
    %2662 = vmatprep.subr.bf16.mxu0 0
    %2663 = vmatpush1.bf16.msra.mxu0 0
    %2664 = vmatprep.subr.bf16.mxu0 0
    %2665 = vmatpush1.bf16.msra.mxu0 0
    %2666 = vmatprep.subr.bf16.mxu0 0
    %2667 = vmatpush1.bf16.msra.mxu0 0
    %2668 = vmatprep.subr.bf16.mxu0 0
    %2669 = vmatpush1.bf16.msra.mxu0 0
    %2670 = vmatprep.subr.bf16.mxu0 0
    %2671 = vmatpush1.bf16.msra.mxu0 0
    %2672 = vmatprep.subr.bf16.mxu0 0
    %2673 = vmatpush1.bf16.msra.mxu0 0
    %2674 = vmatprep.subr.bf16.mxu0 0
    %2675 = vmatpush1.bf16.msra.mxu0 0
    %2676 = vmatprep.subr.bf16.mxu0 0
    %2677 = vmatpush1.bf16.msra.mxu0 0
    %2678 = vmatprep.subr.bf16.mxu0 0
    %2679 = vmatpush1.bf16.msra.mxu0 0
    %2680 = vmatprep.mubr.bf16.mxu0 0
    %2681 = vmatmul.mubr.bf16.gmra.mrb[0].mxu0 %v2640
    %v2682 = vpop.f32.mrb[0].mxu0
    %v2683 = vadd.f32 0.0, %v2682
    %v2684 = vpop.f32.mrb[0].mxu0
    %v2685 = vpop.f32.mrb[0].mxu0
    %v2686 = vadd.f32 0.0, %v2685
    %v2687 = vpop.f32.mrb[0].mxu0
    %2688 = vmatprep.mubr.bf16.mxu0 0
    %2689 = vmatmul.mubr.bf16.gmra.mrb[0].mxu0 %v2643
    %v2690 = vpop.f32.mrb[0].mxu0
    %v2691 = vadd.f32 0.0, %v2690
    %v2692 = vpop.f32.mrb[0].mxu0
    %v2693 = vpop.f32.mrb[0].mxu0
    %v2694 = vadd.f32 0.0, %v2693
    %v2695 = vpop.f32.mrb[0].mxu0
    %2696 = vmatprep.mubr.bf16.mxu0 0
    %2697 = vmatmul.mubr.bf16.gmra.mrb[0].mxu0 %v2646
    %v2698 = vpop.f32.mrb[0].mxu0
    %v2699 = vadd.f32 0.0, %v2698
    %v2700 = vpop.f32.mrb[0].mxu0
    %v2701 = vpop.f32.mrb[0].mxu0
    %v2702 = vadd.f32 0.0, %v2701
    %v2703 = vpop.f32.mrb[0].mxu0
    %2704 = vdwg.mxu0
    %v2705 = vadd.f32 %v2464, %v2683
    %v2706 = vadd.f32 %v2467, %v2686
    %v2707 = vadd.f32 %v2472, %v2691
    %v2708 = vadd.f32 %v2475, %v2694
    %v2709 = vadd.f32 %v2480, %v2699
    %v2710 = vadd.f32 %v2483, %v2702
    %v2711 = vsel %vm1119, %v2027, 0
    %v2712 = vsel %vm1119, %v2028, 0
    %v2713 = vsel %vm1119, %v2029, 0
    %v2715 = vsel %vm199, %v2711, 0
    %v2718 = vsel %vm199, %v2712, 0
    %v2721 = vsel %vm199, %v2713, 0
    %2723 = vmatprep.subr.bf16.mxu0 0
    %2724 = vmatpush1.bf16.xpose.msra.mxu0 %v2052
    %2725 = vmatprep.subr.bf16.mxu0 0
    %2726 = vmatpush1.bf16.xpose.msra.mxu0 %v2055
    %2727 = vmatprep.subr.bf16.mxu0 0
    %2728 = vmatpush1.bf16.xpose.msra.mxu0 %v2058
    %2729 = vmatprep.subr.bf16.mxu0 0
    %2730 = vmatpush1.bf16.xpose.msra.mxu0 0
    %2731 = vmatprep.subr.bf16.mxu0 0
    %2732 = vmatpush1.bf16.xpose.msra.mxu0 0
    %2733 = vmatprep.subr.bf16.mxu0 0
    %2734 = vmatpush1.bf16.xpose.msra.mxu0 0
    %2735 = vmatprep.subr.bf16.mxu0 0
    %2736 = vmatpush1.bf16.xpose.msra.mxu0 0
    %2737 = vmatprep.subr.bf16.mxu0 0
    %2738 = vmatpush1.bf16.xpose.msra.mxu0 0
    %2739 = vmatprep.subr.bf16.mxu0 0
    %2740 = vmatpush1.bf16.xpose.msra.mxu0 0
    %2741 = vmatprep.subr.bf16.mxu0 0
    %2742 = vmatpush1.bf16.xpose.msra.mxu0 0
    %2743 = vmatprep.subr.bf16.mxu0 0
    %2744 = vmatpush1.bf16.xpose.msra.mxu0 0
    %2745 = vmatprep.subr.bf16.mxu0 0
    %2746 = vmatpush1.bf16.xpose.msra.mxu0 0
    %2747 = vmatprep.subr.bf16.mxu0 0
    %2748 = vmatpush1.bf16.xpose.msra.mxu0 0
    %2749 = vmatprep.subr.bf16.mxu0 0
    %2750 = vmatpush1.bf16.xpose.msra.mxu0 0
    %2751 = vmatprep.subr.bf16.mxu0 0
    %2752 = vmatpush1.bf16.xpose.msra.mxu0 0
    %2753 = vmatprep.subr.bf16.mxu0 0
    %2754 = vmatpush1.bf16.xpose.msra.mxu0 0
    %2755 = vmatprep.mubr.bf16.mxu0 0
    %2756 = vmatmul.mubr.bf16.gmra.mrb[0].mxu0 %v2715
    %v2757 = vpop.f32.mrb[0].mxu0
    %v2758 = vadd.f32 %v77, %v2757
    %v2759 = vpop.f32.mrb[0].mxu0
    %v2760 = vpop.f32.mrb[0].mxu0
    %v2761 = vadd.f32 %v78, %v2760
    %v2762 = vpop.f32.mrb[0].mxu0
    %2763 = vmatprep.mubr.bf16.mxu0 0
    %2764 = vmatmul.mubr.bf16.gmra.mrb[0].mxu0 %v2718
    %v2765 = vpop.f32.mrb[0].mxu0
    %v2766 = vadd.f32 %v79, %v2765
    %v2767 = vpop.f32.mrb[0].mxu0
    %v2768 = vpop.f32.mrb[0].mxu0
    %v2769 = vadd.f32 %v80, %v2768
    %v2770 = vpop.f32.mrb[0].mxu0
    %2771 = vmatprep.mubr.bf16.mxu0 0
    %2772 = vmatmul.mubr.bf16.gmra.mrb[0].mxu0 %v2721
    %v2773 = vpop.f32.mrb[0].mxu0
    %v2774 = vadd.f32 %v81, %v2773
    %v2775 = vpop.f32.mrb[0].mxu0
    %v2776 = vpop.f32.mrb[0].mxu0
    %v2777 = vadd.f32 %v82, %v2776
    %v2778 = vpop.f32.mrb[0].mxu0
    %2779 = vdwg.mxu0
    %v2780 = vsel %vm131, %v2758, -inf
    %2781 = vmax.xlane.f32.xlu0 %v2780
    %v2782 = vpop.xlane.xlu0 %2781
    %v2783 = vsel %vm131, %v2761, -inf
    %2784 = vmax.xlane.f32.xlu0 %v2783
    %v2785 = vpop.xlane.xlu0 %2784
    %v2786 = vsel %vm131, %v2766, -inf
    %2787 = vmax.xlane.f32.xlu0 %v2786
    %v2788 = vpop.xlane.xlu0 %2787
    %v2789 = vsel %vm131, %v2769, -inf
    %2790 = vmax.xlane.f32.xlu0 %v2789
    %v2791 = vpop.xlane.xlu0 %2790
    %v2792 = vsel %vm131, %v2774, -inf
    %2793 = vmax.xlane.f32.xlu0 %v2792
    %v2794 = vpop.xlane.xlu0 %2793
    %v2795 = vsel %vm131, %v2777, -inf
    %2796 = vmax.xlane.f32.xlu0 %v2795
    %v2797 = vpop.xlane.xlu0 %2796
    %v2798 = vsub.f32 %v2758, %v2782
    %v2799 = vsub.f32 %v2761, %v2785
    %v2800 = vsub.f32 %v2766, %v2788
    %v2801 = vsub.f32 %v2769, %v2791
    %v2802 = vsub.f32 %v2774, %v2794
    %v2803 = vsub.f32 %v2777, %v2797
    %v2804 = vmul.f32 %v2798, 1.442695
    %v2805 = vpow.pop %v2804
    %v2806 = vmul.f32 %v2799, 1.442695
    %v2807 = vpow.pop %v2806
    %v2808 = vmul.f32 %v2800, 1.442695
    %v2809 = vpow.pop %v2808
    %v2810 = vmul.f32 %v2801, 1.442695
    %v2811 = vpow.pop %v2810
    %v2812 = vmul.f32 %v2802, 1.442695
    %v2813 = vpow.pop %v2812
    %v2814 = vmul.f32 %v2803, 1.442695
    %v2815 = vpow.pop %v2814
    %v2816 = vsel %vm131, %v2805, 0.0
    %2817 = vadd.xlane.f32.xlu0 %v2816
    %v2818 = vpop.xlane.xlu0 %2817
    %v2819 = vsel %vm131, %v2807, 0.0
    %2820 = vadd.xlane.f32.xlu0 %v2819
    %v2821 = vpop.xlane.xlu0 %2820
    %v2822 = vsel %vm131, %v2809, 0.0
    %2823 = vadd.xlane.f32.xlu0 %v2822
    %v2824 = vpop.xlane.xlu0 %2823
    %v2825 = vsel %vm131, %v2811, 0.0
    %2826 = vadd.xlane.f32.xlu0 %v2825
    %v2827 = vpop.xlane.xlu0 %2826
    %v2828 = vsel %vm131, %v2813, 0.0
    %2829 = vadd.xlane.f32.xlu0 %v2828
    %v2830 = vpop.xlane.xlu0 %2829
    %v2831 = vsel %vm131, %v2815, 0.0
    %2832 = vadd.xlane.f32.xlu0 %v2831
    %v2833 = vpop.xlane.xlu0 %2832
    %v2834 = vrcp.pop %v2818
    %v2835 = vrcp.pop %v2821
    %v2836 = vrcp.pop %v2824
    %v2837 = vrcp.pop %v2827
    %v2838 = vrcp.pop %v2830
    %v2839 = vrcp.pop %v2833
    %v2840 = vmul.f32 %v2805, %v2834
    %v2841 = vmul.f32 %v2807, %v2835
    %v2842 = vmul.f32 %v2809, %v2836
    %v2843 = vmul.f32 %v2811, %v2837
    %v2844 = vmul.f32 %v2813, %v2838
    %v2845 = vmul.f32 %v2815, %v2839
    %v2846 = vsel %vm1257, %v2027, 0
    %v2847 = vsel %vm1257, %v2028, 0
    %v2848 = vsel %vm1257, %v2029, 0
    %v2849 = vpack.c.bf16 %v2841, %v2840
    %v2850 = vpack.c.bf16 %v2843, %v2842
    %v2851 = vpack.c.bf16 %v2845, %v2844
    %2855 = vrot.lane.b32.xlu0 %v2846, 64
    %v2856 = vpop.permute.xlu0 %2855
    %2857 = vrot.lane.b32.xlu0 %v2847, 64
    %v2858 = vpop.permute.xlu0 %2857
    %2859 = vrot.lane.b32.xlu0 %v2848, 64
    %v2860 = vpop.permute.xlu0 %2859
    %v2865 = vsel %vm131, %v2849, 0
    %v2868 = vsel %vm131, %v2850, 0
    %v2871 = vsel %vm131, %v2851, 0
    %2873 = vmatprep.subr.bf16.mxu0 0
    %2874 = vmatpush1.bf16.msra.mxu0 %v2856
    %2875 = vmatprep.subr.bf16.mxu0 0
    %2876 = vmatpush1.bf16.msra.mxu0 %v2858
    %2877 = vmatprep.subr.bf16.mxu0 0
    %2878 = vmatpush1.bf16.msra.mxu0 %v2860
    %2879 = vmatprep.subr.bf16.mxu0 0
    %2880 = vmatpush1.bf16.msra.mxu0 0
    %2881 = vmatprep.subr.bf16.mxu0 0
    %2882 = vmatpush1.bf16.msra.mxu0 0
    %2883 = vmatprep.subr.bf16.mxu0 0
    %2884 = vmatpush1.bf16.msra.mxu0 0
    %2885 = vmatprep.subr.bf16.mxu0 0
    %2886 = vmatpush1.bf16.msra.mxu0 0
    %2887 = vmatprep.subr.bf16.mxu0 0
    %2888 = vmatpush1.bf16.msra.mxu0 0
    %2889 = vmatprep.subr.bf16.mxu0 0
    %2890 = vmatpush1.bf16.msra.mxu0 0
    %2891 = vmatprep.subr.bf16.mxu0 0
    %2892 = vmatpush1.bf16.msra.mxu0 0
    %2893 = vmatprep.subr.bf16.mxu0 0
    %2894 = vmatpush1.bf16.msra.mxu0 0
    %2895 = vmatprep.subr.bf16.mxu0 0
    %2896 = vmatpush1.bf16.msra.mxu0 0
    %2897 = vmatprep.subr.bf16.mxu0 0
    %2898 = vmatpush1.bf16.msra.mxu0 0
    %2899 = vmatprep.subr.bf16.mxu0 0
    %2900 = vmatpush1.bf16.msra.mxu0 0
    %2901 = vmatprep.subr.bf16.mxu0 0
    %2902 = vmatpush1.bf16.msra.mxu0 0
    %2903 = vmatprep.subr.bf16.mxu0 0
    %2904 = vmatpush1.bf16.msra.mxu0 0
    %2905 = vmatprep.mubr.bf16.mxu0 0
    %2906 = vmatmul.mubr.bf16.gmra.mrb[0].mxu0 %v2865
    %v2907 = vpop.f32.mrb[0].mxu0
    %v2908 = vadd.f32 0.0, %v2907
    %v2909 = vpop.f32.mrb[0].mxu0
    %v2910 = vpop.f32.mrb[0].mxu0
    %v2911 = vadd.f32 0.0, %v2910
    %v2912 = vpop.f32.mrb[0].mxu0
    %2913 = vmatprep.mubr.bf16.mxu0 0
    %2914 = vmatmul.mubr.bf16.gmra.mrb[0].mxu0 %v2868
    %v2915 = vpop.f32.mrb[0].mxu0
    %v2916 = vadd.f32 0.0, %v2915
    %v2917 = vpop.f32.mrb[0].mxu0
    %v2918 = vpop.f32.mrb[0].mxu0
    %v2919 = vadd.f32 0.0, %v2918
    %v2920 = vpop.f32.mrb[0].mxu0
    %2921 = vmatprep.mubr.bf16.mxu0 0
    %2922 = vmatmul.mubr.bf16.gmra.mrb[0].mxu0 %v2871
    %v2923 = vpop.f32.mrb[0].mxu0
    %v2924 = vadd.f32 0.0, %v2923
    %v2925 = vpop.f32.mrb[0].mxu0
    %v2926 = vpop.f32.mrb[0].mxu0
    %v2927 = vadd.f32 0.0, %v2926
    %v2928 = vpop.f32.mrb[0].mxu0
    %2929 = vdwg.mxu0
    %v2930 = vadd.f32 %v2705, %v2908
    %v2931 = vadd.f32 %v2706, %v2911
    %v2932 = vadd.f32 %v2707, %v2916
    %v2933 = vadd.f32 %v2708, %v2919
    %v2934 = vadd.f32 %v2709, %v2924
    %v2935 = vadd.f32 %v2710, %v2927
    %v2936 = vpack.c.bf16 %v2931, %v2930
    %v2937 = vpack.c.bf16 %v2933, %v2932
    %v2938 = vpack.c.bf16 %v2935, %v2934
    %s2939 = scalar_lea.vmem %s6, 16
    %v2940 = vld [vmem:[%s2939] sm:$0xf]
    %v2941 = vld [vmem:[%s2939 + $0x4] sm:$0xf]
    %v2942 = vld [vmem:[%s2939 + $0x8] sm:$0xf]
    %v2943 = vld [vmem:[%s2939 + $0xc] sm:$0xf]
    %v2948 = vunpack.c.l.b16 %v2940
    %v2949 = vunpack.c.l.b16 %v2941
    %v2950 = vunpack.c.l.b16 %v2942
    %v2951 = vunpack.c.l.b16 %v2943
    %v2952 = vpack.c.b16 %v2949, %v2948
    %v2953 = vpack.c.b16 %v2951, %v2950
    %v2957 = vsel %vm199, %v2936, 0
    %v2960 = vsel %vm199, %v2937, 0
    %v2963 = vsel %vm199, %v2938, 0
    %2965 = vmatprep.subr.bf16.mxu0 0
    %2966 = vmatpush1.bf16.msra.mxu0 %v2952
    %2967 = vmatprep.subr.bf16.mxu0 0
    %2968 = vmatpush1.bf16.msra.mxu0 %v2953
    %2969 = vmatprep.subr.bf16.mxu0 0
    %2970 = vmatpush1.bf16.msra.mxu0 0
    %2971 = vmatprep.subr.bf16.mxu0 0
    %2972 = vmatpush1.bf16.msra.mxu0 0
    %2973 = vmatprep.subr.bf16.mxu0 0
    %2974 = vmatpush1.bf16.msra.mxu0 0
    %2975 = vmatprep.subr.bf16.mxu0 0
    %2976 = vmatpush1.bf16.msra.mxu0 0
    %2977 = vmatprep.subr.bf16.mxu0 0
    %2978 = vmatpush1.bf16.msra.mxu0 0
    %2979 = vmatprep.subr.bf16.mxu0 0
    %2980 = vmatpush1.bf16.msra.mxu0 0
    %2981 = vmatprep.subr.bf16.mxu0 0
    %2982 = vmatpush1.bf16.msra.mxu0 0
    %2983 = vmatprep.subr.bf16.mxu0 0
    %2984 = vmatpush1.bf16.msra.mxu0 0
    %2985 = vmatprep.subr.bf16.mxu0 0
    %2986 = vmatpush1.bf16.msra.mxu0 0
    %2987 = vmatprep.subr.bf16.mxu0 0
    %2988 = vmatpush1.bf16.msra.mxu0 0
    %2989 = vmatprep.subr.bf16.mxu0 0
    %2990 = vmatpush1.bf16.msra.mxu0 0
    %2991 = vmatprep.subr.bf16.mxu0 0
    %2992 = vmatpush1.bf16.msra.mxu0 0
    %2993 = vmatprep.subr.bf16.mxu0 0
    %2994 = vmatpush1.bf16.msra.mxu0 0
    %2995 = vmatprep.subr.bf16.mxu0 0
    %2996 = vmatpush1.bf16.msra.mxu0 0
    %2997 = vmatprep.mubr.bf16.mxu0 0
    %2998 = vmatmul.mubr.bf16.gmra.mrb[0].mxu0 %v2957
    %v2999 = vpop.f32.mrb[0].mxu0
    %v3000 = vadd.f32 0.0, %v2999
    %v3001 = vpop.f32.mrb[0].mxu0
    %v3002 = vpop.f32.mrb[0].mxu0
    %v3003 = vadd.f32 0.0, %v3002
    %v3004 = vpop.f32.mrb[0].mxu0
    %3005 = vmatprep.mubr.bf16.mxu0 0
    %3006 = vmatmul.mubr.bf16.gmra.mrb[0].mxu0 %v2960
    %v3007 = vpop.f32.mrb[0].mxu0
    %v3008 = vadd.f32 0.0, %v3007
    %v3009 = vpop.f32.mrb[0].mxu0
    %v3010 = vpop.f32.mrb[0].mxu0
    %v3011 = vadd.f32 0.0, %v3010
    %v3012 = vpop.f32.mrb[0].mxu0
    %3013 = vmatprep.mubr.bf16.mxu0 0
    %3014 = vmatmul.mubr.bf16.gmra.mrb[0].mxu0 %v2963
    %v3015 = vpop.f32.mrb[0].mxu0
    %v3016 = vadd.f32 0.0, %v3015
    %v3017 = vpop.f32.mrb[0].mxu0
    %v3018 = vpop.f32.mrb[0].mxu0
    %v3019 = vadd.f32 0.0, %v3018
    %v3020 = vpop.f32.mrb[0].mxu0
    %3021 = vdwg.mxu0
    %v3022 = vadd.f32 %v1827, %v3000
    %v3023 = vadd.f32 %v1828, %v3003
    %v3024 = vadd.f32 %v1829, %v3008
    %v3025 = vadd.f32 %v1830, %v3011
    %v3026 = vadd.f32 %v1831, %v3016
    %v3027 = vadd.f32 %v1832, %v3019
    %v3028 = vlaneseq
    %v3029 = vshrl.u32 %v3028, 7
    %v3030 = vsub.s32 2, %v3029
    %v3031 = vrot.slane %v1834, %v3030
    %v3032 = vadd.f32 %v3022, %v3031
    %v3033 = vadd.f32 %v3023, %v3031
    %v3034 = vadd.f32 %v3024, %v3031
    %v3035 = vadd.f32 %v3025, %v3031
    %v3036 = vadd.f32 %v3026, %v3031
    %v3037 = vadd.f32 %v3027, %v3031
    %v3038 = vsel %vm199, %v3032, 0.0
    %3039 = vadd.xlane.f32.xlu0 %v3038
    %v3040 = vpop.xlane.xlu0 %3039
    %v3041 = vsel %vm199, %v3033, 0.0
    %3042 = vadd.xlane.f32.xlu0 %v3041
    %v3043 = vpop.xlane.xlu0 %3042
    %v3044 = vsel %vm199, %v3034, 0.0
    %3045 = vadd.xlane.f32.xlu0 %v3044
    %v3046 = vpop.xlane.xlu0 %3045
    %v3047 = vsel %vm199, %v3035, 0.0
    %3048 = vadd.xlane.f32.xlu0 %v3047
    %v3049 = vpop.xlane.xlu0 %3048
    %v3050 = vsel %vm199, %v3036, 0.0
    %3051 = vadd.xlane.f32.xlu0 %v3050
    %v3052 = vpop.xlane.xlu0 %3051
    %v3053 = vsel %vm199, %v3037, 0.0
    %3054 = vadd.xlane.f32.xlu0 %v3053
    %v3055 = vpop.xlane.xlu0 %3054
    %v3056 = vmul.f32 %v3040, %v218
    %v3057 = vmul.f32 %v3043, %v218
    %v3058 = vmul.f32 %v3046, %v218
    %v3059 = vmul.f32 %v3049, %v218
    %v3060 = vmul.f32 %v3052, %v218
    %v3061 = vmul.f32 %v3055, %v218
    %v3062 = vsub.f32 %v3032, %v3056
    %v3063 = vsub.f32 %v3033, %v3057
    %v3064 = vsub.f32 %v3034, %v3058
    %v3065 = vsub.f32 %v3035, %v3059
    %v3066 = vsub.f32 %v3036, %v3060
    %v3067 = vsub.f32 %v3037, %v3061
    %v3068 = vmul.f32 %v3062, %v3062
    %v3069 = vmul.f32 %v3063, %v3063
    %v3070 = vmul.f32 %v3064, %v3064
    %v3071 = vmul.f32 %v3065, %v3065
    %v3072 = vmul.f32 %v3066, %v3066
    %v3073 = vmul.f32 %v3067, %v3067
    %v3074 = vsel %vm199, %v3068, 0.0
    %3075 = vadd.xlane.f32.xlu0 %v3074
    %v3076 = vpop.xlane.xlu0 %3075
    %v3077 = vsel %vm199, %v3069, 0.0
    %3078 = vadd.xlane.f32.xlu0 %v3077
    %v3079 = vpop.xlane.xlu0 %3078
    %v3080 = vsel %vm199, %v3070, 0.0
    %3081 = vadd.xlane.f32.xlu0 %v3080
    %v3082 = vpop.xlane.xlu0 %3081
    %v3083 = vsel %vm199, %v3071, 0.0
    %3084 = vadd.xlane.f32.xlu0 %v3083
    %v3085 = vpop.xlane.xlu0 %3084
    %v3086 = vsel %vm199, %v3072, 0.0
    %3087 = vadd.xlane.f32.xlu0 %v3086
    %v3088 = vpop.xlane.xlu0 %3087
    %v3089 = vsel %vm199, %v3073, 0.0
    %3090 = vadd.xlane.f32.xlu0 %v3089
    %v3091 = vpop.xlane.xlu0 %3090
    %v3092 = vmul.f32 %v3076, %v218
    %v3093 = vmul.f32 %v3079, %v218
    %v3094 = vmul.f32 %v3082, %v218
    %v3095 = vmul.f32 %v3085, %v218
    %v3096 = vmul.f32 %v3088, %v218
    %v3097 = vmul.f32 %v3091, %v218
    %v3098 = vadd.f32 %v3092, 1e-06
    %v3099 = vadd.f32 %v3093, 1e-06
    %v3100 = vadd.f32 %v3094, 1e-06
    %v3101 = vadd.f32 %v3095, 1e-06
    %v3102 = vadd.f32 %v3096, 1e-06
    %v3103 = vadd.f32 %v3097, 1e-06
    %v3104 = vrsqrt.pop %v3098
    %v3105 = vrsqrt.pop %v3099
    %v3106 = vrsqrt.pop %v3100
    %v3107 = vrsqrt.pop %v3101
    %v3108 = vrsqrt.pop %v3102
    %v3109 = vrsqrt.pop %v3103
    %v3110 = vmul.f32 %v3062, %v3104
    %v3111 = vmul.f32 %v3063, %v3105
    %v3112 = vmul.f32 %v3064, %v3106
    %v3113 = vmul.f32 %v3065, %v3107
    %v3114 = vmul.f32 %v3066, %v3108
    %v3115 = vmul.f32 %v3067, %v3109
    %v3116 = vlaneseq
    %v3117 = vshrl.u32 %v3116, 7
    %v3118 = vsub.s32 3, %v3117
    %v3119 = vrot.slane %v1834, %v3118
    %v3120 = vmul.f32 %v3110, %v3119
    %v3121 = vmul.f32 %v3111, %v3119
    %v3122 = vmul.f32 %v3112, %v3119
    %v3123 = vmul.f32 %v3113, %v3119
    %v3124 = vmul.f32 %v3114, %v3119
    %v3125 = vmul.f32 %v3115, %v3119
    %v3126 = vlaneseq
    %v3127 = vshrl.u32 %v3126, 7
    %v3128 = vsub.s32 4, %v3127
    %v3129 = vrot.slane %v1834, %v3128
    %v3130 = vadd.f32 %v3120, %v3129
    %v3131 = vadd.f32 %v3121, %v3129
    %v3132 = vadd.f32 %v3122, %v3129
    %v3133 = vadd.f32 %v3123, %v3129
    %v3134 = vadd.f32 %v3124, %v3129
    %v3135 = vadd.f32 %v3125, %v3129
    %v3136 = vpack.c.bf16 %v3131, %v3130
    %v3137 = vpack.c.bf16 %v3133, %v3132
    %v3138 = vpack.c.bf16 %v3135, %v3134
    %s3139 = scalar_lea.vmem %s8, 16
    %v3140 = vld [vmem:[%s3139] sm:$0xf]
    %v3141 = vld [vmem:[%s3139 + $0x4] sm:$0xf]
    %v3142 = vld [vmem:[%s3139 + $0x8] sm:$0xf]
    %v3143 = vld [vmem:[%s3139 + $0xc] sm:$0xf]
    %s3144 = scalar_lea.vmem %s9, 1
    %v3145 = vld [vmem:[%s3144] sm:$0x1]
    %v3147 = vlaneseq
    %v3148 = vshrl.u32 %v3147, 7
    %v3149 = vsub.s32 0, %v3148
    %v3150 = vrot.slane %v3145, %v3149
    %v3156 = vunpack.c.l.b16 %v3140
    %v3157 = vunpack.c.l.b16 %v3141
    %v3158 = vunpack.c.l.b16 %v3142
    %v3159 = vunpack.c.l.b16 %v3143
    %v3160 = vpack.c.b16 %v3157, %v3156
    %v3161 = vpack.c.b16 %v3159, %v3158
    %v3165 = vsel %vm199, %v3136, 0
    %v3168 = vsel %vm199, %v3137, 0
    %v3171 = vsel %vm199, %v3138, 0
    %3173 = vmatprep.subr.bf16.mxu0 0
    %3174 = vmatpush1.bf16.msra.mxu0 %v3160
    %3175 = vmatprep.subr.bf16.mxu0 0
    %3176 = vmatpush1.bf16.msra.mxu0 %v3161
    %3177 = vmatprep.subr.bf16.mxu0 0
    %3178 = vmatpush1.bf16.msra.mxu0 0
    %3179 = vmatprep.subr.bf16.mxu0 0
    %3180 = vmatpush1.bf16.msra.mxu0 0
    %3181 = vmatprep.subr.bf16.mxu0 0
    %3182 = vmatpush1.bf16.msra.mxu0 0
    %3183 = vmatprep.subr.bf16.mxu0 0
    %3184 = vmatpush1.bf16.msra.mxu0 0
    %3185 = vmatprep.subr.bf16.mxu0 0
    %3186 = vmatpush1.bf16.msra.mxu0 0
    %3187 = vmatprep.subr.bf16.mxu0 0
    %3188 = vmatpush1.bf16.msra.mxu0 0
    %3189 = vmatprep.subr.bf16.mxu0 0
    %3190 = vmatpush1.bf16.msra.mxu0 0
    %3191 = vmatprep.subr.bf16.mxu0 0
    %3192 = vmatpush1.bf16.msra.mxu0 0
    %3193 = vmatprep.subr.bf16.mxu0 0
    %3194 = vmatpush1.bf16.msra.mxu0 0
    %3195 = vmatprep.subr.bf16.mxu0 0
    %3196 = vmatpush1.bf16.msra.mxu0 0
    %3197 = vmatprep.subr.bf16.mxu0 0
    %3198 = vmatpush1.bf16.msra.mxu0 0
    %3199 = vmatprep.subr.bf16.mxu0 0
    %3200 = vmatpush1.bf16.msra.mxu0 0
    %3201 = vmatprep.subr.bf16.mxu0 0
    %3202 = vmatpush1.bf16.msra.mxu0 0
    %3203 = vmatprep.subr.bf16.mxu0 0
    %3204 = vmatpush1.bf16.msra.mxu0 0
    %3205 = vmatprep.mubr.bf16.mxu0 0
    %3206 = vmatmul.mubr.bf16.gmra.mrb[0].mxu0 %v3165
    %v3207 = vpop.f32.mrb[0].mxu0
    %v3208 = vadd.f32 %v3150, %v3207
    %v3209 = vpop.f32.mrb[0].mxu0
    %v3210 = vpop.f32.mrb[0].mxu0
    %v3211 = vadd.f32 %v3150, %v3210
    %v3212 = vpop.f32.mrb[0].mxu0
    %3213 = vmatprep.mubr.bf16.mxu0 0
    %3214 = vmatmul.mubr.bf16.gmra.mrb[0].mxu0 %v3168
    %v3215 = vpop.f32.mrb[0].mxu0
    %v3216 = vadd.f32 %v3150, %v3215
    %v3217 = vpop.f32.mrb[0].mxu0
    %v3218 = vpop.f32.mrb[0].mxu0
    %v3219 = vadd.f32 %v3150, %v3218
    %v3220 = vpop.f32.mrb[0].mxu0
    %3221 = vmatprep.mubr.bf16.mxu0 0
    %3222 = vmatmul.mubr.bf16.gmra.mrb[0].mxu0 %v3171
    %v3223 = vpop.f32.mrb[0].mxu0
    %v3224 = vadd.f32 %v3150, %v3223
    %v3225 = vpop.f32.mrb[0].mxu0
    %v3226 = vpop.f32.mrb[0].mxu0
    %v3227 = vadd.f32 %v3150, %v3226
    %v3228 = vpop.f32.mrb[0].mxu0
    %3229 = vdwg.mxu0
    %v3230 = vmul.f32 %v3208, 0.5
    %v3231 = vmul.f32 %v3211, 0.5
    %v3232 = vmul.f32 %v3216, 0.5
    %v3233 = vmul.f32 %v3219, 0.5
    %v3234 = vmul.f32 %v3224, 0.5
    %v3235 = vmul.f32 %v3227, 0.5
    %v3236 = vmul.f32 %v3208, %v3208
    %v3237 = vmul.f32 %v3211, %v3211
    %v3238 = vmul.f32 %v3216, %v3216
    %v3239 = vmul.f32 %v3219, %v3219
    %v3240 = vmul.f32 %v3224, %v3224
    %v3241 = vmul.f32 %v3227, %v3227
    %v3242 = vmul.f32 %v3236, %v3208
    %v3243 = vmul.f32 %v3237, %v3211
    %v3244 = vmul.f32 %v3238, %v3216
    %v3245 = vmul.f32 %v3239, %v3219
    %v3246 = vmul.f32 %v3240, %v3224
    %v3247 = vmul.f32 %v3241, %v3227
    %v3248 = vmul.f32 %v3242, 0.044715
    %v3249 = vmul.f32 %v3243, 0.044715
    %v3250 = vmul.f32 %v3244, 0.044715
    %v3251 = vmul.f32 %v3245, 0.044715
    %v3252 = vmul.f32 %v3246, 0.044715
    %v3253 = vmul.f32 %v3247, 0.044715
    %v3254 = vadd.f32 %v3208, %v3248
    %v3255 = vadd.f32 %v3211, %v3249
    %v3256 = vadd.f32 %v3216, %v3250
    %v3257 = vadd.f32 %v3219, %v3251
    %v3258 = vadd.f32 %v3224, %v3252
    %v3259 = vadd.f32 %v3227, %v3253
    %v3260 = vmul.f32 %v3254, 0.7978845
    %v3261 = vmul.f32 %v3255, 0.7978845
    %v3262 = vmul.f32 %v3256, 0.7978845
    %v3263 = vmul.f32 %v3257, 0.7978845
    %v3264 = vmul.f32 %v3258, 0.7978845
    %v3265 = vmul.f32 %v3259, 0.7978845
    %v3266 = vtanh.pop %v3260
    %v3267 = vtanh.pop %v3261
    %v3268 = vtanh.pop %v3262
    %v3269 = vtanh.pop %v3263
    %v3270 = vtanh.pop %v3264
    %v3271 = vtanh.pop %v3265
    %v3272 = vadd.f32 %v3266, 1.0
    %v3273 = vadd.f32 %v3267, 1.0
    %v3274 = vadd.f32 %v3268, 1.0
    %v3275 = vadd.f32 %v3269, 1.0
    %v3276 = vadd.f32 %v3270, 1.0
    %v3277 = vadd.f32 %v3271, 1.0
    %v3278 = vmul.f32 %v3230, %v3272
    %v3279 = vmul.f32 %v3231, %v3273
    %v3280 = vmul.f32 %v3232, %v3274
    %v3281 = vmul.f32 %v3233, %v3275
    %v3282 = vmul.f32 %v3234, %v3276
    %v3283 = vmul.f32 %v3235, %v3277
    %v3284 = vpack.c.bf16 %v3279, %v3278
    %v3285 = vpack.c.bf16 %v3281, %v3280
    %v3286 = vpack.c.bf16 %v3283, %v3282
    %s3287 = scalar_lea.vmem %s10, 64
    %v3288 = vld [vmem:[%s3287] sm:$0xf]
    %v3289 = vld [vmem:[%s3287 + $0x4] sm:$0xf]
    %v3290 = vld [vmem:[%s3287 + $0x8] sm:$0xf]
    %v3291 = vld [vmem:[%s3287 + $0xc] sm:$0xf]
    %v3292 = vld [vmem:[%s3287 + $0x10] sm:$0xf]
    %v3293 = vld [vmem:[%s3287 + $0x14] sm:$0xf]
    %v3294 = vld [vmem:[%s3287 + $0x18] sm:$0xf]
    %v3295 = vld [vmem:[%s3287 + $0x1c] sm:$0xf]
    %v3296 = vld [vmem:[%s3287 + $0x20] sm:$0xf]
    %v3297 = vld [vmem:[%s3287 + $0x24] sm:$0xf]
    %v3298 = vld [vmem:[%s3287 + $0x28] sm:$0xf]
    %v3299 = vld [vmem:[%s3287 + $0x2c] sm:$0xf]
    %v3300 = vld [vmem:[%s3287 + $0x30] sm:$0xf]
    %v3301 = vld [vmem:[%s3287 + $0x34] sm:$0xf]
    %v3302 = vld [vmem:[%s3287 + $0x38] sm:$0xf]
    %v3303 = vld [vmem:[%s3287 + $0x3c] sm:$0xf]
    %v3320 = vunpack.c.l.b16 %v3288
    %v3321 = vunpack.c.l.b16 %v3289
    %v3322 = vunpack.c.l.b16 %v3290
    %v3323 = vunpack.c.l.b16 %v3291
    %v3324 = vunpack.c.l.b16 %v3292
    %v3325 = vunpack.c.l.b16 %v3293
    %v3326 = vunpack.c.l.b16 %v3294
    %v3327 = vunpack.c.l.b16 %v3295
    %v3328 = vunpack.c.l.b16 %v3296
    %v3329 = vunpack.c.l.b16 %v3297
    %v3330 = vunpack.c.l.b16 %v3298
    %v3331 = vunpack.c.l.b16 %v3299
    %v3332 = vunpack.c.l.b16 %v3300
    %v3333 = vunpack.c.l.b16 %v3301
    %v3334 = vunpack.c.l.b16 %v3302
    %v3335 = vunpack.c.l.b16 %v3303
    %v3336 = vpack.c.b16 %v3321, %v3320
    %v3337 = vpack.c.b16 %v3323, %v3322
    %v3338 = vpack.c.b16 %v3325, %v3324
    %v3339 = vpack.c.b16 %v3327, %v3326
    %v3340 = vpack.c.b16 %v3329, %v3328
    %v3341 = vpack.c.b16 %v3331, %v3330
    %v3342 = vpack.c.b16 %v3333, %v3332
    %v3343 = vpack.c.b16 %v3335, %v3334
    %3352 = vmatprep.subr.bf16.mxu0 0
    %3353 = vmatpush1.bf16.msra.mxu0 %v3336
    %3354 = vmatprep.subr.bf16.mxu0 0
    %3355 = vmatpush1.bf16.msra.mxu0 %v3337
    %3356 = vmatprep.subr.bf16.mxu0 0
    %3357 = vmatpush1.bf16.msra.mxu0 %v3338
    %3358 = vmatprep.subr.bf16.mxu0 0
    %3359 = vmatpush1.bf16.msra.mxu0 %v3339
    %3360 = vmatprep.subr.bf16.mxu0 0
    %3361 = vmatpush1.bf16.msra.mxu0 %v3340
    %3362 = vmatprep.subr.bf16.mxu0 0
    %3363 = vmatpush1.bf16.msra.mxu0 %v3341
    %3364 = vmatprep.subr.bf16.mxu0 0
    %3365 = vmatpush1.bf16.msra.mxu0 %v3342
    %3366 = vmatprep.subr.bf16.mxu0 0
    %3367 = vmatpush1.bf16.msra.mxu0 %v3343
    %3368 = vmatprep.subr.bf16.mxu0 0
    %3369 = vmatpush1.bf16.msra.mxu0 0
    %3370 = vmatprep.subr.bf16.mxu0 0
    %3371 = vmatpush1.bf16.msra.mxu0 0
    %3372 = vmatprep.subr.bf16.mxu0 0
    %3373 = vmatpush1.bf16.msra.mxu0 0
    %3374 = vmatprep.subr.bf16.mxu0 0
    %3375 = vmatpush1.bf16.msra.mxu0 0
    %3376 = vmatprep.subr.bf16.mxu0 0
    %3377 = vmatpush1.bf16.msra.mxu0 0
    %3378 = vmatprep.subr.bf16.mxu0 0
    %3379 = vmatpush1.bf16.msra.mxu0 0
    %3380 = vmatprep.subr.bf16.mxu0 0
    %3381 = vmatpush1.bf16.msra.mxu0 0
    %3382 = vmatprep.subr.bf16.mxu0 0
    %3383 = vmatpush1.bf16.msra.mxu0 0
    %3384 = vmatprep.mubr.bf16.mxu0 0
    %3385 = vmatmul.mubr.bf16.gmra.mrb[0].mxu0 %v3284
    %v3386 = vpop.f32.mrb[0].mxu0
    %v3387 = vadd.f32 0.0, %v3386
    %v3388 = vpop.f32.mrb[0].mxu0
    %v3389 = vpop.f32.mrb[0].mxu0
    %v3390 = vpop.f32.mrb[0].mxu0
    %3391 = vmatprep.mubr.bf16.mxu0 0
    %3392 = vmatmul.mubr.bf16.gmra.mrb[0].mxu0 %v3285
    %v3393 = vpop.f32.mrb[0].mxu0
    %v3394 = vpop.f32.mrb[0].mxu0
    %v3395 = vpop.f32.mrb[0].mxu0
    %v3396 = vadd.f32 0.0, %v3395
    %v3397 = vpop.f32.mrb[0].mxu0
    %3398 = vmatprep.mubr.bf16.mxu0 0
    %3399 = vmatmul.mubr.bf16.gmra.mrb[0].mxu0 %v3286
    %v3400 = vpop.f32.mrb[0].mxu0
    %v3401 = vpop.f32.mrb[0].mxu0
    %v3402 = vpop.f32.mrb[0].mxu0
    %v3403 = vpop.f32.mrb[0].mxu0
    %3404 = vdwg.mxu0
    %v3405 = vadd.f32 %v3032, %v3387
    %v3406 = vadd.f32 %v3035, %v3396
    %v3407 = vlaneseq
    %v3408 = vshrl.u32 %v3407, 7
    %v3409 = vsub.s32 5, %v3408
    %v3410 = vrot.slane %v1834, %v3409
    %v3411 = vadd.f32 %v3405, %v3410
    %v3412 = vadd.f32 %v3406, %v3410
    %v3414 = vrot.slane %v3412, 7
    %vm3416 = vcmask 1040384
    %v3417 = vsel %vm3416, %v3411, %v3414
    %v3418 = vld [vmem:[%s11] sm:$0xf]
    %vm3419 = vcmask 254976
    %v3420 = vsel %vm3419, %v3417, 0.0
    %3421 = vadd.xlane.f32.xlu0 %v3420
    %v3422 = vpop.xlane.xlu0 %3421
    %v3423 = vmul.f32 %v3422, %v218
    %v3424 = vsub.f32 %v3417, %v3423
    %v3425 = vmul.f32 %v3424, %v3424
    %v3426 = vsel %vm3419, %v3425, 0.0
    %3427 = vadd.xlane.f32.xlu0 %v3426
    %v3428 = vpop.xlane.xlu0 %3427
    %v3429 = vmul.f32 %v3428, %v218
    %v3430 = vadd.f32 %v3429, 1e-06
    %v3431 = vrsqrt.pop %v3430
    %v3432 = vmul.f32 %v3424, %v3431
    %v3433 = vlaneseq
    %v3434 = vshrl.u32 %v3433, 7
    %v3435 = vsub.s32 0, %v3434
    %v3436 = vrot.slane %v3418, %v3435
    %v3437 = vmul.f32 %v3432, %v3436
    %v3438 = vlaneseq
    %v3439 = vshrl.u32 %v3438, 7
    %v3440 = vsub.s32 1, %v3439
    %v3441 = vrot.slane %v3418, %v3440
    %v3442 = vadd.f32 %v3437, %v3441
    %v3443 = vsel %vm3419, %v3442, 0.0
    %3444 = vadd.xlane.f32.xlu0 %v3443
    %v3445 = vpop.xlane.xlu0 %3444
    %v3446 = vmul.f32 %v3445, %v218
    %v3447 = vsub.f32 %v3442, %v3446
    %v3448 = vmul.f32 %v3447, %v3447
    %v3449 = vsel %vm3419, %v3448, 0.0
    %3450 = vadd.xlane.f32.xlu0 %v3449
    %v3451 = vpop.xlane.xlu0 %3450
    %v3452 = vmul.f32 %v3451, %v218
    %v3453 = vadd.f32 %v3452, 1e-05
    %v3454 = vrsqrt.pop %v3453
    %v3455 = vmul.f32 %v3447, %v3454
    %v3456 = vlaneseq
    %v3457 = vshrl.u32 %v3456, 7
    %v3458 = vsub.s32 2, %v3457
    %v3459 = vrot.slane %v3418, %v3458
    %v3460 = vmul.f32 %v3455, %v3459
    %v3461 = vlaneseq
    %v3462 = vshrl.u32 %v3461, 7
    %v3463 = vsub.s32 3, %v3462
    %v3464 = vrot.slane %v3418, %v3463
    %v3465 = vadd.f32 %v3460, %v3464
    %v3466 = vld [vmem:[%s13] sm:$0x77]
    %v3467 = vld [vmem:[%s13 + $0x8] sm:$0x77]
    %v3468 = vpack.c.bf16 %v3465, %v3465
    %v3469 = vld [vmem:[%s12] sm:$0xff]
    %v3470 = vld [vmem:[%s12 + $0x8] sm:$0xff]
    %v3471 = vld [vmem:[%s12 + $0x10] sm:$0xff]
    %v3472 = vld [vmem:[%s12 + $0x18] sm:$0xff]
    %v3473 = vld [vmem:[%s12 + $0x20] sm:$0xff]
    %v3474 = vld [vmem:[%s12 + $0x28] sm:$0xff]
    %v3475 = vld [vmem:[%s12 + $0x30] sm:$0xff]
    %v3476 = vld [vmem:[%s12 + $0x38] sm:$0xff]
    %v3479 = vlaneseq
    %v3480 = vshrl.u32 %v3479, 7
    %v3481 = vsub.s32 0, %v3480
    %v3482 = vrot.slane %v3466, %v3481
    %v3483 = vlaneseq
    %v3484 = vshrl.u32 %v3483, 7
    %v3485 = vsub.s32 4, %v3484
    %v3486 = vrot.slane %v3466, %v3485
    %v3487 = vlaneseq
    %v3488 = vshrl.u32 %v3487, 7
    %v3489 = vsub.s32 0, %v3488
    %v3490 = vrot.slane %v3467, %v3489
    %v3491 = vlaneseq
    %v3492 = vshrl.u32 %v3491, 7
    %v3493 = vsub.s32 4, %v3492
    %v3494 = vrot.slane %v3467, %v3493
    %v3499 = vlaneseq
    %v3500 = vshrl.u32 %v3499, 7
    %v3501 = vsub.s32 0, %v3500
    %v3502 = vrot.slane %v3482, %v3501
    %v3503 = vlaneseq
    %v3504 = vshrl.u32 %v3503, 7
    %v3505 = vsub.s32 0, %v3504
    %v3506 = vrot.slane %v3486, %v3505
    %v3507 = vlaneseq
    %v3508 = vshrl.u32 %v3507, 7
    %v3509 = vsub.s32 0, %v3508
    %v3510 = vrot.slane %v3490, %v3509
    %v3511 = vlaneseq
    %v3512 = vshrl.u32 %v3511, 7
    %v3513 = vsub.s32 0, %v3512
    %v3514 = vrot.slane %v3494, %v3513
    %v3523 = vunpack.c.l.b16 %v3469
    %v3524 = vunpack.c.h.b16 %v3469
    %v3525 = vunpack.c.l.b16 %v3470
    %v3526 = vunpack.c.h.b16 %v3470
    %v3527 = vunpack.c.l.b16 %v3471
    %v3528 = vunpack.c.h.b16 %v3471
    %v3529 = vunpack.c.l.b16 %v3472
    %v3530 = vunpack.c.h.b16 %v3472
    %v3531 = vunpack.c.l.b16 %v3473
    %v3532 = vunpack.c.h.b16 %v3473
    %v3533 = vunpack.c.l.b16 %v3474
    %v3534 = vunpack.c.h.b16 %v3474
    %v3535 = vunpack.c.l.b16 %v3475
    %v3536 = vunpack.c.h.b16 %v3475
    %v3537 = vunpack.c.l.b16 %v3476
    %v3538 = vunpack.c.h.b16 %v3476
    %v3539 = vpack.c.b16 %v3527, %v3523
    %v3540 = vpack.c.b16 %v3528, %v3524
    %v3541 = vpack.c.b16 %v3529, %v3525
    %v3542 = vpack.c.b16 %v3530, %v3526
    %v3543 = vpack.c.b16 %v3535, %v3531
    %v3544 = vpack.c.b16 %v3536, %v3532
    %v3545 = vpack.c.b16 %v3537, %v3533
    %v3546 = vpack.c.b16 %v3538, %v3534
    %v3556 = vsel %vm199, %v3468, 0
    %3558 = vmatprep.subr.bf16.mxu0 %v3540
    %3559 = vmatpush1.bf16.msra.mxu0 %v3539
    %3560 = vmatprep.subr.bf16.mxu0 %v3544
    %3561 = vmatpush1.bf16.msra.mxu0 %v3543
    %3562 = vmatprep.subr.bf16.mxu0 0
    %3563 = vmatpush1.bf16.msra.mxu0 0
    %3564 = vmatprep.subr.bf16.mxu0 0
    %3565 = vmatpush1.bf16.msra.mxu0 0
    %3566 = vmatprep.subr.bf16.mxu0 0
    %3567 = vmatpush1.bf16.msra.mxu0 0
    %3568 = vmatprep.subr.bf16.mxu0 0
    %3569 = vmatpush1.bf16.msra.mxu0 0
    %3570 = vmatprep.subr.bf16.mxu0 0
    %3571 = vmatpush1.bf16.msra.mxu0 0
    %3572 = vmatprep.subr.bf16.mxu0 0
    %3573 = vmatpush1.bf16.msra.mxu0 0
    %3574 = vmatprep.subr.bf16.mxu0 0
    %3575 = vmatpush1.bf16.msra.mxu0 0
    %3576 = vmatprep.subr.bf16.mxu0 0
    %3577 = vmatpush1.bf16.msra.mxu0 0
    %3578 = vmatprep.subr.bf16.mxu0 0
    %3579 = vmatpush1.bf16.msra.mxu0 0
    %3580 = vmatprep.subr.bf16.mxu0 0
    %3581 = vmatpush1.bf16.msra.mxu0 0
    %3582 = vmatprep.subr.bf16.mxu0 0
    %3583 = vmatpush1.bf16.msra.mxu0 0
    %3584 = vmatprep.subr.bf16.mxu0 0
    %3585 = vmatpush1.bf16.msra.mxu0 0
    %3586 = vmatprep.subr.bf16.mxu0 0
    %3587 = vmatpush1.bf16.msra.mxu0 0
    %3588 = vmatprep.subr.bf16.mxu0 0
    %3589 = vmatpush1.bf16.msra.mxu0 0
    %3590 = vmatprep.mubr.bf16.mxu0 0
    %3591 = vmatmul.mubr.bf16.gmra.mrb[0].mxu0 %v3556
    %v3592 = vpop.f32.mrb[0].mxu0
    %v3593 = vadd.f32 %v3502, %v3592
    %v3594 = vpop.f32.mrb[0].mxu0
    %v3595 = vadd.f32 %v3506, %v3594
    %v3596 = vpop.f32.mrb[0].mxu0
    %v3597 = vpop.f32.mrb[0].mxu0
    %3598 = vdwg.mxu0
    %3599 = vmatprep.subr.bf16.mxu0 %v3542
    %3600 = vmatpush1.bf16.msra.mxu0 %v3541
    %3601 = vmatprep.subr.bf16.mxu0 %v3546
    %3602 = vmatpush1.bf16.msra.mxu0 %v3545
    %3603 = vmatprep.subr.bf16.mxu0 0
    %3604 = vmatpush1.bf16.msra.mxu0 0
    %3605 = vmatprep.subr.bf16.mxu0 0
    %3606 = vmatpush1.bf16.msra.mxu0 0
    %3607 = vmatprep.subr.bf16.mxu0 0
    %3608 = vmatpush1.bf16.msra.mxu0 0
    %3609 = vmatprep.subr.bf16.mxu0 0
    %3610 = vmatpush1.bf16.msra.mxu0 0
    %3611 = vmatprep.subr.bf16.mxu0 0
    %3612 = vmatpush1.bf16.msra.mxu0 0
    %3613 = vmatprep.subr.bf16.mxu0 0
    %3614 = vmatpush1.bf16.msra.mxu0 0
    %3615 = vmatprep.subr.bf16.mxu0 0
    %3616 = vmatpush1.bf16.msra.mxu0 0
    %3617 = vmatprep.subr.bf16.mxu0 0
    %3618 = vmatpush1.bf16.msra.mxu0 0
    %3619 = vmatprep.subr.bf16.mxu0 0
    %3620 = vmatpush1.bf16.msra.mxu0 0
    %3621 = vmatprep.subr.bf16.mxu0 0
    %3622 = vmatpush1.bf16.msra.mxu0 0
    %3623 = vmatprep.subr.bf16.mxu0 0
    %3624 = vmatpush1.bf16.msra.mxu0 0
    %3625 = vmatprep.subr.bf16.mxu0 0
    %3626 = vmatpush1.bf16.msra.mxu0 0
    %3627 = vmatprep.subr.bf16.mxu0 0
    %3628 = vmatpush1.bf16.msra.mxu0 0
    %3629 = vmatprep.subr.bf16.mxu0 0
    %3630 = vmatpush1.bf16.msra.mxu0 0
    %3631 = vmatprep.mubr.bf16.mxu0 0
    %3632 = vmatmul.mubr.bf16.gmra.mrb[0].mxu0 %v3556
    %v3633 = vpop.f32.mrb[0].mxu0
    %v3634 = vadd.f32 %v3510, %v3633
    %v3635 = vpop.f32.mrb[0].mxu0
    %v3636 = vadd.f32 %v3514, %v3635
    %v3637 = vpop.f32.mrb[0].mxu0
    %v3638 = vpop.f32.mrb[0].mxu0
    %3639 = vdwg.mxu0
    %v3640 = vmul.f32 %v3593, 0.5
    %v3641 = vmul.f32 %v3595, 0.5
    %v3642 = vmul.f32 %v3634, 0.5
    %v3643 = vmul.f32 %v3636, 0.5
    %v3644 = vmul.f32 %v3593, %v3593
    %v3645 = vmul.f32 %v3595, %v3595
    %v3646 = vmul.f32 %v3634, %v3634
    %v3647 = vmul.f32 %v3636, %v3636
    %v3648 = vmul.f32 %v3644, %v3593
    %v3649 = vmul.f32 %v3645, %v3595
    %v3650 = vmul.f32 %v3646, %v3634
    %v3651 = vmul.f32 %v3647, %v3636
    %v3652 = vmul.f32 %v3648, 0.044715
    %v3653 = vmul.f32 %v3649, 0.044715
    %v3654 = vmul.f32 %v3650, 0.044715
    %v3655 = vmul.f32 %v3651, 0.044715
    %v3656 = vadd.f32 %v3593, %v3652
    %v3657 = vadd.f32 %v3595, %v3653
    %v3658 = vadd.f32 %v3634, %v3654
    %v3659 = vadd.f32 %v3636, %v3655
    %v3660 = vmul.f32 %v3656, 0.7978845
    %v3661 = vmul.f32 %v3657, 0.7978845
    %v3662 = vmul.f32 %v3658, 0.7978845
    %v3663 = vmul.f32 %v3659, 0.7978845
    %v3664 = vtanh.pop %v3660
    %v3665 = vtanh.pop %v3661
    %v3666 = vtanh.pop %v3662
    %v3667 = vtanh.pop %v3663
    %v3668 = vadd.f32 %v3664, 1.0
    %v3669 = vadd.f32 %v3665, 1.0
    %v3670 = vadd.f32 %v3666, 1.0
    %v3671 = vadd.f32 %v3667, 1.0
    %v3672 = vmul.f32 %v3640, %v3668
    %v3673 = vmul.f32 %v3641, %v3669
    %v3674 = vmul.f32 %v3642, %v3670
    %v3675 = vmul.f32 %v3643, %v3671
    %vm3676 = vcmask 1041408
    %v3677 = vsel %vm3676, %v3672, 0.0
    %v3678 = vsel %vm3676, %v3673, 0.0
    %v3679 = vadd.f32 %v3677, %v3678
    %v3680 = vsel %vm3676, %v3674, 0.0
    %v3681 = vadd.f32 %v3679, %v3680
    %v3682 = vsel %vm3676, %v3675, 0.0
    %v3683 = vadd.f32 %v3681, %v3682
    %3684 = vadd.xlane.f32.xlu0 %v3683
    %v3685 = vpop.xlane.xlu0 %3684
    %v3686 = vrcp.pop 512.0
    %v3687 = vmul.f32 %v3685, %v3686
    %v3688 = vsub.f32 %v3672, %v3687
    %v3689 = vsub.f32 %v3673, %v3687
    %v3690 = vsub.f32 %v3674, %v3687
    %v3691 = vsub.f32 %v3675, %v3687
    %v3692 = vmul.f32 %v3688, %v3688
    %v3693 = vmul.f32 %v3689, %v3689
    %v3694 = vmul.f32 %v3690, %v3690
    %v3695 = vmul.f32 %v3691, %v3691
    %v3696 = vsel %vm3676, %v3692, 0.0
    %v3697 = vsel %vm3676, %v3693, 0.0
    %v3698 = vadd.f32 %v3696, %v3697
    %v3699 = vsel %vm3676, %v3694, 0.0
    %v3700 = vadd.f32 %v3698, %v3699
    %v3701 = vsel %vm3676, %v3695, 0.0
    %v3702 = vadd.f32 %v3700, %v3701
    %3703 = vadd.xlane.f32.xlu0 %v3702
    %v3704 = vpop.xlane.xlu0 %3703
    %v3705 = vmul.f32 %v3704, %v3686
    %v3706 = vadd.f32 %v3705, 1e-05
    %v3707 = vrsqrt.pop %v3706
    %v3708 = vmul.f32 %v3688, %v3707
    %v3709 = vmul.f32 %v3689, %v3707
    %v3710 = vmul.f32 %v3690, %v3707
    %v3711 = vmul.f32 %v3691, %v3707
    %v3712 = vlaneseq
    %v3713 = vshrl.u32 %v3712, 7
    %v3714 = vsub.s32 1, %v3713
    %v3715 = vrot.slane %v3466, %v3714
    %v3716 = vlaneseq
    %v3717 = vshrl.u32 %v3716, 7
    %v3718 = vsub.s32 5, %v3717
    %v3719 = vrot.slane %v3466, %v3718
    %v3720 = vlaneseq
    %v3721 = vshrl.u32 %v3720, 7
    %v3722 = vsub.s32 1, %v3721
    %v3723 = vrot.slane %v3467, %v3722
    %v3724 = vlaneseq
    %v3725 = vshrl.u32 %v3724, 7
    %v3726 = vsub.s32 5, %v3725
    %v3727 = vrot.slane %v3467, %v3726
    %v3732 = vlaneseq
    %v3733 = vshrl.u32 %v3732, 7
    %v3734 = vsub.s32 1, %v3733
    %v3735 = vrot.slane %v3715, %v3734
    %v3736 = vlaneseq
    %v3737 = vshrl.u32 %v3736, 7
    %v3738 = vsub.s32 1, %v3737
    %v3739 = vrot.slane %v3719, %v3738
    %v3740 = vlaneseq
    %v3741 = vshrl.u32 %v3740, 7
    %v3742 = vsub.s32 1, %v3741
    %v3743 = vrot.slane %v3723, %v3742
    %v3744 = vlaneseq
    %v3745 = vshrl.u32 %v3744, 7
    %v3746 = vsub.s32 1, %v3745
    %v3747 = vrot.slane %v3727, %v3746
    %v3748 = vmul.f32 %v3708, %v3735
    %v3749 = vmul.f32 %v3709, %v3739
    %v3750 = vmul.f32 %v3710, %v3743
    %v3751 = vmul.f32 %v3711, %v3747
    %v3752 = vlaneseq
    %v3753 = vshrl.u32 %v3752, 7
    %v3754 = vsub.s32 2, %v3753
    %v3755 = vrot.slane %v3466, %v3754
    %v3756 = vlaneseq
    %v3757 = vshrl.u32 %v3756, 7
    %v3758 = vsub.s32 6, %v3757
    %v3759 = vrot.slane %v3466, %v3758
    %v3760 = vlaneseq
    %v3761 = vshrl.u32 %v3760, 7
    %v3762 = vsub.s32 2, %v3761
    %v3763 = vrot.slane %v3467, %v3762
    %v3764 = vlaneseq
    %v3765 = vshrl.u32 %v3764, 7
    %v3766 = vsub.s32 6, %v3765
    %v3767 = vrot.slane %v3467, %v3766
    %v3772 = vlaneseq
    %v3773 = vshrl.u32 %v3772, 7
    %v3774 = vsub.s32 2, %v3773
    %v3775 = vrot.slane %v3755, %v3774
    %v3776 = vlaneseq
    %v3777 = vshrl.u32 %v3776, 7
    %v3778 = vsub.s32 2, %v3777
    %v3779 = vrot.slane %v3759, %v3778
    %v3780 = vlaneseq
    %v3781 = vshrl.u32 %v3780, 7
    %v3782 = vsub.s32 2, %v3781
    %v3783 = vrot.slane %v3763, %v3782
    %v3784 = vlaneseq
    %v3785 = vshrl.u32 %v3784, 7
    %v3786 = vsub.s32 2, %v3785
    %v3787 = vrot.slane %v3767, %v3786
    %v3788 = vadd.f32 %v3748, %v3775
    %v3789 = vadd.f32 %v3749, %v3779
    %v3790 = vadd.f32 %v3750, %v3783
    %v3791 = vadd.f32 %v3751, %v3787
    %v3792 = vld [vmem:[%s15] sm:$0x77]
    %v3793 = vpack.c.bf16 %v3788, %v3788
    %v3794 = vpack.c.bf16 %v3789, %v3789
    %v3795 = vpack.c.bf16 %v3790, %v3790
    %v3796 = vpack.c.bf16 %v3791, %v3791
    %v3797 = vld [vmem:[%s14] sm:$0xff]
    %v3798 = vld [vmem:[%s14 + $0x8] sm:$0xff]
    %v3799 = vld [vmem:[%s14 + $0x10] sm:$0xff]
    %v3800 = vld [vmem:[%s14 + $0x18] sm:$0xff]
    %v3801 = vld [vmem:[%s14 + $0x20] sm:$0xff]
    %v3802 = vld [vmem:[%s14 + $0x28] sm:$0xff]
    %v3803 = vld [vmem:[%s14 + $0x30] sm:$0xff]
    %v3804 = vld [vmem:[%s14 + $0x38] sm:$0xff]
    %v3805 = vld [vmem:[%s14 + $0x40] sm:$0xff]
    %v3806 = vld [vmem:[%s14 + $0x48] sm:$0xff]
    %v3807 = vld [vmem:[%s14 + $0x50] sm:$0xff]
    %v3808 = vld [vmem:[%s14 + $0x58] sm:$0xff]
    %v3809 = vld [vmem:[%s14 + $0x60] sm:$0xff]
    %v3810 = vld [vmem:[%s14 + $0x68] sm:$0xff]
    %v3811 = vld [vmem:[%s14 + $0x70] sm:$0xff]
    %v3812 = vld [vmem:[%s14 + $0x78] sm:$0xff]
    %v3813 = vld [vmem:[%s14 + $0x80] sm:$0xff]
    %v3814 = vld [vmem:[%s14 + $0x88] sm:$0xff]
    %v3815 = vld [vmem:[%s14 + $0x90] sm:$0xff]
    %v3816 = vld [vmem:[%s14 + $0x98] sm:$0xff]
    %v3817 = vld [vmem:[%s14 + $0xa0] sm:$0xff]
    %v3818 = vld [vmem:[%s14 + $0xa8] sm:$0xff]
    %v3819 = vld [vmem:[%s14 + $0xb0] sm:$0xff]
    %v3820 = vld [vmem:[%s14 + $0xb8] sm:$0xff]
    %v3821 = vld [vmem:[%s14 + $0xc0] sm:$0xff]
    %v3822 = vld [vmem:[%s14 + $0xc8] sm:$0xff]
    %v3823 = vld [vmem:[%s14 + $0xd0] sm:$0xff]
    %v3824 = vld [vmem:[%s14 + $0xd8] sm:$0xff]
    %v3825 = vld [vmem:[%s14 + $0xe0] sm:$0xff]
    %v3826 = vld [vmem:[%s14 + $0xe8] sm:$0xff]
    %v3827 = vld [vmem:[%s14 + $0xf0] sm:$0xff]
    %v3828 = vld [vmem:[%s14 + $0xf8] sm:$0xff]
    %v3829 = vld [vmem:[%s14 + $0x100] sm:$0xff]
    %v3830 = vld [vmem:[%s14 + $0x108] sm:$0xff]
    %v3831 = vld [vmem:[%s14 + $0x110] sm:$0xff]
    %v3832 = vld [vmem:[%s14 + $0x118] sm:$0xff]
    %v3833 = vld [vmem:[%s14 + $0x120] sm:$0xff]
    %v3834 = vld [vmem:[%s14 + $0x128] sm:$0xff]
    %v3835 = vld [vmem:[%s14 + $0x130] sm:$0xff]
    %v3836 = vld [vmem:[%s14 + $0x138] sm:$0xff]
    %v3837 = vld [vmem:[%s14 + $0x140] sm:$0xff]
    %v3838 = vld [vmem:[%s14 + $0x148] sm:$0xff]
    %v3839 = vld [vmem:[%s14 + $0x150] sm:$0xff]
    %v3840 = vld [vmem:[%s14 + $0x158] sm:$0xff]
    %v3841 = vld [vmem:[%s14 + $0x160] sm:$0xff]
    %v3842 = vld [vmem:[%s14 + $0x168] sm:$0xff]
    %v3843 = vld [vmem:[%s14 + $0x170] sm:$0xff]
    %v3844 = vld [vmem:[%s14 + $0x178] sm:$0xff]
    %v3845 = vld [vmem:[%s14 + $0x180] sm:$0xff]
    %v3846 = vld [vmem:[%s14 + $0x188] sm:$0xff]
    %v3847 = vld [vmem:[%s14 + $0x190] sm:$0xff]
    %v3848 = vld [vmem:[%s14 + $0x198] sm:$0xff]
    %v3849 = vld [vmem:[%s14 + $0x1a0] sm:$0xff]
    %v3850 = vld [vmem:[%s14 + $0x1a8] sm:$0xff]
    %v3851 = vld [vmem:[%s14 + $0x1b0] sm:$0xff]
    %v3852 = vld [vmem:[%s14 + $0x1b8] sm:$0xff]
    %v3853 = vld [vmem:[%s14 + $0x1c0] sm:$0xff]
    %v3854 = vld [vmem:[%s14 + $0x1c8] sm:$0xff]
    %v3855 = vld [vmem:[%s14 + $0x1d0] sm:$0xff]
    %v3856 = vld [vmem:[%s14 + $0x1d8] sm:$0xff]
    %v3857 = vld [vmem:[%s14 + $0x1e0] sm:$0xff]
    %v3858 = vld [vmem:[%s14 + $0x1e8] sm:$0xff]
    %v3859 = vld [vmem:[%s14 + $0x1f0] sm:$0xff]
    %v3860 = vld [vmem:[%s14 + $0x1f8] sm:$0xff]
    %v3862 = vlaneseq
    %v3863 = vshrl.u32 %v3862, 7
    %v3864 = vsub.s32 0, %v3863
    %v3865 = vrot.slane %v3792, %v3864
    %v3866 = vlaneseq
    %v3867 = vshrl.u32 %v3866, 7
    %v3868 = vsub.s32 4, %v3867
    %v3869 = vrot.slane %v3792, %v3868
    %v3872 = vlaneseq
    %v3873 = vshrl.u32 %v3872, 7
    %v3874 = vsub.s32 0, %v3873
    %v3875 = vrot.slane %v3865, %v3874
    %v3876 = vlaneseq
    %v3877 = vshrl.u32 %v3876, 7
    %v3878 = vsub.s32 0, %v3877
    %v3879 = vrot.slane %v3869, %v3878
    %v3944 = vunpack.c.l.b16 %v3797
    %v3945 = vunpack.c.h.b16 %v3797
    %v3946 = vunpack.c.l.b16 %v3798
    %v3947 = vunpack.c.h.b16 %v3798
    %v3948 = vunpack.c.l.b16 %v3799
    %v3949 = vunpack.c.h.b16 %v3799
    %v3950 = vunpack.c.l.b16 %v3800
    %v3951 = vunpack.c.h.b16 %v3800
    %v3952 = vunpack.c.l.b16 %v3801
    %v3953 = vunpack.c.h.b16 %v3801
    %v3954 = vunpack.c.l.b16 %v3802
    %v3955 = vunpack.c.h.b16 %v3802
    %v3956 = vunpack.c.l.b16 %v3803
    %v3957 = vunpack.c.h.b16 %v3803
    %v3958 = vunpack.c.l.b16 %v3804
    %v3959 = vunpack.c.h.b16 %v3804
    %v3960 = vunpack.c.l.b16 %v3805
    %v3961 = vunpack.c.h.b16 %v3805
    %v3962 = vunpack.c.l.b16 %v3806
    %v3963 = vunpack.c.h.b16 %v3806
    %v3964 = vunpack.c.l.b16 %v3807
    %v3965 = vunpack.c.h.b16 %v3807
    %v3966 = vunpack.c.l.b16 %v3808
    %v3967 = vunpack.c.h.b16 %v3808
    %v3968 = vunpack.c.l.b16 %v3809
    %v3969 = vunpack.c.h.b16 %v3809
    %v3970 = vunpack.c.l.b16 %v3810
    %v3971 = vunpack.c.h.b16 %v3810
    %v3972 = vunpack.c.l.b16 %v3811
    %v3973 = vunpack.c.h.b16 %v3811
    %v3974 = vunpack.c.l.b16 %v3812
    %v3975 = vunpack.c.h.b16 %v3812
    %v3976 = vunpack.c.l.b16 %v3813
    %v3977 = vunpack.c.h.b16 %v3813
    %v3978 = vunpack.c.l.b16 %v3814
    %v3979 = vunpack.c.h.b16 %v3814
    %v3980 = vunpack.c.l.b16 %v3815
    %v3981 = vunpack.c.h.b16 %v3815
    %v3982 = vunpack.c.l.b16 %v3816
    %v3983 = vunpack.c.h.b16 %v3816
    %v3984 = vunpack.c.l.b16 %v3817
    %v3985 = vunpack.c.h.b16 %v3817
    %v3986 = vunpack.c.l.b16 %v3818
    %v3987 = vunpack.c.h.b16 %v3818
    %v3988 = vunpack.c.l.b16 %v3819
    %v3989 = vunpack.c.h.b16 %v3819
    %v3990 = vunpack.c.l.b16 %v3820
    %v3991 = vunpack.c.h.b16 %v3820
    %v3992 = vunpack.c.l.b16 %v3821
    %v3993 = vunpack.c.h.b16 %v3821
    %v3994 = vunpack.c.l.b16 %v3822
    %v3995 = vunpack.c.h.b16 %v3822
    %v3996 = vunpack.c.l.b16 %v3823
    %v3997 = vunpack.c.h.b16 %v3823
    %v3998 = vunpack.c.l.b16 %v3824
    %v3999 = vunpack.c.h.b16 %v3824
    %v4000 = vunpack.c.l.b16 %v3825
    %v4001 = vunpack.c.h.b16 %v3825
    %v4002 = vunpack.c.l.b16 %v3826
    %v4003 = vunpack.c.h.b16 %v3826
    %v4004 = vunpack.c.l.b16 %v3827
    %v4005 = vunpack.c.h.b16 %v3827
    %v4006 = vunpack.c.l.b16 %v3828
    %v4007 = vunpack.c.h.b16 %v3828
    %v4008 = vunpack.c.l.b16 %v3829
    %v4009 = vunpack.c.h.b16 %v3829
    %v4010 = vunpack.c.l.b16 %v3830
    %v4011 = vunpack.c.h.b16 %v3830
    %v4012 = vunpack.c.l.b16 %v3831
    %v4013 = vunpack.c.h.b16 %v3831
    %v4014 = vunpack.c.l.b16 %v3832
    %v4015 = vunpack.c.h.b16 %v3832
    %v4016 = vunpack.c.l.b16 %v3833
    %v4017 = vunpack.c.h.b16 %v3833
    %v4018 = vunpack.c.l.b16 %v3834
    %v4019 = vunpack.c.h.b16 %v3834
    %v4020 = vunpack.c.l.b16 %v3835
    %v4021 = vunpack.c.h.b16 %v3835
    %v4022 = vunpack.c.l.b16 %v3836
    %v4023 = vunpack.c.h.b16 %v3836
    %v4024 = vunpack.c.l.b16 %v3837
    %v4025 = vunpack.c.h.b16 %v3837
    %v4026 = vunpack.c.l.b16 %v3838
    %v4027 = vunpack.c.h.b16 %v3838
    %v4028 = vunpack.c.l.b16 %v3839
    %v4029 = vunpack.c.h.b16 %v3839
    %v4030 = vunpack.c.l.b16 %v3840
    %v4031 = vunpack.c.h.b16 %v3840
    %v4032 = vunpack.c.l.b16 %v3841
    %v4033 = vunpack.c.h.b16 %v3841
    %v4034 = vunpack.c.l.b16 %v3842
    %v4035 = vunpack.c.h.b16 %v3842
    %v4036 = vunpack.c.l.b16 %v3843
    %v4037 = vunpack.c.h.b16 %v3843
    %v4038 = vunpack.c.l.b16 %v3844
    %v4039 = vunpack.c.h.b16 %v3844
    %v4040 = vunpack.c.l.b16 %v3845
    %v4041 = vunpack.c.h.b16 %v3845
    %v4042 = vunpack.c.l.b16 %v3846
    %v4043 = vunpack.c.h.b16 %v3846
    %v4044 = vunpack.c.l.b16 %v3847
    %v4045 = vunpack.c.h.b16 %v3847
    %v4046 = vunpack.c.l.b16 %v3848
    %v4047 = vunpack.c.h.b16 %v3848
    %v4048 = vunpack.c.l.b16 %v3849
    %v4049 = vunpack.c.h.b16 %v3849
    %v4050 = vunpack.c.l.b16 %v3850
    %v4051 = vunpack.c.h.b16 %v3850
    %v4052 = vunpack.c.l.b16 %v3851
    %v4053 = vunpack.c.h.b16 %v3851
    %v4054 = vunpack.c.l.b16 %v3852
    %v4055 = vunpack.c.h.b16 %v3852
    %v4056 = vunpack.c.l.b16 %v3853
    %v4057 = vunpack.c.h.b16 %v3853
    %v4058 = vunpack.c.l.b16 %v3854
    %v4059 = vunpack.c.h.b16 %v3854
    %v4060 = vunpack.c.l.b16 %v3855
    %v4061 = vunpack.c.h.b16 %v3855
    %v4062 = vunpack.c.l.b16 %v3856
    %v4063 = vunpack.c.h.b16 %v3856
    %v4064 = vunpack.c.l.b16 %v3857
    %v4065 = vunpack.c.h.b16 %v3857
    %v4066 = vunpack.c.l.b16 %v3858
    %v4067 = vunpack.c.h.b16 %v3858
    %v4068 = vunpack.c.l.b16 %v3859
    %v4069 = vunpack.c.h.b16 %v3859
    %v4070 = vunpack.c.l.b16 %v3860
    %v4071 = vunpack.c.h.b16 %v3860
    %v4072 = vpack.c.b16 %v3946, %v3944
    %v4073 = vpack.c.b16 %v3947, %v3945
    %v4074 = vpack.c.b16 %v3950, %v3948
    %v4075 = vpack.c.b16 %v3951, %v3949
    %v4076 = vpack.c.b16 %v3954, %v3952
    %v4077 = vpack.c.b16 %v3955, %v3953
    %v4078 = vpack.c.b16 %v3958, %v3956
    %v4079 = vpack.c.b16 %v3959, %v3957
    %v4080 = vpack.c.b16 %v3962, %v3960
    %v4081 = vpack.c.b16 %v3963, %v3961
    %v4082 = vpack.c.b16 %v3966, %v3964
    %v4083 = vpack.c.b16 %v3967, %v3965
    %v4084 = vpack.c.b16 %v3970, %v3968
    %v4085 = vpack.c.b16 %v3971, %v3969
    %v4086 = vpack.c.b16 %v3974, %v3972
    %v4087 = vpack.c.b16 %v3975, %v3973
    %v4088 = vpack.c.b16 %v3978, %v3976
    %v4089 = vpack.c.b16 %v3979, %v3977
    %v4090 = vpack.c.b16 %v3982, %v3980
    %v4091 = vpack.c.b16 %v3983, %v3981
    %v4092 = vpack.c.b16 %v3986, %v3984
    %v4093 = vpack.c.b16 %v3987, %v3985
    %v4094 = vpack.c.b16 %v3990, %v3988
    %v4095 = vpack.c.b16 %v3991, %v3989
    %v4096 = vpack.c.b16 %v3994, %v3992
    %v4097 = vpack.c.b16 %v3995, %v3993
    %v4098 = vpack.c.b16 %v3998, %v3996
    %v4099 = vpack.c.b16 %v3999, %v3997
    %v4100 = vpack.c.b16 %v4002, %v4000
    %v4101 = vpack.c.b16 %v4003, %v4001
    %v4102 = vpack.c.b16 %v4006, %v4004
    %v4103 = vpack.c.b16 %v4007, %v4005
    %v4104 = vpack.c.b16 %v4010, %v4008
    %v4105 = vpack.c.b16 %v4011, %v4009
    %v4106 = vpack.c.b16 %v4014, %v4012
    %v4107 = vpack.c.b16 %v4015, %v4013
    %v4108 = vpack.c.b16 %v4018, %v4016
    %v4109 = vpack.c.b16 %v4019, %v4017
    %v4110 = vpack.c.b16 %v4022, %v4020
    %v4111 = vpack.c.b16 %v4023, %v4021
    %v4112 = vpack.c.b16 %v4026, %v4024
    %v4113 = vpack.c.b16 %v4027, %v4025
    %v4114 = vpack.c.b16 %v4030, %v4028
    %v4115 = vpack.c.b16 %v4031, %v4029
    %v4116 = vpack.c.b16 %v4034, %v4032
    %v4117 = vpack.c.b16 %v4035, %v4033
    %v4118 = vpack.c.b16 %v4038, %v4036
    %v4119 = vpack.c.b16 %v4039, %v4037
    %v4120 = vpack.c.b16 %v4042, %v4040
    %v4121 = vpack.c.b16 %v4043, %v4041
    %v4122 = vpack.c.b16 %v4046, %v4044
    %v4123 = vpack.c.b16 %v4047, %v4045
    %v4124 = vpack.c.b16 %v4050, %v4048
    %v4125 = vpack.c.b16 %v4051, %v4049
    %v4126 = vpack.c.b16 %v4054, %v4052
    %v4127 = vpack.c.b16 %v4055, %v4053
    %v4128 = vpack.c.b16 %v4058, %v4056
    %v4129 = vpack.c.b16 %v4059, %v4057
    %v4130 = vpack.c.b16 %v4062, %v4060
    %v4131 = vpack.c.b16 %v4063, %v4061
    %v4132 = vpack.c.b16 %v4066, %v4064
    %v4133 = vpack.c.b16 %v4067, %v4065
    %v4134 = vpack.c.b16 %v4070, %v4068
    %v4135 = vpack.c.b16 %v4071, %v4069
    %4200 = vmatprep.subr.bf16.mxu0 %v4073
    %4201 = vmatpush1.bf16.msra.mxu0 %v4072
    %4202 = vmatprep.subr.bf16.mxu0 %v4075
    %4203 = vmatpush1.bf16.msra.mxu0 %v4074
    %4204 = vmatprep.subr.bf16.mxu0 %v4077
    %4205 = vmatpush1.bf16.msra.mxu0 %v4076
    %4206 = vmatprep.subr.bf16.mxu0 %v4079
    %4207 = vmatpush1.bf16.msra.mxu0 %v4078
    %4208 = vmatprep.subr.bf16.mxu0 %v4081
    %4209 = vmatpush1.bf16.msra.mxu0 %v4080
    %4210 = vmatprep.subr.bf16.mxu0 %v4083
    %4211 = vmatpush1.bf16.msra.mxu0 %v4082
    %4212 = vmatprep.subr.bf16.mxu0 %v4085
    %4213 = vmatpush1.bf16.msra.mxu0 %v4084
    %4214 = vmatprep.subr.bf16.mxu0 %v4087
    %4215 = vmatpush1.bf16.msra.mxu0 %v4086
    %4216 = vmatprep.subr.bf16.mxu0 %v4089
    %4217 = vmatpush1.bf16.msra.mxu0 %v4088
    %4218 = vmatprep.subr.bf16.mxu0 %v4091
    %4219 = vmatpush1.bf16.msra.mxu0 %v4090
    %4220 = vmatprep.subr.bf16.mxu0 %v4093
    %4221 = vmatpush1.bf16.msra.mxu0 %v4092
    %4222 = vmatprep.subr.bf16.mxu0 %v4095
    %4223 = vmatpush1.bf16.msra.mxu0 %v4094
    %4224 = vmatprep.subr.bf16.mxu0 %v4097
    %4225 = vmatpush1.bf16.msra.mxu0 %v4096
    %4226 = vmatprep.subr.bf16.mxu0 %v4099
    %4227 = vmatpush1.bf16.msra.mxu0 %v4098
    %4228 = vmatprep.subr.bf16.mxu0 %v4101
    %4229 = vmatpush1.bf16.msra.mxu0 %v4100
    %4230 = vmatprep.subr.bf16.mxu0 %v4103
    %4231 = vmatpush1.bf16.msra.mxu0 %v4102
    %4232 = vmatprep.mubr.bf16.mxu0 %v3794
    %4233 = vmatmul.mubr.bf16.gmra.mrb[0].mxu0 %v3793
    %v4234 = vpop.f32.mrb[0].mxu0
    %v4235 = vadd.f32 %v3875, %v4234
    %v4236 = vpop.f32.mrb[0].mxu0
    %v4237 = vadd.f32 %v3879, %v4236
    %v4238 = vpop.f32.mrb[0].mxu0
    %v4239 = vpop.f32.mrb[0].mxu0
    %4240 = vdwg.mxu0
    %4241 = vmatprep.subr.bf16.mxu0 %v4105
    %4242 = vmatpush1.bf16.msra.mxu0 %v4104
    %4243 = vmatprep.subr.bf16.mxu0 %v4107
    %4244 = vmatpush1.bf16.msra.mxu0 %v4106
    %4245 = vmatprep.subr.bf16.mxu0 %v4109
    %4246 = vmatpush1.bf16.msra.mxu0 %v4108
    %4247 = vmatprep.subr.bf16.mxu0 %v4111
    %4248 = vmatpush1.bf16.msra.mxu0 %v4110
    %4249 = vmatprep.subr.bf16.mxu0 %v4113
    %4250 = vmatpush1.bf16.msra.mxu0 %v4112
    %4251 = vmatprep.subr.bf16.mxu0 %v4115
    %4252 = vmatpush1.bf16.msra.mxu0 %v4114
    %4253 = vmatprep.subr.bf16.mxu0 %v4117
    %4254 = vmatpush1.bf16.msra.mxu0 %v4116
    %4255 = vmatprep.subr.bf16.mxu0 %v4119
    %4256 = vmatpush1.bf16.msra.mxu0 %v4118
    %4257 = vmatprep.subr.bf16.mxu0 %v4121
    %4258 = vmatpush1.bf16.msra.mxu0 %v4120
    %4259 = vmatprep.subr.bf16.mxu0 %v4123
    %4260 = vmatpush1.bf16.msra.mxu0 %v4122
    %4261 = vmatprep.subr.bf16.mxu0 %v4125
    %4262 = vmatpush1.bf16.msra.mxu0 %v4124
    %4263 = vmatprep.subr.bf16.mxu0 %v4127
    %4264 = vmatpush1.bf16.msra.mxu0 %v4126
    %4265 = vmatprep.subr.bf16.mxu0 %v4129
    %4266 = vmatpush1.bf16.msra.mxu0 %v4128
    %4267 = vmatprep.subr.bf16.mxu0 %v4131
    %4268 = vmatpush1.bf16.msra.mxu0 %v4130
    %4269 = vmatprep.subr.bf16.mxu0 %v4133
    %4270 = vmatpush1.bf16.msra.mxu0 %v4132
    %4271 = vmatprep.subr.bf16.mxu0 %v4135
    %4272 = vmatpush1.bf16.msra.mxu0 %v4134
    %4273 = vmatprep.mubr.bf16.mxu0 %v3796
    %4274 = vmatmul.mubr.bf16.gmra.mrb[0].mxu0 %v3795
    %v4275 = vpop.f32.mrb[0].mxu0
    %v4276 = vadd.f32 %v4235, %v4275
    %v4277 = vpop.f32.mrb[0].mxu0
    %v4278 = vadd.f32 %v4237, %v4277
    %v4279 = vpop.f32.mrb[0].mxu0
    %v4280 = vpop.f32.mrb[0].mxu0
    %4281 = vdwg.mxu0
    %v4282 = vmul.f32 %v4276, 0.5
    %v4283 = vmul.f32 %v4278, 0.5
    %v4284 = vmul.f32 %v4276, %v4276
    %v4285 = vmul.f32 %v4278, %v4278
    %v4286 = vmul.f32 %v4284, %v4276
    %v4287 = vmul.f32 %v4285, %v4278
    %v4288 = vmul.f32 %v4286, 0.044715
    %v4289 = vmul.f32 %v4287, 0.044715
    %v4290 = vadd.f32 %v4276, %v4288
    %v4291 = vadd.f32 %v4278, %v4289
    %v4292 = vmul.f32 %v4290, 0.7978845
    %v4293 = vmul.f32 %v4291, 0.7978845
    %v4294 = vtanh.pop %v4292
    %v4295 = vtanh.pop %v4293
    %v4296 = vadd.f32 %v4294, 1.0
    %v4297 = vadd.f32 %v4295, 1.0
    %v4298 = vmul.f32 %v4282, %v4296
    %v4299 = vmul.f32 %v4283, %v4297
    %v4300 = vsel %vm3676, %v4298, 0.0
    %v4301 = vsel %vm3676, %v4299, 0.0
    %v4302 = vadd.f32 %v4300, %v4301
    %4303 = vadd.xlane.f32.xlu0 %v4302
    %v4304 = vpop.xlane.xlu0 %4303
    %v4305 = vrcp.pop 256.0
    %v4306 = vmul.f32 %v4304, %v4305
    %v4307 = vsub.f32 %v4298, %v4306
    %v4308 = vsub.f32 %v4299, %v4306
    %v4309 = vmul.f32 %v4307, %v4307
    %v4310 = vmul.f32 %v4308, %v4308
    %v4311 = vsel %vm3676, %v4309, 0.0
    %v4312 = vsel %vm3676, %v4310, 0.0
    %v4313 = vadd.f32 %v4311, %v4312
    %4314 = vadd.xlane.f32.xlu0 %v4313
    %v4315 = vpop.xlane.xlu0 %4314
    %v4316 = vmul.f32 %v4315, %v4305
    %v4317 = vadd.f32 %v4316, 1e-05
    %v4318 = vrsqrt.pop %v4317
    %v4319 = vmul.f32 %v4307, %v4318
    %v4320 = vmul.f32 %v4308, %v4318
    %v4321 = vlaneseq
    %v4322 = vshrl.u32 %v4321, 7
    %v4323 = vsub.s32 1, %v4322
    %v4324 = vrot.slane %v3792, %v4323
    %v4325 = vlaneseq
    %v4326 = vshrl.u32 %v4325, 7
    %v4327 = vsub.s32 5, %v4326
    %v4328 = vrot.slane %v3792, %v4327
    %v4331 = vlaneseq
    %v4332 = vshrl.u32 %v4331, 7
    %v4333 = vsub.s32 1, %v4332
    %v4334 = vrot.slane %v4324, %v4333
    %v4335 = vlaneseq
    %v4336 = vshrl.u32 %v4335, 7
    %v4337 = vsub.s32 1, %v4336
    %v4338 = vrot.slane %v4328, %v4337
    %v4339 = vmul.f32 %v4319, %v4334
    %v4340 = vmul.f32 %v4320, %v4338
    %v4341 = vlaneseq
    %v4342 = vshrl.u32 %v4341, 7
    %v4343 = vsub.s32 2, %v4342
    %v4344 = vrot.slane %v3792, %v4343
    %v4345 = vlaneseq
    %v4346 = vshrl.u32 %v4345, 7
    %v4347 = vsub.s32 6, %v4346
    %v4348 = vrot.slane %v3792, %v4347
    %v4351 = vlaneseq
    %v4352 = vshrl.u32 %v4351, 7
    %v4353 = vsub.s32 2, %v4352
    %v4354 = vrot.slane %v4344, %v4353
    %v4355 = vlaneseq
    %v4356 = vshrl.u32 %v4355, 7
    %v4357 = vsub.s32 2, %v4356
    %v4358 = vrot.slane %v4348, %v4357
    %v4359 = vadd.f32 %v4339, %v4354
    %v4360 = vadd.f32 %v4340, %v4358
    %v4361 = vpack.c.bf16 %v4359, %v4359
    %v4362 = vpack.c.bf16 %v4360, %v4360
    %v4363 = vld [vmem:[%s16] sm:$0xf]
    %v4364 = vld [vmem:[%s16 + $0x4] sm:$0xf]
    %v4365 = vld [vmem:[%s16 + $0x8] sm:$0xf]
    %v4366 = vld [vmem:[%s16 + $0xc] sm:$0xf]
    %v4367 = vld [vmem:[%s16 + $0x10] sm:$0xf]
    %v4368 = vld [vmem:[%s16 + $0x14] sm:$0xf]
    %v4369 = vld [vmem:[%s16 + $0x18] sm:$0xf]
    %v4370 = vld [vmem:[%s16 + $0x1c] sm:$0xf]
    %v4371 = vld [vmem:[%s16 + $0x20] sm:$0xf]
    %v4372 = vld [vmem:[%s16 + $0x24] sm:$0xf]
    %v4373 = vld [vmem:[%s16 + $0x28] sm:$0xf]
    %v4374 = vld [vmem:[%s16 + $0x2c] sm:$0xf]
    %v4375 = vld [vmem:[%s16 + $0x30] sm:$0xf]
    %v4376 = vld [vmem:[%s16 + $0x34] sm:$0xf]
    %v4377 = vld [vmem:[%s16 + $0x38] sm:$0xf]
    %v4378 = vld [vmem:[%s16 + $0x3c] sm:$0xf]
    %v4379 = vld [vmem:[%s16 + $0x40] sm:$0xf]
    %v4380 = vld [vmem:[%s16 + $0x44] sm:$0xf]
    %v4381 = vld [vmem:[%s16 + $0x48] sm:$0xf]
    %v4382 = vld [vmem:[%s16 + $0x4c] sm:$0xf]
    %v4383 = vld [vmem:[%s16 + $0x50] sm:$0xf]
    %v4384 = vld [vmem:[%s16 + $0x54] sm:$0xf]
    %v4385 = vld [vmem:[%s16 + $0x58] sm:$0xf]
    %v4386 = vld [vmem:[%s16 + $0x5c] sm:$0xf]
    %v4387 = vld [vmem:[%s16 + $0x60] sm:$0xf]
    %v4388 = vld [vmem:[%s16 + $0x64] sm:$0xf]
    %v4389 = vld [vmem:[%s16 + $0x68] sm:$0xf]
    %v4390 = vld [vmem:[%s16 + $0x6c] sm:$0xf]
    %v4391 = vld [vmem:[%s16 + $0x70] sm:$0xf]
    %v4392 = vld [vmem:[%s16 + $0x74] sm:$0xf]
    %v4393 = vld [vmem:[%s16 + $0x78] sm:$0xf]
    %v4394 = vld [vmem:[%s16 + $0x7c] sm:$0xf]
    %v4395 = vld [vmem:[%s17] sm:$0x1]
    %v4397 = vlaneseq
    %v4398 = vshrl.u32 %v4397, 7
    %v4399 = vsub.s32 0, %v4398
    %v4400 = vrot.slane %v4395, %v4399
    %v4434 = vunpack.c.l.b16 %v4363
    %v4435 = vunpack.c.l.b16 %v4364
    %v4436 = vunpack.c.l.b16 %v4365
    %v4437 = vunpack.c.l.b16 %v4366
    %v4438 = vunpack.c.l.b16 %v4367
    %v4439 = vunpack.c.l.b16 %v4368
    %v4440 = vunpack.c.l.b16 %v4369
    %v4441 = vunpack.c.l.b16 %v4370
    %v4442 = vunpack.c.l.b16 %v4371
    %v4443 = vunpack.c.l.b16 %v4372
    %v4444 = vunpack.c.l.b16 %v4373
    %v4445 = vunpack.c.l.b16 %v4374
    %v4446 = vunpack.c.l.b16 %v4375
    %v4447 = vunpack.c.l.b16 %v4376
    %v4448 = vunpack.c.l.b16 %v4377
    %v4449 = vunpack.c.l.b16 %v4378
    %v4450 = vunpack.c.l.b16 %v4379
    %v4451 = vunpack.c.l.b16 %v4380
    %v4452 = vunpack.c.l.b16 %v4381
    %v4453 = vunpack.c.l.b16 %v4382
    %v4454 = vunpack.c.l.b16 %v4383
    %v4455 = vunpack.c.l.b16 %v4384
    %v4456 = vunpack.c.l.b16 %v4385
    %v4457 = vunpack.c.l.b16 %v4386
    %v4458 = vunpack.c.l.b16 %v4387
    %v4459 = vunpack.c.l.b16 %v4388
    %v4460 = vunpack.c.l.b16 %v4389
    %v4461 = vunpack.c.l.b16 %v4390
    %v4462 = vunpack.c.l.b16 %v4391
    %v4463 = vunpack.c.l.b16 %v4392
    %v4464 = vunpack.c.l.b16 %v4393
    %v4465 = vunpack.c.l.b16 %v4394
    %v4466 = vpack.c.b16 %v4435, %v4434
    %v4467 = vpack.c.b16 %v4437, %v4436
    %v4468 = vpack.c.b16 %v4439, %v4438
    %v4469 = vpack.c.b16 %v4441, %v4440
    %v4470 = vpack.c.b16 %v4443, %v4442
    %v4471 = vpack.c.b16 %v4445, %v4444
    %v4472 = vpack.c.b16 %v4447, %v4446
    %v4473 = vpack.c.b16 %v4449, %v4448
    %v4474 = vpack.c.b16 %v4451, %v4450
    %v4475 = vpack.c.b16 %v4453, %v4452
    %v4476 = vpack.c.b16 %v4455, %v4454
    %v4477 = vpack.c.b16 %v4457, %v4456
    %v4478 = vpack.c.b16 %v4459, %v4458
    %v4479 = vpack.c.b16 %v4461, %v4460
    %v4480 = vpack.c.b16 %v4463, %v4462
    %v4481 = vpack.c.b16 %v4465, %v4464
    %4498 = vmatprep.subr.bf16.mxu0 0
    %4499 = vmatpush1.bf16.msra.mxu0 %v4466
    %4500 = vmatprep.subr.bf16.mxu0 0
    %4501 = vmatpush1.bf16.msra.mxu0 %v4467
    %4502 = vmatprep.subr.bf16.mxu0 0
    %4503 = vmatpush1.bf16.msra.mxu0 %v4468
    %4504 = vmatprep.subr.bf16.mxu0 0
    %4505 = vmatpush1.bf16.msra.mxu0 %v4469
    %4506 = vmatprep.subr.bf16.mxu0 0
    %4507 = vmatpush1.bf16.msra.mxu0 %v4470
    %4508 = vmatprep.subr.bf16.mxu0 0
    %4509 = vmatpush1.bf16.msra.mxu0 %v4471
    %4510 = vmatprep.subr.bf16.mxu0 0
    %4511 = vmatpush1.bf16.msra.mxu0 %v4472
    %4512 = vmatprep.subr.bf16.mxu0 0
    %4513 = vmatpush1.bf16.msra.mxu0 %v4473
    %4514 = vmatprep.subr.bf16.mxu0 0
    %4515 = vmatpush1.bf16.msra.mxu0 %v4474
    %4516 = vmatprep.subr.bf16.mxu0 0
    %4517 = vmatpush1.bf16.msra.mxu0 %v4475
    %4518 = vmatprep.subr.bf16.mxu0 0
    %4519 = vmatpush1.bf16.msra.mxu0 %v4476
    %4520 = vmatprep.subr.bf16.mxu0 0
    %4521 = vmatpush1.bf16.msra.mxu0 %v4477
    %4522 = vmatprep.subr.bf16.mxu0 0
    %4523 = vmatpush1.bf16.msra.mxu0 %v4478
    %4524 = vmatprep.subr.bf16.mxu0 0
    %4525 = vmatpush1.bf16.msra.mxu0 %v4479
    %4526 = vmatprep.subr.bf16.mxu0 0
    %4527 = vmatpush1.bf16.msra.mxu0 %v4480
    %4528 = vmatprep.subr.bf16.mxu0 0
    %4529 = vmatpush1.bf16.msra.mxu0 %v4481
    %4530 = vmatprep.mubr.bf16.mxu0 %v4362
    %4531 = vmatmul.mubr.bf16.gmra.mrb[0].mxu0 %v4361
    %v4532 = vpop.f32.mrb[0].mxu0
    %v4533 = vadd.f32 %v4400, %v4532
    %v4534 = vpop.f32.mrb[0].mxu0
    %v4535 = vpop.f32.mrb[0].mxu0
    %v4536 = vpop.f32.mrb[0].mxu0
    %4537 = vdwg.mxu0
    %vm4538 = vcmask 115712
    %4539 = vst.msk [vmem:[#allocation2] sm:$0x3] %vm4538, %v4533
    // Predicated region
    $region74: #{crop_disease_vit_forward.1} parent=1 // pred_check
      _
    $region75: #{crop_disease_vit_forward.1} parent=1 // pred_check_branch
      %4541 = sbr.rel (0) target = $region77
    $region76: #{crop_disease_vit_forward.1} parent=1 // pred_region
      %s4543 = ssub.s32 32, 32
      %4544 = vsyncadd [#allocation3], %s4543
      %s4546 = sshll.u32 [#allocation2], 4
      %s4547 = int_to_ptr.vmem [resolvable:$true] %s4546
      %4549 = dma.vmem_to_hbm [thread:$0]  %s4547, 32, %s18, [#allocation3]
    $region77: #{crop_disease_vit_forward.1} parent=1 // pred_fallthru
      _
    // Predicated region
    $region78: #{crop_disease_vit_forward.1} parent=1 // pred_check
      _
    $region79: #{crop_disease_vit_forward.1} parent=1 // pred_check_branch
      %4551 = sbr.rel (0) target = $region81
    $region80: #{crop_disease_vit_forward.1} parent=1 // pred_region
      %4552 = dma.done [#allocation3], 32
    $region81: #{crop_disease_vit_forward.1} parent=1 // pred_fallthru
      _
    %4553 = vsyncpa [#allocation3], 1

</llo_original>
